<compile_context>
chip_gen: v7x
topology: tpu7x:2x2x1
jax: 0.10.0
libtpu: 0.0.40
codegen_flags: <defaults>
</compile_context>

<pallas_src>
import functools
import numpy as np
import jax
import jax.numpy as jnp
from jax import lax
from jax.experimental import pallas as pl
from jax.experimental.pallas import tpu as pltpu

NEG_SLOPE = 0.2     # self.negative_slope
COS_EPS = 1e-10     # nn.CosineSimilarity eps


# ----------------------------------------------------------------------------
# The one fused kernel: RGCN stack + similarity head + loss.
# ----------------------------------------------------------------------------
def _rgcn_fused_kernel(adj_ref, feat_ref, w_ref, resw_ref, sel_ref,
                       sp_ref, sn_ref, wext_ref, scal_ref,
                       simp_ref, simn_ref, loss_ref,
                       h_ref, hw_ref, *, batch_size):
    N, C = feat_ref.shape          # N = G*B*n (all subgraph nodes), C = 128
    R = adj_ref.shape[0]           # num relations
    L = w_ref.shape[0]             # num layers
    B = batch_size

    # ------------------ fused RGCN stack (all layers, all relations) --------
    h_ref[...] = feat_ref[...]                       # resident node state, f32
    for l in range(L):                                # static unroll, L = 4
        # one wide MXU pass per layer: (N, C) @ (C, R*C), bf16 ops / f32 acc
        hw_ref[...] = jnp.dot(h_ref[...].astype(jnp.bfloat16), w_ref[l],
                              preferred_element_type=jnp.float32)
        acc = jnp.zeros((N, C), jnp.float32)
        for r in range(R):                            # static unroll, R = 4
            # block-diagonal aggregation over the whole batched graph stack,
            # kept entirely in f32 (adjacency normalization precision).
            acc = acc + jnp.dot(adj_ref[r], hw_ref[:, r * C:(r + 1) * C],
                                preferred_element_type=jnp.float32)
        # F.leaky_relu(x, 0.2) epilogue in f32 (no bf16 VPU path on v5e)
        h_ref[...] = jnp.where(acc >= 0, acc, NEG_SLOPE * acc)

    # ------------------ fused similarity head --------------------------------
    # node-0 rows of every subgraph via a small selection matmul (G*B, N)@(N, C)
    h0 = jnp.dot(sel_ref[...], h_ref[...], preferred_element_type=jnp.float32)
    f0 = jnp.dot(sel_ref[...], feat_ref[...], preferred_element_type=jnp.float32)
    # residual fc: Linear(in_dim, h_dim, bias=False), f32
    embed = h0 + jnp.dot(f0, resw_ref[...], preferred_element_type=jnp.float32)

    a = embed[0:B]             # anchor   (B, C)
    p = embed[B:2 * B]         # positive (B, C)
    ng = embed[2 * B:3 * B]    # negative (B, C)

    def cosine(x, y):
        num = jnp.sum(x * y, axis=1, keepdims=True)
        nx2 = jnp.sum(x * x, axis=1, keepdims=True)
        ny2 = jnp.sum(y * y, axis=1, keepdims=True)
        # torch CosineSimilarity clamps ||x||*||y|| by eps
        return num * lax.rsqrt(jnp.maximum(nx2 * ny2, COS_EPS * COS_EPS))

    cp = cosine(a, p)          # (B, 1)
    cn = cosine(a, ng)         # (B, 1)

    # combine_sims Linear(4,1): w0*cos + (w1,w2,w3)·(s,d,ef) + b  -> tanh
    w0 = scal_ref[0]
    bias = scal_ref[1]
    extra_p = jnp.sum(sp_ref[...] * wext_ref[...], axis=1, keepdims=True)
    extra_n = jnp.sum(sn_ref[...] * wext_ref[...], axis=1, keepdims=True)
    simp = jnp.tanh(cp * w0 + extra_p + bias)
    simn = jnp.tanh(cn * w0 + extra_n + bias)
    simp_ref[...] = simp
    simn_ref[...] = simn

    # loss = (mean((1-sim_p)^2) + mean((sim_n+1)^2)) / 2
    lp = jnp.mean((1.0 - simp) ** 2, axis=(0, 1), keepdims=True)
    ln = jnp.mean((simn + 1.0) ** 2, axis=(0, 1), keepdims=True)
    loss_ref[...] = (lp + ln) * 0.5


def rgcn_forward_pallas(adj, feat, w_all, res_w, sel,
                        sp_pad, sn_pad, wext, scal, *, batch_size):
    """adj:   (R, N, N) f32 block-diagonal, row-normalized
       feat:  (N, C)    f32 zero-padded features (N = G*B*n, C = 128)
       w_all: (L, C, R*C) bf16 packed per-layer per-relation weights
       res_w: (C, C)    f32 residual fc weight (zero-padded)
       sel:   (G*B, N)  f32 node-0 selection matrix
       sp_pad/sn_pad: (B, C) f32 rtf sims in lanes 0..2
       wext:  (1, C)    f32 Linear(4,1) weights 1..3 in lanes 0..2
       scal:  (2,)      f32 [Linear(4,1) weight 0 (cos), bias]"""
    N, C = feat.shape
    R = adj.shape[0]
    B = batch_size
    vmem = pl.BlockSpec(memory_space=pltpu.MemorySpace.VMEM)
    smem = pl.BlockSpec(memory_space=pltpu.MemorySpace.SMEM)
    kernel = functools.partial(_rgcn_fused_kernel, batch_size=B)
    return pl.pallas_call(
        kernel,
        out_shape=(jax.ShapeDtypeStruct((B, 1), jnp.float32),   # sim_p
                   jax.ShapeDtypeStruct((B, 1), jnp.float32),   # sim_n
                   jax.ShapeDtypeStruct((1, 1), jnp.float32)),  # loss
        in_specs=[vmem, vmem, vmem, vmem, vmem, vmem, vmem, vmem, smem],
        out_specs=(vmem, vmem, vmem),
        scratch_shapes=[pltpu.VMEM((N, C), jnp.float32),        # resident h
                        pltpu.VMEM((N, R * C), jnp.float32)],   # wide projection
    )(adj, feat, w_all, res_w, sel, sp_pad, sn_pad, wext, scal)


# ----------------------------------------------------------------------------
# Host-side Jaccard similarities (pure python dict/set logic, stays on host)
# ----------------------------------------------------------------------------
def comp_jaccard_sim_weight(i1, i2):
    i1, i2 = set(i1), set(i2)
    union = i1.union(i2)
    if len(union) == 0:
        return 0.01
    return len(i1.intersection(i2)) / len(union)


def calculate_rtf_similarity(func_names, basic_dict):
    p_sims, n_sims = [], []
    for fn in func_names:
        if fn[0] in basic_dict:
            a = basic_dict[fn[0]]
            p_sims.append(comp_jaccard_sim_weight(a, basic_dict[fn[1]])
                          if fn[1] in basic_dict else 0.01)
            n_sims.append(comp_jaccard_sim_weight(a, basic_dict[fn[2]])
                          if fn[2] in basic_dict else 0.01)
        else:
            p_sims.append(0.01)
            n_sims.append(0.01)
    return (jnp.asarray(p_sims, jnp.float32), jnp.asarray(n_sims, jnp.float32))


# ----------------------------------------------------------------------------
# Full model forward (thin glue; all tensor compute in the single Pallas call)
# ----------------------------------------------------------------------------
def rgcn_model_forward(params, adj, feat, sel, sp_sims, sn_sims):
    B = sp_sims.shape[0]
    C = feat.shape[1]
    sp_pad = jnp.zeros((B, C), jnp.float32).at[:, :3].set(sp_sims)
    sn_pad = jnp.zeros((B, C), jnp.float32).at[:, :3].set(sn_sims)
    wext = jnp.zeros((1, C), jnp.float32).at[0, :3].set(params["comb_w"][1:4])
    scal = jnp.stack([params["comb_w"][0], params["comb_b"][0]])
    sim_p, sim_n, loss = rgcn_forward_pallas(
        adj, feat, params["w_all"], params["res_w"], sel,
        sp_pad, sn_pad, wext, scal, batch_size=B)
    return sim_p, sim_n, loss[0, 0]


if __name__ == "__main__":
    # small deterministic shapes
    G = 3                      # anchor / positive / negative graphs
    B = 2                      # subgraphs per batched graph
    n = 16                     # nodes per subgraph
    in_dim, h_dim, out_dim = 16, 32, 32
    num_rels, num_layers = 4, 4
    C = 128                    # lane-dense padded feature width
    N = G * B * n              # total nodes across all graphs

    key = jax.random.PRNGKey(0)
    keys = jax.random.split(key, 12)

    # ---- RGCN weights, packed (L, C, R*C), pre-cast to bf16 ----
    dims = [(in_dim, h_dim)] + [(h_dim, h_dim)] * (num_layers - 2) + [(h_dim, out_dim)]
    w_np = np.zeros((num_layers, C, num_rels * C), np.float32)
    for l, (di, do) in enumerate(dims):
        wl = np.asarray(jax.random.normal(keys[l], (num_rels, di, do),
                                          jnp.float32)) / np.sqrt(di)
        for r in range(num_rels):
            w_np[l, :di, r * C:r * C + do] = wl[r]
    w_all = jnp.asarray(w_np, jnp.bfloat16)

    # ---- residual fc weight (in_dim != h_dim -> Linear, no bias), f32 ----
    rw = np.zeros((C, C), np.float32)
    rw[:in_dim, :h_dim] = np.asarray(
        jax.random.normal(keys[4], (in_dim, h_dim), jnp.float32)) / np.sqrt(in_dim)
    res_w = jnp.asarray(rw)

    comb_w = jax.random.normal(keys[5], (4,), jnp.float32) * 0.5
    comb_b = jax.random.normal(keys[6], (1,), jnp.float32) * 0.1
    params = {"w_all": w_all, "res_w": res_w, "comb_w": comb_w, "comb_b": comb_b}

    # ---- block-diagonal, in-degree row-normalized adjacency (R, N, N), f32 ----
    raw = (np.asarray(jax.random.uniform(
        keys[7], (G, num_rels, B, n, n))) > 0.6).astype(np.float32)
    deg = np.maximum(raw.sum(-1, keepdims=True), 1.0)
    blocks = raw / deg
    adj_np = np.zeros((num_rels, N, N), np.float32)
    for g in range(G):
        for b in range(B):
            off = (g * B + b) * n
            adj_np[:, off:off + n, off:off + n] = blocks[g, :, b]
    adj = jnp.asarray(adj_np)

    # ---- node features, zero-padded to 128 lanes, (N, C), f32 ----
    fs = np.asarray(jax.random.normal(keys[8], (N, in_dim), jnp.float32))
    feat_np = np.zeros((N, C), np.float32)
    feat_np[:, :in_dim] = fs
    feat = jnp.asarray(feat_np)

    # ---- node-0 selection matrix (G*B, N) ----
    sel_np = np.zeros((G * B, N), np.float32)
    for i in range(G * B):
        sel_np[i, i * n] = 1.0
    sel = jnp.asarray(sel_np)

    # ---- host-side rtf similarities (f_strings / global_data / external_funcs) ----
    funcNames = [("a0", "p0", "n0"), ("a1", "p1", "n1")]
    f_strings = {"a0": ["s1", "s2"], "p0": ["s1", "s3"], "n0": ["s4"],
                 "a1": ["s5"], "p1": ["s5", "s6"], "n1": ["s7", "s8"]}
    global_data = {"a0": ["g1"], "p0": ["g1", "g2"], "n0": ["g3"],
                   "a1": ["g4", "g5"], "p1": ["g4"], "n1": []}
    external_funcs = {"a0": ["e1", "e2"], "p0": ["e2"],
                      "a1": ["e3"], "p1": ["e3", "e4"], "n1": ["e5"]}

    s_p, s_n = calculate_rtf_similarity(funcNames, f_strings)
    d_p, d_n = calculate_rtf_similarity(funcNames, global_data)
    ef_p, ef_n = calculate_rtf_similarity(funcNames, external_funcs)
    sp_sims = jnp.stack([s_p, d_p, ef_p], axis=1)   # (B, 3)
    sn_sims = jnp.stack([s_n, d_n, ef_n], axis=1)   # (B, 3)

    sim_p, sim_n, loss = rgcn_model_forward(params, adj, feat, sel,
                                            sp_sims, sn_sims)
    jax.block_until_ready((sim_p, sim_n, loss))

    assert sim_p.shape == (B, 1) and sim_n.shape == (B, 1)
    assert np.isfinite(np.asarray(loss))
    print("KERNEL_OK")
</pallas_src>

<mosaic_0001>
module attributes {stable_mosaic.version = 11 : i64} {
  func.func @_rgcn_fused_kernel(%arg0: memref<4x96x96xf32, #tpu.memory_space<vmem>>, %arg1: memref<96x128xf32, #tpu.memory_space<vmem>>, %arg2: memref<4x128x512xbf16, #tpu.memory_space<vmem>>, %arg3: memref<128x128xf32, #tpu.memory_space<vmem>>, %arg4: memref<6x96xf32, #tpu.memory_space<vmem>>, %arg5: memref<2x128xf32, #tpu.memory_space<vmem>>, %arg6: memref<2x128xf32, #tpu.memory_space<vmem>>, %arg7: memref<1x128xf32, #tpu.memory_space<vmem>>, %arg8: memref<2xf32, #tpu.memory_space<smem>>, %arg9: memref<2x1xf32, #tpu.memory_space<vmem>>, %arg10: memref<2x1xf32, #tpu.memory_space<vmem>>, %arg11: memref<1x1xf32, #tpu.memory_space<vmem>>, %arg12: memref<96x128xf32, #tpu.memory_space<vmem>>, %arg13: memref<96x512xf32, #tpu.memory_space<vmem>>) attributes {dimension_semantics = [], scalar_prefetch = 0 : i64, scratch_operands = 2 : i64, tpu.core_type = #tpu.core_type<tc>} {
    %c0 = arith.constant 0 : index
    %c0_0 = arith.constant 0 : index
    %0 = vector.load %arg1[%c0, %c0_0] : memref<96x128xf32, #tpu.memory_space<vmem>>, vector<96x128xf32>
    %c0_1 = arith.constant 0 : index
    %c0_2 = arith.constant 0 : index
    %1 = vector.load %arg12[%c0_1, %c0_2] : memref<96x128xf32, #tpu.memory_space<vmem>>, vector<96x128xf32>
    tpu.vector_store %arg12[%c0_1, %c0_2], %0 {strides = array<i32>} : memref<96x128xf32, #tpu.memory_space<vmem>>, vector<96x128xf32>,
    %c0_3 = arith.constant 0 : index
    %c0_4 = arith.constant 0 : index
    %2 = vector.load %arg12[%c0_3, %c0_4] : memref<96x128xf32, #tpu.memory_space<vmem>>, vector<96x128xf32>
    %3 = arith.truncf %2 : vector<96x128xf32> to vector<96x128xbf16>
    %c0_5 = arith.constant 0 : index
    %c0_6 = arith.constant 0 : index
    %c0_7 = arith.constant 0 : index
    %4 = vector.load %arg2[%c0_5, %c0_6, %c0_7] : memref<4x128x512xbf16, #tpu.memory_space<vmem>>, vector<1x128x512xbf16>
    %5 = vector.shape_cast %4 : vector<1x128x512xbf16> to vector<128x512xbf16>
    %cst = arith.constant dense<0.000000e+00> : vector<96x512xf32>
    %6 = tpu.matmul %3, %5, %cst {dimension_numbers = #tpu.dot_dimension_numbers<[1], [0], [0], [1], [0, 0, 1, 1], [], []>} : vector<96x128xbf16>, vector<128x512xbf16>, vector<96x512xf32> -> vector<96x512xf32>
    %c0_8 = arith.constant 0 : index
    %c0_9 = arith.constant 0 : index
    %7 = vector.load %arg13[%c0_8, %c0_9] : memref<96x512xf32, #tpu.memory_space<vmem>>, vector<96x512xf32>
    tpu.vector_store %arg13[%c0_8, %c0_9], %6 {strides = array<i32>} : memref<96x512xf32, #tpu.memory_space<vmem>>, vector<96x512xf32>,
    %cst_10 = arith.constant 0.000000e+00 : f32
    %8 = vector.broadcast %cst_10 : f32 to vector<96x128xf32>
    %c0_11 = arith.constant 0 : index
    %c0_12 = arith.constant 0 : index
    %c0_13 = arith.constant 0 : index
    %9 = vector.load %arg0[%c0_11, %c0_12, %c0_13] : memref<4x96x96xf32, #tpu.memory_space<vmem>>, vector<1x96x96xf32>
    %10 = vector.shape_cast %9 : vector<1x96x96xf32> to vector<96x96xf32>
    %c0_14 = arith.constant 0 : index
    %c0_15 = arith.constant 0 : index
    %11 = vector.load %arg13[%c0_14, %c0_15] : memref<96x512xf32, #tpu.memory_space<vmem>>, vector<96x128xf32>
    %cst_16 = arith.constant dense<0.000000e+00> : vector<96x128xf32>
    %12 = tpu.matmul %10, %11, %cst_16 {dimension_numbers = #tpu.dot_dimension_numbers<[1], [0], [0], [1], [0, 0, 1, 1], [], []>} : vector<96x96xf32>, vector<96x128xf32>, vector<96x128xf32> -> vector<96x128xf32>
    %13 = arith.addf %8, %12 : vector<96x128xf32>
    %c1 = arith.constant 1 : index
    %c0_17 = arith.constant 0 : index
    %c0_18 = arith.constant 0 : index
    %14 = vector.load %arg0[%c1, %c0_17, %c0_18] : memref<4x96x96xf32, #tpu.memory_space<vmem>>, vector<1x96x96xf32>
    %15 = vector.shape_cast %14 : vector<1x96x96xf32> to vector<96x96xf32>
    %c0_19 = arith.constant 0 : index
    %c128 = arith.constant 128 : index
    %16 = vector.load %arg13[%c0_19, %c128] : memref<96x512xf32, #tpu.memory_space<vmem>>, vector<96x128xf32>
    %cst_20 = arith.constant dense<0.000000e+00> : vector<96x128xf32>
    %17 = tpu.matmul %15, %16, %cst_20 {dimension_numbers = #tpu.dot_dimension_numbers<[1], [0], [0], [1], [0, 0, 1, 1], [], []>} : vector<96x96xf32>, vector<96x128xf32>, vector<96x128xf32> -> vector<96x128xf32>
    %18 = arith.addf %13, %17 : vector<96x128xf32>
    %c2 = arith.constant 2 : index
    %c0_21 = arith.constant 0 : index
    %c0_22 = arith.constant 0 : index
    %19 = vector.load %arg0[%c2, %c0_21, %c0_22] : memref<4x96x96xf32, #tpu.memory_space<vmem>>, vector<1x96x96xf32>
    %20 = vector.shape_cast %19 : vector<1x96x96xf32> to vector<96x96xf32>
    %c0_23 = arith.constant 0 : index
    %c256 = arith.constant 256 : index
    %21 = vector.load %arg13[%c0_23, %c256] : memref<96x512xf32, #tpu.memory_space<vmem>>, vector<96x128xf32>
    %cst_24 = arith.constant dense<0.000000e+00> : vector<96x128xf32>
    %22 = tpu.matmul %20, %21, %cst_24 {dimension_numbers = #tpu.dot_dimension_numbers<[1], [0], [0], [1], [0, 0, 1, 1], [], []>} : vector<96x96xf32>, vector<96x128xf32>, vector<96x128xf32> -> vector<96x128xf32>
    %23 = arith.addf %18, %22 : vector<96x128xf32>
    %c3 = arith.constant 3 : index
    %c0_25 = arith.constant 0 : index
    %c0_26 = arith.constant 0 : index
    %24 = vector.load %arg0[%c3, %c0_25, %c0_26] : memref<4x96x96xf32, #tpu.memory_space<vmem>>, vector<1x96x96xf32>
    %25 = vector.shape_cast %24 : vector<1x96x96xf32> to vector<96x96xf32>
    %c0_27 = arith.constant 0 : index
    %c384 = arith.constant 384 : index
    %26 = vector.load %arg13[%c0_27, %c384] : memref<96x512xf32, #tpu.memory_space<vmem>>, vector<96x128xf32>
    %cst_28 = arith.constant dense<0.000000e+00> : vector<96x128xf32>
    %27 = tpu.matmul %25, %26, %cst_28 {dimension_numbers = #tpu.dot_dimension_numbers<[1], [0], [0], [1], [0, 0, 1, 1], [], []>} : vector<96x96xf32>, vector<96x128xf32>, vector<96x128xf32> -> vector<96x128xf32>
    %28 = arith.addf %23, %27 : vector<96x128xf32>
    %cst_29 = arith.constant 0.000000e+00 : f32
    %29 = vector.broadcast %cst_29 : f32 to vector<96x128xf32>
    %30 = arith.cmpf oge, %28, %29 : vector<96x128xf32>
    %cst_30 = arith.constant 2.000000e-01 : f32
    %31 = vector.broadcast %cst_30 : f32 to vector<96x128xf32>
    %32 = arith.mulf %31, %28 : vector<96x128xf32>
    %33 = arith.select %30, %28, %32 : vector<96x128xi1>, vector<96x128xf32>
    %c0_31 = arith.constant 0 : index
    %c0_32 = arith.constant 0 : index
    %34 = vector.load %arg12[%c0_31, %c0_32] : memref<96x128xf32, #tpu.memory_space<vmem>>, vector<96x128xf32>
    tpu.vector_store %arg12[%c0_31, %c0_32], %33 {strides = array<i32>} : memref<96x128xf32, #tpu.memory_space<vmem>>, vector<96x128xf32>,
    %c0_33 = arith.constant 0 : index
    %c0_34 = arith.constant 0 : index
    %35 = vector.load %arg12[%c0_33, %c0_34] : memref<96x128xf32, #tpu.memory_space<vmem>>, vector<96x128xf32>
    %36 = arith.truncf %35 : vector<96x128xf32> to vector<96x128xbf16>
    %c1_35 = arith.constant 1 : index
    %c0_36 = arith.constant 0 : index
    %c0_37 = arith.constant 0 : index
    %37 = vector.load %arg2[%c1_35, %c0_36, %c0_37] : memref<4x128x512xbf16, #tpu.memory_space<vmem>>, vector<1x128x512xbf16>
    %38 = vector.shape_cast %37 : vector<1x128x512xbf16> to vector<128x512xbf16>
    %cst_38 = arith.constant dense<0.000000e+00> : vector<96x512xf32>
    %39 = tpu.matmul %36, %38, %cst_38 {dimension_numbers = #tpu.dot_dimension_numbers<[1], [0], [0], [1], [0, 0, 1, 1], [], []>} : vector<96x128xbf16>, vector<128x512xbf16>, vector<96x512xf32> -> vector<96x512xf32>
    %c0_39 = arith.constant 0 : index
    %c0_40 = arith.constant 0 : index
    %40 = vector.load %arg13[%c0_39, %c0_40] : memref<96x512xf32, #tpu.memory_space<vmem>>, vector<96x512xf32>
    tpu.vector_store %arg13[%c0_39, %c0_40], %39 {strides = array<i32>} : memref<96x512xf32, #tpu.memory_space<vmem>>, vector<96x512xf32>,
    %cst_41 = arith.constant 0.000000e+00 : f32
    %41 = vector.broadcast %cst_41 : f32 to vector<96x128xf32>
    %c0_42 = arith.constant 0 : index
    %c0_43 = arith.constant 0 : index
    %c0_44 = arith.constant 0 : index
    %42 = vector.load %arg0[%c0_42, %c0_43, %c0_44] : memref<4x96x96xf32, #tpu.memory_space<vmem>>, vector<1x96x96xf32>
    %43 = vector.shape_cast %42 : vector<1x96x96xf32> to vector<96x96xf32>
    %c0_45 = arith.constant 0 : index
    %c0_46 = arith.constant 0 : index
    %44 = vector.load %arg13[%c0_45, %c0_46] : memref<96x512xf32, #tpu.memory_space<vmem>>, vector<96x128xf32>
    %cst_47 = arith.constant dense<0.000000e+00> : vector<96x128xf32>
    %45 = tpu.matmul %43, %44, %cst_47 {dimension_numbers = #tpu.dot_dimension_numbers<[1], [0], [0], [1], [0, 0, 1, 1], [], []>} : vector<96x96xf32>, vector<96x128xf32>, vector<96x128xf32> -> vector<96x128xf32>
    %46 = arith.addf %41, %45 : vector<96x128xf32>
    %c1_48 = arith.constant 1 : index
    %c0_49 = arith.constant 0 : index
    %c0_50 = arith.constant 0 : index
    %47 = vector.load %arg0[%c1_48, %c0_49, %c0_50] : memref<4x96x96xf32, #tpu.memory_space<vmem>>, vector<1x96x96xf32>
    %48 = vector.shape_cast %47 : vector<1x96x96xf32> to vector<96x96xf32>
    %c0_51 = arith.constant 0 : index
    %c128_52 = arith.constant 128 : index
    %49 = vector.load %arg13[%c0_51, %c128_52] : memref<96x512xf32, #tpu.memory_space<vmem>>, vector<96x128xf32>
    %cst_53 = arith.constant dense<0.000000e+00> : vector<96x128xf32>
    %50 = tpu.matmul %48, %49, %cst_53 {dimension_numbers = #tpu.dot_dimension_numbers<[1], [0], [0], [1], [0, 0, 1, 1], [], []>} : vector<96x96xf32>, vector<96x128xf32>, vector<96x128xf32> -> vector<96x128xf32>
    %51 = arith.addf %46, %50 : vector<96x128xf32>
    %c2_54 = arith.constant 2 : index
    %c0_55 = arith.constant 0 : index
    %c0_56 = arith.constant 0 : index
    %52 = vector.load %arg0[%c2_54, %c0_55, %c0_56] : memref<4x96x96xf32, #tpu.memory_space<vmem>>, vector<1x96x96xf32>
    %53 = vector.shape_cast %52 : vector<1x96x96xf32> to vector<96x96xf32>
    %c0_57 = arith.constant 0 : index
    %c256_58 = arith.constant 256 : index
    %54 = vector.load %arg13[%c0_57, %c256_58] : memref<96x512xf32, #tpu.memory_space<vmem>>, vector<96x128xf32>
    %cst_59 = arith.constant dense<0.000000e+00> : vector<96x128xf32>
    %55 = tpu.matmul %53, %54, %cst_59 {dimension_numbers = #tpu.dot_dimension_numbers<[1], [0], [0], [1], [0, 0, 1, 1], [], []>} : vector<96x96xf32>, vector<96x128xf32>, vector<96x128xf32> -> vector<96x128xf32>
    %56 = arith.addf %51, %55 : vector<96x128xf32>
    %c3_60 = arith.constant 3 : index
    %c0_61 = arith.constant 0 : index
    %c0_62 = arith.constant 0 : index
    %57 = vector.load %arg0[%c3_60, %c0_61, %c0_62] : memref<4x96x96xf32, #tpu.memory_space<vmem>>, vector<1x96x96xf32>
    %58 = vector.shape_cast %57 : vector<1x96x96xf32> to vector<96x96xf32>
    %c0_63 = arith.constant 0 : index
    %c384_64 = arith.constant 384 : index
    %59 = vector.load %arg13[%c0_63, %c384_64] : memref<96x512xf32, #tpu.memory_space<vmem>>, vector<96x128xf32>
    %cst_65 = arith.constant dense<0.000000e+00> : vector<96x128xf32>
    %60 = tpu.matmul %58, %59, %cst_65 {dimension_numbers = #tpu.dot_dimension_numbers<[1], [0], [0], [1], [0, 0, 1, 1], [], []>} : vector<96x96xf32>, vector<96x128xf32>, vector<96x128xf32> -> vector<96x128xf32>
    %61 = arith.addf %56, %60 : vector<96x128xf32>
    %cst_66 = arith.constant 0.000000e+00 : f32
    %62 = vector.broadcast %cst_66 : f32 to vector<96x128xf32>
    %63 = arith.cmpf oge, %61, %62 : vector<96x128xf32>
    %cst_67 = arith.constant 2.000000e-01 : f32
    %64 = vector.broadcast %cst_67 : f32 to vector<96x128xf32>
    %65 = arith.mulf %64, %61 : vector<96x128xf32>
    %66 = arith.select %63, %61, %65 : vector<96x128xi1>, vector<96x128xf32>
    %c0_68 = arith.constant 0 : index
    %c0_69 = arith.constant 0 : index
    %67 = vector.load %arg12[%c0_68, %c0_69] : memref<96x128xf32, #tpu.memory_space<vmem>>, vector<96x128xf32>
    tpu.vector_store %arg12[%c0_68, %c0_69], %66 {strides = array<i32>} : memref<96x128xf32, #tpu.memory_space<vmem>>, vector<96x128xf32>,
    %c0_70 = arith.constant 0 : index
    %c0_71 = arith.constant 0 : index
    %68 = vector.load %arg12[%c0_70, %c0_71] : memref<96x128xf32, #tpu.memory_space<vmem>>, vector<96x128xf32>
    %69 = arith.truncf %68 : vector<96x128xf32> to vector<96x128xbf16>
    %c2_72 = arith.constant 2 : index
    %c0_73 = arith.constant 0 : index
    %c0_74 = arith.constant 0 : index
    %70 = vector.load %arg2[%c2_72, %c0_73, %c0_74] : memref<4x128x512xbf16, #tpu.memory_space<vmem>>, vector<1x128x512xbf16>
    %71 = vector.shape_cast %70 : vector<1x128x512xbf16> to vector<128x512xbf16>
    %cst_75 = arith.constant dense<0.000000e+00> : vector<96x512xf32>
    %72 = tpu.matmul %69, %71, %cst_75 {dimension_numbers = #tpu.dot_dimension_numbers<[1], [0], [0], [1], [0, 0, 1, 1], [], []>} : vector<96x128xbf16>, vector<128x512xbf16>, vector<96x512xf32> -> vector<96x512xf32>
    %c0_76 = arith.constant 0 : index
    %c0_77 = arith.constant 0 : index
    %73 = vector.load %arg13[%c0_76, %c0_77] : memref<96x512xf32, #tpu.memory_space<vmem>>, vector<96x512xf32>
    tpu.vector_store %arg13[%c0_76, %c0_77], %72 {strides = array<i32>} : memref<96x512xf32, #tpu.memory_space<vmem>>, vector<96x512xf32>,
    %cst_78 = arith.constant 0.000000e+00 : f32
    %74 = vector.broadcast %cst_78 : f32 to vector<96x128xf32>
    %c0_79 = arith.constant 0 : index
    %c0_80 = arith.constant 0 : index
    %c0_81 = arith.constant 0 : index
    %75 = vector.load %arg0[%c0_79, %c0_80, %c0_81] : memref<4x96x96xf32, #tpu.memory_space<vmem>>, vector<1x96x96xf32>
    %76 = vector.shape_cast %75 : vector<1x96x96xf32> to vector<96x96xf32>
    %c0_82 = arith.constant 0 : index
    %c0_83 = arith.constant 0 : index
    %77 = vector.load %arg13[%c0_82, %c0_83] : memref<96x512xf32, #tpu.memory_space<vmem>>, vector<96x128xf32>
    %cst_84 = arith.constant dense<0.000000e+00> : vector<96x128xf32>
    %78 = tpu.matmul %76, %77, %cst_84 {dimension_numbers = #tpu.dot_dimension_numbers<[1], [0], [0], [1], [0, 0, 1, 1], [], []>} : vector<96x96xf32>, vector<96x128xf32>, vector<96x128xf32> -> vector<96x128xf32>
    %79 = arith.addf %74, %78 : vector<96x128xf32>
    %c1_85 = arith.constant 1 : index
    %c0_86 = arith.constant 0 : index
    %c0_87 = arith.constant 0 : index
    %80 = vector.load %arg0[%c1_85, %c0_86, %c0_87] : memref<4x96x96xf32, #tpu.memory_space<vmem>>, vector<1x96x96xf32>
    %81 = vector.shape_cast %80 : vector<1x96x96xf32> to vector<96x96xf32>
    %c0_88 = arith.constant 0 : index
    %c128_89 = arith.constant 128 : index
    %82 = vector.load %arg13[%c0_88, %c128_89] : memref<96x512xf32, #tpu.memory_space<vmem>>, vector<96x128xf32>
    %cst_90 = arith.constant dense<0.000000e+00> : vector<96x128xf32>
    %83 = tpu.matmul %81, %82, %cst_90 {dimension_numbers = #tpu.dot_dimension_numbers<[1], [0], [0], [1], [0, 0, 1, 1], [], []>} : vector<96x96xf32>, vector<96x128xf32>, vector<96x128xf32> -> vector<96x128xf32>
    %84 = arith.addf %79, %83 : vector<96x128xf32>
    %c2_91 = arith.constant 2 : index
    %c0_92 = arith.constant 0 : index
    %c0_93 = arith.constant 0 : index
    %85 = vector.load %arg0[%c2_91, %c0_92, %c0_93] : memref<4x96x96xf32, #tpu.memory_space<vmem>>, vector<1x96x96xf32>
    %86 = vector.shape_cast %85 : vector<1x96x96xf32> to vector<96x96xf32>
    %c0_94 = arith.constant 0 : index
    %c256_95 = arith.constant 256 : index
    %87 = vector.load %arg13[%c0_94, %c256_95] : memref<96x512xf32, #tpu.memory_space<vmem>>, vector<96x128xf32>
    %cst_96 = arith.constant dense<0.000000e+00> : vector<96x128xf32>
    %88 = tpu.matmul %86, %87, %cst_96 {dimension_numbers = #tpu.dot_dimension_numbers<[1], [0], [0], [1], [0, 0, 1, 1], [], []>} : vector<96x96xf32>, vector<96x128xf32>, vector<96x128xf32> -> vector<96x128xf32>
    %89 = arith.addf %84, %88 : vector<96x128xf32>
    %c3_97 = arith.constant 3 : index
    %c0_98 = arith.constant 0 : index
    %c0_99 = arith.constant 0 : index
    %90 = vector.load %arg0[%c3_97, %c0_98, %c0_99] : memref<4x96x96xf32, #tpu.memory_space<vmem>>, vector<1x96x96xf32>
    %91 = vector.shape_cast %90 : vector<1x96x96xf32> to vector<96x96xf32>
    %c0_100 = arith.constant 0 : index
    %c384_101 = arith.constant 384 : index
    %92 = vector.load %arg13[%c0_100, %c384_101] : memref<96x512xf32, #tpu.memory_space<vmem>>, vector<96x128xf32>
    %cst_102 = arith.constant dense<0.000000e+00> : vector<96x128xf32>
    %93 = tpu.matmul %91, %92, %cst_102 {dimension_numbers = #tpu.dot_dimension_numbers<[1], [0], [0], [1], [0, 0, 1, 1], [], []>} : vector<96x96xf32>, vector<96x128xf32>, vector<96x128xf32> -> vector<96x128xf32>
    %94 = arith.addf %89, %93 : vector<96x128xf32>
    %cst_103 = arith.constant 0.000000e+00 : f32
    %95 = vector.broadcast %cst_103 : f32 to vector<96x128xf32>
    %96 = arith.cmpf oge, %94, %95 : vector<96x128xf32>
    %cst_104 = arith.constant 2.000000e-01 : f32
    %97 = vector.broadcast %cst_104 : f32 to vector<96x128xf32>
    %98 = arith.mulf %97, %94 : vector<96x128xf32>
    %99 = arith.select %96, %94, %98 : vector<96x128xi1>, vector<96x128xf32>
    %c0_105 = arith.constant 0 : index
    %c0_106 = arith.constant 0 : index
    %100 = vector.load %arg12[%c0_105, %c0_106] : memref<96x128xf32, #tpu.memory_space<vmem>>, vector<96x128xf32>
    tpu.vector_store %arg12[%c0_105, %c0_106], %99 {strides = array<i32>} : memref<96x128xf32, #tpu.memory_space<vmem>>, vector<96x128xf32>,
    %c0_107 = arith.constant 0 : index
    %c0_108 = arith.constant 0 : index
    %101 = vector.load %arg12[%c0_107, %c0_108] : memref<96x128xf32, #tpu.memory_space<vmem>>, vector<96x128xf32>
    %102 = arith.truncf %101 : vector<96x128xf32> to vector<96x128xbf16>
    %c3_109 = arith.constant 3 : index
    %c0_110 = arith.constant 0 : index
    %c0_111 = arith.constant 0 : index
    %103 = vector.load %arg2[%c3_109, %c0_110, %c0_111] : memref<4x128x512xbf16, #tpu.memory_space<vmem>>, vector<1x128x512xbf16>
    %104 = vector.shape_cast %103 : vector<1x128x512xbf16> to vector<128x512xbf16>
    %cst_112 = arith.constant dense<0.000000e+00> : vector<96x512xf32>
    %105 = tpu.matmul %102, %104, %cst_112 {dimension_numbers = #tpu.dot_dimension_numbers<[1], [0], [0], [1], [0, 0, 1, 1], [], []>} : vector<96x128xbf16>, vector<128x512xbf16>, vector<96x512xf32> -> vector<96x512xf32>
    %c0_113 = arith.constant 0 : index
    %c0_114 = arith.constant 0 : index
    %106 = vector.load %arg13[%c0_113, %c0_114] : memref<96x512xf32, #tpu.memory_space<vmem>>, vector<96x512xf32>
    tpu.vector_store %arg13[%c0_113, %c0_114], %105 {strides = array<i32>} : memref<96x512xf32, #tpu.memory_space<vmem>>, vector<96x512xf32>,
    %cst_115 = arith.constant 0.000000e+00 : f32
    %107 = vector.broadcast %cst_115 : f32 to vector<96x128xf32>
    %c0_116 = arith.constant 0 : index
    %c0_117 = arith.constant 0 : index
    %c0_118 = arith.constant 0 : index
    %108 = vector.load %arg0[%c0_116, %c0_117, %c0_118] : memref<4x96x96xf32, #tpu.memory_space<vmem>>, vector<1x96x96xf32>
    %109 = vector.shape_cast %108 : vector<1x96x96xf32> to vector<96x96xf32>
    %c0_119 = arith.constant 0 : index
    %c0_120 = arith.constant 0 : index
    %110 = vector.load %arg13[%c0_119, %c0_120] : memref<96x512xf32, #tpu.memory_space<vmem>>, vector<96x128xf32>
    %cst_121 = arith.constant dense<0.000000e+00> : vector<96x128xf32>
    %111 = tpu.matmul %109, %110, %cst_121 {dimension_numbers = #tpu.dot_dimension_numbers<[1], [0], [0], [1], [0, 0, 1, 1], [], []>} : vector<96x96xf32>, vector<96x128xf32>, vector<96x128xf32> -> vector<96x128xf32>
    %112 = arith.addf %107, %111 : vector<96x128xf32>
    %c1_122 = arith.constant 1 : index
    %c0_123 = arith.constant 0 : index
    %c0_124 = arith.constant 0 : index
    %113 = vector.load %arg0[%c1_122, %c0_123, %c0_124] : memref<4x96x96xf32, #tpu.memory_space<vmem>>, vector<1x96x96xf32>
    %114 = vector.shape_cast %113 : vector<1x96x96xf32> to vector<96x96xf32>
    %c0_125 = arith.constant 0 : index
    %c128_126 = arith.constant 128 : index
    %115 = vector.load %arg13[%c0_125, %c128_126] : memref<96x512xf32, #tpu.memory_space<vmem>>, vector<96x128xf32>
    %cst_127 = arith.constant dense<0.000000e+00> : vector<96x128xf32>
    %116 = tpu.matmul %114, %115, %cst_127 {dimension_numbers = #tpu.dot_dimension_numbers<[1], [0], [0], [1], [0, 0, 1, 1], [], []>} : vector<96x96xf32>, vector<96x128xf32>, vector<96x128xf32> -> vector<96x128xf32>
    %117 = arith.addf %112, %116 : vector<96x128xf32>
    %c2_128 = arith.constant 2 : index
    %c0_129 = arith.constant 0 : index
    %c0_130 = arith.constant 0 : index
    %118 = vector.load %arg0[%c2_128, %c0_129, %c0_130] : memref<4x96x96xf32, #tpu.memory_space<vmem>>, vector<1x96x96xf32>
    %119 = vector.shape_cast %118 : vector<1x96x96xf32> to vector<96x96xf32>
    %c0_131 = arith.constant 0 : index
    %c256_132 = arith.constant 256 : index
    %120 = vector.load %arg13[%c0_131, %c256_132] : memref<96x512xf32, #tpu.memory_space<vmem>>, vector<96x128xf32>
    %cst_133 = arith.constant dense<0.000000e+00> : vector<96x128xf32>
    %121 = tpu.matmul %119, %120, %cst_133 {dimension_numbers = #tpu.dot_dimension_numbers<[1], [0], [0], [1], [0, 0, 1, 1], [], []>} : vector<96x96xf32>, vector<96x128xf32>, vector<96x128xf32> -> vector<96x128xf32>
    %122 = arith.addf %117, %121 : vector<96x128xf32>
    %c3_134 = arith.constant 3 : index
    %c0_135 = arith.constant 0 : index
    %c0_136 = arith.constant 0 : index
    %123 = vector.load %arg0[%c3_134, %c0_135, %c0_136] : memref<4x96x96xf32, #tpu.memory_space<vmem>>, vector<1x96x96xf32>
    %124 = vector.shape_cast %123 : vector<1x96x96xf32> to vector<96x96xf32>
    %c0_137 = arith.constant 0 : index
    %c384_138 = arith.constant 384 : index
    %125 = vector.load %arg13[%c0_137, %c384_138] : memref<96x512xf32, #tpu.memory_space<vmem>>, vector<96x128xf32>
    %cst_139 = arith.constant dense<0.000000e+00> : vector<96x128xf32>
    %126 = tpu.matmul %124, %125, %cst_139 {dimension_numbers = #tpu.dot_dimension_numbers<[1], [0], [0], [1], [0, 0, 1, 1], [], []>} : vector<96x96xf32>, vector<96x128xf32>, vector<96x128xf32> -> vector<96x128xf32>
    %127 = arith.addf %122, %126 : vector<96x128xf32>
    %cst_140 = arith.constant 0.000000e+00 : f32
    %128 = vector.broadcast %cst_140 : f32 to vector<96x128xf32>
    %129 = arith.cmpf oge, %127, %128 : vector<96x128xf32>
    %cst_141 = arith.constant 2.000000e-01 : f32
    %130 = vector.broadcast %cst_141 : f32 to vector<96x128xf32>
    %131 = arith.mulf %130, %127 : vector<96x128xf32>
    %132 = arith.select %129, %127, %131 : vector<96x128xi1>, vector<96x128xf32>
    %c0_142 = arith.constant 0 : index
    %c0_143 = arith.constant 0 : index
    %133 = vector.load %arg12[%c0_142, %c0_143] : memref<96x128xf32, #tpu.memory_space<vmem>>, vector<96x128xf32>
    tpu.vector_store %arg12[%c0_142, %c0_143], %132 {strides = array<i32>} : memref<96x128xf32, #tpu.memory_space<vmem>>, vector<96x128xf32>,
    %c0_144 = arith.constant 0 : index
    %c0_145 = arith.constant 0 : index
    %134 = vector.load %arg4[%c0_144, %c0_145] : memref<6x96xf32, #tpu.memory_space<vmem>>, vector<6x96xf32>
    %c0_146 = arith.constant 0 : index
    %c0_147 = arith.constant 0 : index
    %135 = vector.load %arg12[%c0_146, %c0_147] : memref<96x128xf32, #tpu.memory_space<vmem>>, vector<96x128xf32>
    %cst_148 = arith.constant dense<0.000000e+00> : vector<6x128xf32>
    %136 = tpu.matmul %134, %135, %cst_148 {dimension_numbers = #tpu.dot_dimension_numbers<[1], [0], [0], [1], [0, 0, 1, 1], [], []>} : vector<6x96xf32>, vector<96x128xf32>, vector<6x128xf32> -> vector<6x128xf32>
    %c0_149 = arith.constant 0 : index
    %c0_150 = arith.constant 0 : index
    %137 = vector.load %arg4[%c0_149, %c0_150] : memref<6x96xf32, #tpu.memory_space<vmem>>, vector<6x96xf32>
    %c0_151 = arith.constant 0 : index
    %c0_152 = arith.constant 0 : index
    %138 = vector.load %arg1[%c0_151, %c0_152] : memref<96x128xf32, #tpu.memory_space<vmem>>, vector<96x128xf32>
    %cst_153 = arith.constant dense<0.000000e+00> : vector<6x128xf32>
    %139 = tpu.matmul %137, %138, %cst_153 {dimension_numbers = #tpu.dot_dimension_numbers<[1], [0], [0], [1], [0, 0, 1, 1], [], []>} : vector<6x96xf32>, vector<96x128xf32>, vector<6x128xf32> -> vector<6x128xf32>
    %c0_154 = arith.constant 0 : index
    %c0_155 = arith.constant 0 : index
    %140 = vector.load %arg3[%c0_154, %c0_155] : memref<128x128xf32, #tpu.memory_space<vmem>>, vector<128x128xf32>
    %cst_156 = arith.constant dense<0.000000e+00> : vector<6x128xf32>
    %141 = tpu.matmul %139, %140, %cst_156 {dimension_numbers = #tpu.dot_dimension_numbers<[1], [0], [0], [1], [0, 0, 1, 1], [], []>} : vector<6x128xf32>, vector<128x128xf32>, vector<6x128xf32> -> vector<6x128xf32>
    %142 = arith.addf %136, %141 : vector<6x128xf32>
    %143 = vector.extract_strided_slice %142 {offsets = [0, 0], sizes = [2, 128], strides = [1, 1]} : vector<6x128xf32> to vector<2x128xf32>
    %144 = vector.extract_strided_slice %142 {offsets = [2, 0], sizes = [2, 128], strides = [1, 1]} : vector<6x128xf32> to vector<2x128xf32>
    %145 = vector.extract_strided_slice %142 {offsets = [4, 0], sizes = [2, 128], strides = [1, 1]} : vector<6x128xf32> to vector<2x128xf32>
    %146 = arith.mulf %143, %144 : vector<2x128xf32>
    %cst_157 = arith.constant dense<0.000000e+00> : vector<2xf32>
    %147 = vector.multi_reduction <add>, %146, %cst_157 [1] : vector<2x128xf32> to vector<2xf32>
    %148 = vector.shape_cast %147 : vector<2xf32> to vector<2x1xf32>
    %149 = arith.mulf %143, %143 : vector<2x128xf32>
    %cst_158 = arith.constant dense<0.000000e+00> : vector<2xf32>
    %150 = vector.multi_reduction <add>, %149, %cst_158 [1] : vector<2x128xf32> to vector<2xf32>
    %151 = vector.shape_cast %150 : vector<2xf32> to vector<2x1xf32>
    %152 = arith.mulf %144, %144 : vector<2x128xf32>
    %cst_159 = arith.constant dense<0.000000e+00> : vector<2xf32>
    %153 = vector.multi_reduction <add>, %152, %cst_159 [1] : vector<2x128xf32> to vector<2xf32>
    %154 = vector.shape_cast %153 : vector<2xf32> to vector<2x1xf32>
    %155 = arith.mulf %151, %154 : vector<2x1xf32>
    %cst_160 = arith.constant 9.99999968E-21 : f32
    %156 = vector.broadcast %cst_160 : f32 to vector<2x1xf32>
    %157 = arith.maximumf %155, %156 : vector<2x1xf32>
    %158 = math.rsqrt %157 : vector<2x1xf32>
    %159 = arith.mulf %148, %158 : vector<2x1xf32>
    %160 = arith.mulf %143, %145 : vector<2x128xf32>
    %cst_161 = arith.constant dense<0.000000e+00> : vector<2xf32>
    %161 = vector.multi_reduction <add>, %160, %cst_161 [1] : vector<2x128xf32> to vector<2xf32>
    %162 = vector.shape_cast %161 : vector<2xf32> to vector<2x1xf32>
    %163 = arith.mulf %143, %143 : vector<2x128xf32>
    %cst_162 = arith.constant dense<0.000000e+00> : vector<2xf32>
    %164 = vector.multi_reduction <add>, %163, %cst_162 [1] : vector<2x128xf32> to vector<2xf32>
    %165 = vector.shape_cast %164 : vector<2xf32> to vector<2x1xf32>
    %166 = arith.mulf %145, %145 : vector<2x128xf32>
    %cst_163 = arith.constant dense<0.000000e+00> : vector<2xf32>
    %167 = vector.multi_reduction <add>, %166, %cst_163 [1] : vector<2x128xf32> to vector<2xf32>
    %168 = vector.shape_cast %167 : vector<2xf32> to vector<2x1xf32>
    %169 = arith.mulf %165, %168 : vector<2x1xf32>
    %cst_164 = arith.constant 9.99999968E-21 : f32
    %170 = vector.broadcast %cst_164 : f32 to vector<2x1xf32>
    %171 = arith.maximumf %169, %170 : vector<2x1xf32>
    %172 = math.rsqrt %171 : vector<2x1xf32>
    %173 = arith.mulf %162, %172 : vector<2x1xf32>
    %c0_165 = arith.constant 0 : index
    %174 = memref.load %arg8[%c0_165] : memref<2xf32, #tpu.memory_space<smem>>
    %c1_166 = arith.constant 1 : index
    %175 = memref.load %arg8[%c1_166] : memref<2xf32, #tpu.memory_space<smem>>
    %c0_167 = arith.constant 0 : index
    %c0_168 = arith.constant 0 : index
    %176 = vector.load %arg5[%c0_167, %c0_168] : memref<2x128xf32, #tpu.memory_space<vmem>>, vector<2x128xf32>
    %c0_169 = arith.constant 0 : index
    %c0_170 = arith.constant 0 : index
    %177 = vector.load %arg7[%c0_169, %c0_170] : memref<1x128xf32, #tpu.memory_space<vmem>>, vector<1x128xf32>
    %178 = vector.broadcast %177 : vector<1x128xf32> to vector<2x128xf32>
    %179 = arith.mulf %176, %178 : vector<2x128xf32>
    %cst_171 = arith.constant dense<0.000000e+00> : vector<2xf32>
    %180 = vector.multi_reduction <add>, %179, %cst_171 [1] : vector<2x128xf32> to vector<2xf32>
    %181 = vector.shape_cast %180 : vector<2xf32> to vector<2x1xf32>
    %c0_172 = arith.constant 0 : index
    %c0_173 = arith.constant 0 : index
    %182 = vector.load %arg6[%c0_172, %c0_173] : memref<2x128xf32, #tpu.memory_space<vmem>>, vector<2x128xf32>
    %c0_174 = arith.constant 0 : index
    %c0_175 = arith.constant 0 : index
    %183 = vector.load %arg7[%c0_174, %c0_175] : memref<1x128xf32, #tpu.memory_space<vmem>>, vector<1x128xf32>
    %184 = vector.broadcast %183 : vector<1x128xf32> to vector<2x128xf32>
    %185 = arith.mulf %182, %184 : vector<2x128xf32>
    %cst_176 = arith.constant dense<0.000000e+00> : vector<2xf32>
    %186 = vector.multi_reduction <add>, %185, %cst_176 [1] : vector<2x128xf32> to vector<2xf32>
    %187 = vector.shape_cast %186 : vector<2xf32> to vector<2x1xf32>
    %188 = vector.broadcast %174 : f32 to vector<2x1xf32>
    %189 = arith.mulf %159, %188 : vector<2x1xf32>
    %190 = arith.addf %189, %181 : vector<2x1xf32>
    %191 = vector.broadcast %175 : f32 to vector<2x1xf32>
    %192 = arith.addf %190, %191 : vector<2x1xf32>
    %193 = math.tanh %192 : vector<2x1xf32>
    %194 = vector.broadcast %174 : f32 to vector<2x1xf32>
    %195 = arith.mulf %173, %194 : vector<2x1xf32>
    %196 = arith.addf %195, %187 : vector<2x1xf32>
    %197 = vector.broadcast %175 : f32 to vector<2x1xf32>
    %198 = arith.addf %196, %197 : vector<2x1xf32>
    %199 = math.tanh %198 : vector<2x1xf32>
    %c0_177 = arith.constant 0 : index
    %c0_178 = arith.constant 0 : index
    %200 = vector.load %arg9[%c0_177, %c0_178] : memref<2x1xf32, #tpu.memory_space<vmem>>, vector<2x1xf32>
    tpu.vector_store %arg9[%c0_177, %c0_178], %193 {strides = array<i32>} : memref<2x1xf32, #tpu.memory_space<vmem>>, vector<2x1xf32>,
    %c0_179 = arith.constant 0 : index
    %c0_180 = arith.constant 0 : index
    %201 = vector.load %arg10[%c0_179, %c0_180] : memref<2x1xf32, #tpu.memory_space<vmem>>, vector<2x1xf32>
    tpu.vector_store %arg10[%c0_179, %c0_180], %199 {strides = array<i32>} : memref<2x1xf32, #tpu.memory_space<vmem>>, vector<2x1xf32>,
    %cst_181 = arith.constant 1.000000e+00 : f32
    %202 = vector.broadcast %cst_181 : f32 to vector<2x1xf32>
    %203 = arith.subf %202, %193 : vector<2x1xf32>
    %204 = arith.mulf %203, %203 : vector<2x1xf32>
    %205 = vector.shape_cast %204 : vector<2x1xf32> to vector<1x2x1xf32>
    %cst_182 = arith.constant dense<0.000000e+00> : vector<1xf32>
    %206 = vector.multi_reduction <add>, %205, %cst_182 [1, 2] : vector<1x2x1xf32> to vector<1xf32>
    %207 = vector.shape_cast %206 : vector<1xf32> to vector<1x1x1xf32>
    %208 = vector.extract %207[0, 0, 0] : f32 from vector<1x1x1xf32>
    %209 = vector.broadcast %208 : f32 to vector<1x1xf32>
    %cst_183 = arith.constant 2.000000e+00 : f32
    %210 = vector.broadcast %cst_183 : f32 to vector<1x1xf32>
    %211 = arith.divf %209, %210 : vector<1x1xf32>
    %cst_184 = arith.constant 1.000000e+00 : f32
    %212 = vector.broadcast %cst_184 : f32 to vector<2x1xf32>
    %213 = arith.addf %199, %212 : vector<2x1xf32>
    %214 = arith.mulf %213, %213 : vector<2x1xf32>
    %215 = vector.shape_cast %214 : vector<2x1xf32> to vector<1x2x1xf32>
    %cst_185 = arith.constant dense<0.000000e+00> : vector<1xf32>
    %216 = vector.multi_reduction <add>, %215, %cst_185 [1, 2] : vector<1x2x1xf32> to vector<1xf32>
    %217 = vector.shape_cast %216 : vector<1xf32> to vector<1x1x1xf32>
    %218 = vector.extract %217[0, 0, 0] : f32 from vector<1x1x1xf32>
    %219 = vector.broadcast %218 : f32 to vector<1x1xf32>
    %cst_186 = arith.constant 2.000000e+00 : f32
    %220 = vector.broadcast %cst_186 : f32 to vector<1x1xf32>
    %221 = arith.divf %219, %220 : vector<1x1xf32>
    %222 = arith.addf %211, %221 : vector<1x1xf32>
    %cst_187 = arith.constant 5.000000e-01 : f32
    %223 = vector.broadcast %cst_187 : f32 to vector<1x1xf32>
    %224 = arith.mulf %222, %223 : vector<1x1xf32>
    %c0_188 = arith.constant 0 : index
    %c0_189 = arith.constant 0 : index
    %225 = vector.load %arg11[%c0_188, %c0_189] : memref<1x1xf32, #tpu.memory_space<vmem>>, vector<1x1xf32>
    tpu.vector_store %arg11[%c0_188, %c0_189], %224 {strides = array<i32>} : memref<1x1xf32, #tpu.memory_space<vmem>>, vector<1x1xf32>,
    return
  }
}

</mosaic_0001>

<llo_original>
// kernel: tpu_custom_call.1
$region0: #{tpu_custom_call.1}
  #allocation0 [shape = 'u32[]', space=smem, size = 0x4, offset = 0x4, fixed_abs, tag = 'smem constant byte address 0x4 - core index']
  #allocation1 [shape = 'u32[144,128]{1,0:T(1,128)}', space=vmem, size = 0x12000, scoped, tag = 'internal scratch']
  #allocation2 [shape = 'f32[96,128]{1,0:T(8,128)}', space=vmem, size = 0xc000, scoped, tag = 'scratch operand']
  #allocation3 [shape = 'f32[96,512]{1,0:T(8,128)}', space=vmem, size = 0x30000, scoped, tag = 'scratch operand']
  %s0 = inlined_call_operand.hbm [shape: f32[4,96,96], index: 0, kind: input, shape index: {}]
  %s1 = inlined_call_operand.hbm [shape: f32[96,128], index: 1, kind: input, shape index: {}]
  %s2 = inlined_call_operand.hbm [shape: bf16[4,128,512], index: 2, kind: input, shape index: {}]
  %s3 = inlined_call_operand.hbm [shape: f32[128,128], index: 3, kind: input, shape index: {}]
  %s4 = inlined_call_operand.vmem [shape: f32[6,96], index: 4, kind: input, shape index: {}]
  %s5 = inlined_call_operand.vmem [shape: f32[2,128], index: 5, kind: input, shape index: {}]
  %s6 = inlined_call_operand.vmem [shape: f32[2,128], index: 6, kind: input, shape index: {}]
  %s7 = inlined_call_operand.vmem [shape: f32[1,128], index: 7, kind: input, shape index: {}]
  %s8 = inlined_call_operand.vmem [shape: f32[2], index: 8, kind: input, shape index: {}]
  %s9 = inlined_call_operand.vmem [shape: f32[2,1], index: 9, kind: output, shape index: {0}]
  %s10 = inlined_call_operand.vmem [shape: f32[2,1], index: 10, kind: output, shape index: {1}]
  %s11 = inlined_call_operand.hbm [shape: f32[1,1], index: 11, kind: output, shape index: {2}]
  %12 = xla_tuple %s9, %s10, %s11
  %s13 = sld [smem:[#allocation0]]
  $region82: #{tpu_custom_call.1} parent=0
    _
  %s15 = ssub.s32 1, %s13
  %s16 = scalar_select 0, %s15, %s13
  $region1: #{tpu_custom_call.1} parent=0
    #allocation4 [shape = 'u8[196608]{0}', space=vmem, size = 0x30000, scoped, tag = 'input window, operand 0, single buffered']
    #allocation5 [shape = 's32[1]{0}', space=sflag, size = 0x4, scoped, tag = 'scoped memory for tpu_custom_call.1']
    #allocation6 [shape = 's32[1]{0}', space=sflag, size = 0x4, scoped, tag = 'scoped memory for tpu_custom_call.1']
    #allocation7 [shape = 's32[1]{0}', space=sflag, size = 0x4, scoped, tag = 'scoped memory for tpu_custom_call.1']
    #allocation8 [shape = 'u8[49152]{0}', space=vmem, size = 0xc000, scoped, tag = 'input window, operand 1, single buffered']
    #allocation9 [shape = 's32[1]{0}', space=sflag, size = 0x4, scoped, tag = 'scoped memory for tpu_custom_call.1']
    #allocation10 [shape = 'u8[524288]{0}', space=vmem, size = 0x80000, scoped, tag = 'input window, operand 2, single buffered']
    #allocation11 [shape = 'u8[65536]{0}', space=vmem, size = 0x10000, scoped, tag = 'input window, operand 3, single buffered']
    #allocation12 [shape = 's32[1]{0}', space=sflag, size = 0x4, scoped, tag = 'scoped memory for tpu_custom_call.1']
    #allocation13 [shape = 'u8[512]{0}', space=smem, size = 0x200, scoped, tag = 'input window, operand 8, single buffered']
    #allocation14 [shape = 'u8[512]{0}', space=vmem, size = 0x400, scoped, tag = 'output window, operand 2, single buffered']
    %17 = vsyncpa [#allocation5], 0
    %18 = vsyncpa [#allocation9], 0
    %19 = vsyncpa [#allocation12], 0
    %20 = vsyncpa [#allocation7], 0
    %21 = vsyncpa [#allocation6], 0
    // Predicated region
    $region2: #{tpu_custom_call.1} parent=1 // pred_check
      _
    $region3: #{tpu_custom_call.1} parent=1 // pred_check_branch
      %23 = sbr.rel (0) target = $region5
    $region4: #{tpu_custom_call.1} parent=1 // pred_region
      %s25 = ssub.s32 6144, 6144
      %26 = vsyncadd [#allocation5], %s25
      %s27 = sshll.u32 [#allocation4], 4
      %s28 = int_to_ptr.vmem [resolvable:$true] %s27
      %33 = dma.hbm_to_vmem [thread:$0]  %s0, 6144, %s28, [#allocation5], 128, 128, 8
    $region5: #{tpu_custom_call.1} parent=1 // pred_fallthru
      _
    // Predicated region
    $region6: #{tpu_custom_call.1} parent=1 // pred_check
      _
    $region7: #{tpu_custom_call.1} parent=1 // pred_check_branch
      %35 = sbr.rel (0) target = $region9
    $region8: #{tpu_custom_call.1} parent=1 // pred_region
      %s37 = ssub.s32 1536, 1536
      %38 = vsyncadd [#allocation9], %s37
      %s39 = sshll.u32 [#allocation8], 4
      %s40 = int_to_ptr.vmem [resolvable:$true] %s39
      %45 = dma.hbm_to_vmem [thread:$0]  %s1, 1536, %s40, [#allocation9], 128, 128, 8
    $region9: #{tpu_custom_call.1} parent=1 // pred_fallthru
      _
    // Predicated region
    $region10: #{tpu_custom_call.1} parent=1 // pred_check
      _
    $region11: #{tpu_custom_call.1} parent=1 // pred_check_branch
      %47 = sbr.rel (0) target = $region13
    $region12: #{tpu_custom_call.1} parent=1 // pred_region
      %s49 = ssub.s32 16384, 16384
      %50 = vsyncadd [#allocation9], %s49
      %s51 = sshll.u32 [#allocation10], 4
      %s52 = int_to_ptr.vmem [resolvable:$true] %s51
      %57 = dma.hbm_to_vmem [thread:$0]  %s2, 16384, %s52, [#allocation9], 256, 256, 16
    $region13: #{tpu_custom_call.1} parent=1 // pred_fallthru
      _
    // Predicated region
    $region14: #{tpu_custom_call.1} parent=1 // pred_check
      _
    $region15: #{tpu_custom_call.1} parent=1 // pred_check_branch
      %59 = sbr.rel (0) target = $region17
    $region16: #{tpu_custom_call.1} parent=1 // pred_region
      %s61 = ssub.s32 2048, 2048
      %62 = vsyncadd [#allocation12], %s61
      %s63 = sshll.u32 [#allocation11], 4
      %s64 = int_to_ptr.vmem [resolvable:$true] %s63
      %69 = dma.hbm_to_vmem [thread:$0]  %s3, 2048, %s64, [#allocation12], 128, 128, 8
    $region17: #{tpu_custom_call.1} parent=1 // pred_fallthru
      _
    // Predicated region
    $region18: #{tpu_custom_call.1} parent=1 // pred_check
      _
    $region19: #{tpu_custom_call.1} parent=1 // pred_check_branch
      %71 = sbr.rel (0) target = $region21
    $region20: #{tpu_custom_call.1} parent=1 // pred_region
      _
    $region21: #{tpu_custom_call.1} parent=1 // pred_fallthru
      _
    // Predicated region
    $region22: #{tpu_custom_call.1} parent=1 // pred_check
      _
    $region23: #{tpu_custom_call.1} parent=1 // pred_check_branch
      %73 = sbr.rel (0) target = $region25
    $region24: #{tpu_custom_call.1} parent=1 // pred_region
      _
    $region25: #{tpu_custom_call.1} parent=1 // pred_fallthru
      _
    // Predicated region
    $region26: #{tpu_custom_call.1} parent=1 // pred_check
      _
    $region27: #{tpu_custom_call.1} parent=1 // pred_check_branch
      %75 = sbr.rel (0) target = $region29
    $region28: #{tpu_custom_call.1} parent=1 // pred_region
      _
    $region29: #{tpu_custom_call.1} parent=1 // pred_fallthru
      _
    // Predicated region
    $region30: #{tpu_custom_call.1} parent=1 // pred_check
      _
    $region31: #{tpu_custom_call.1} parent=1 // pred_check_branch
      %77 = sbr.rel (0) target = $region33
    $region32: #{tpu_custom_call.1} parent=1 // pred_region
      _
    $region33: #{tpu_custom_call.1} parent=1 // pred_fallthru
      _
    // Predicated region
    $region34: #{tpu_custom_call.1} parent=1 // pred_check
      _
    $region35: #{tpu_custom_call.1} parent=1 // pred_check_branch
      %79 = sbr.rel (0) target = $region37
    $region36: #{tpu_custom_call.1} parent=1 // pred_region
      %s81 = ssub.s32 16, 16
      %82 = vsyncadd [#allocation7], %s81
      %s84 = sshll.u32 %s8, 4
      %s85 = int_to_ptr.vmem [resolvable:$true] %s84
      %87 = dma.vmem_to_smem %s85, 16, [#allocation13], [#allocation7]
    $region37: #{tpu_custom_call.1} parent=1 // pred_fallthru
      _
    // Predicated region
    $region38: #{tpu_custom_call.1} parent=1 // pred_check
      _
    $region39: #{tpu_custom_call.1} parent=1 // pred_check_branch
      %89 = sbr.rel (0) target = $region41
    $region40: #{tpu_custom_call.1} parent=1 // pred_region
      %90 = dma.done [#allocation5], 6144
    $region41: #{tpu_custom_call.1} parent=1 // pred_fallthru
      _
    // Predicated region
    $region42: #{tpu_custom_call.1} parent=1 // pred_check
      _
    $region43: #{tpu_custom_call.1} parent=1 // pred_check_branch
      %92 = sbr.rel (0) target = $region45
    $region44: #{tpu_custom_call.1} parent=1 // pred_region
      %93 = dma.done [#allocation9], 1536
    $region45: #{tpu_custom_call.1} parent=1 // pred_fallthru
      _
    // Predicated region
    $region46: #{tpu_custom_call.1} parent=1 // pred_check
      _
    $region47: #{tpu_custom_call.1} parent=1 // pred_check_branch
      %95 = sbr.rel (0) target = $region49
    $region48: #{tpu_custom_call.1} parent=1 // pred_region
      %96 = dma.done [#allocation9], 16384
    $region49: #{tpu_custom_call.1} parent=1 // pred_fallthru
      _
    // Predicated region
    $region50: #{tpu_custom_call.1} parent=1 // pred_check
      _
    $region51: #{tpu_custom_call.1} parent=1 // pred_check_branch
      %98 = sbr.rel (0) target = $region53
    $region52: #{tpu_custom_call.1} parent=1 // pred_region
      %99 = dma.done [#allocation12], 2048
    $region53: #{tpu_custom_call.1} parent=1 // pred_fallthru
      _
    // Predicated region
    $region54: #{tpu_custom_call.1} parent=1 // pred_check
      _
    $region55: #{tpu_custom_call.1} parent=1 // pred_check_branch
      %101 = sbr.rel (0) target = $region57
    $region56: #{tpu_custom_call.1} parent=1 // pred_region
      %102 = dma.done [#allocation7], 16
    $region57: #{tpu_custom_call.1} parent=1 // pred_fallthru
      _
    %103 = sfence
    %v105 = vld [vmem:[#allocation8] sm:$0xff]
    %v106 = vld [vmem:[#allocation8 + $0x8] sm:$0xff]
    %v107 = vld [vmem:[#allocation8 + $0x10] sm:$0xff]
    %v108 = vld [vmem:[#allocation8 + $0x18] sm:$0xff]
    %v109 = vld [vmem:[#allocation8 + $0x20] sm:$0xff]
    %v110 = vld [vmem:[#allocation8 + $0x28] sm:$0xff]
    %v111 = vld [vmem:[#allocation8 + $0x30] sm:$0xff]
    %v112 = vld [vmem:[#allocation8 + $0x38] sm:$0xff]
    %v113 = vld [vmem:[#allocation8 + $0x40] sm:$0xff]
    %v114 = vld [vmem:[#allocation8 + $0x48] sm:$0xff]
    %v115 = vld [vmem:[#allocation8 + $0x50] sm:$0xff]
    %v116 = vld [vmem:[#allocation8 + $0x58] sm:$0xff]
    %117 = vst [vmem:[#allocation2] sm:$0xff] %v105
    %118 = vst [vmem:[#allocation2 + $0x8] sm:$0xff] %v106
    %119 = vst [vmem:[#allocation2 + $0x10] sm:$0xff] %v107
    %120 = vst [vmem:[#allocation2 + $0x18] sm:$0xff] %v108
    %121 = vst [vmem:[#allocation2 + $0x20] sm:$0xff] %v109
    %122 = vst [vmem:[#allocation2 + $0x28] sm:$0xff] %v110
    %123 = vst [vmem:[#allocation2 + $0x30] sm:$0xff] %v111
    %124 = vst [vmem:[#allocation2 + $0x38] sm:$0xff] %v112
    %125 = vst [vmem:[#allocation2 + $0x40] sm:$0xff] %v113
    %126 = vst [vmem:[#allocation2 + $0x48] sm:$0xff] %v114
    %127 = vst [vmem:[#allocation2 + $0x50] sm:$0xff] %v115
    %128 = vst [vmem:[#allocation2 + $0x58] sm:$0xff] %v116
    %v129 = vld [vmem:[#allocation2] sm:$0xff]
    %v130 = vld [vmem:[#allocation2 + $0x8] sm:$0xff]
    %v131 = vld [vmem:[#allocation2 + $0x10] sm:$0xff]
    %v132 = vld [vmem:[#allocation2 + $0x18] sm:$0xff]
    %v133 = vld [vmem:[#allocation2 + $0x20] sm:$0xff]
    %v134 = vld [vmem:[#allocation2 + $0x28] sm:$0xff]
    %v135 = vld [vmem:[#allocation2 + $0x30] sm:$0xff]
    %v136 = vld [vmem:[#allocation2 + $0x38] sm:$0xff]
    %v137 = vld [vmem:[#allocation2 + $0x40] sm:$0xff]
    %v138 = vld [vmem:[#allocation2 + $0x48] sm:$0xff]
    %v139 = vld [vmem:[#allocation2 + $0x50] sm:$0xff]
    %v140 = vld [vmem:[#allocation2 + $0x58] sm:$0xff]
    %v141 = vpack.c.bf16 %v130, %v129
    %v142 = vpack.c.bf16 %v132, %v131
    %v143 = vpack.c.bf16 %v134, %v133
    %v144 = vpack.c.bf16 %v136, %v135
    %v145 = vpack.c.bf16 %v138, %v137
    %v146 = vpack.c.bf16 %v140, %v139
    %v147 = vld [vmem:[#allocation10] sm:$0xff]
    %v148 = vld [vmem:[#allocation10 + $0x8] sm:$0xff]
    %v149 = vld [vmem:[#allocation10 + $0x10] sm:$0xff]
    %v150 = vld [vmem:[#allocation10 + $0x18] sm:$0xff]
    %v151 = vld [vmem:[#allocation10 + $0x20] sm:$0xff]
    %v152 = vld [vmem:[#allocation10 + $0x28] sm:$0xff]
    %v153 = vld [vmem:[#allocation10 + $0x30] sm:$0xff]
    %v154 = vld [vmem:[#allocation10 + $0x38] sm:$0xff]
    %v155 = vld [vmem:[#allocation10 + $0x40] sm:$0xff]
    %v156 = vld [vmem:[#allocation10 + $0x48] sm:$0xff]
    %v157 = vld [vmem:[#allocation10 + $0x50] sm:$0xff]
    %v158 = vld [vmem:[#allocation10 + $0x58] sm:$0xff]
    %v159 = vld [vmem:[#allocation10 + $0x60] sm:$0xff]
    %v160 = vld [vmem:[#allocation10 + $0x68] sm:$0xff]
    %v161 = vld [vmem:[#allocation10 + $0x70] sm:$0xff]
    %v162 = vld [vmem:[#allocation10 + $0x78] sm:$0xff]
    %v163 = vld [vmem:[#allocation10 + $0x80] sm:$0xff]
    %v164 = vld [vmem:[#allocation10 + $0x88] sm:$0xff]
    %v165 = vld [vmem:[#allocation10 + $0x90] sm:$0xff]
    %v166 = vld [vmem:[#allocation10 + $0x98] sm:$0xff]
    %v167 = vld [vmem:[#allocation10 + $0xa0] sm:$0xff]
    %v168 = vld [vmem:[#allocation10 + $0xa8] sm:$0xff]
    %v169 = vld [vmem:[#allocation10 + $0xb0] sm:$0xff]
    %v170 = vld [vmem:[#allocation10 + $0xb8] sm:$0xff]
    %v171 = vld [vmem:[#allocation10 + $0xc0] sm:$0xff]
    %v172 = vld [vmem:[#allocation10 + $0xc8] sm:$0xff]
    %v173 = vld [vmem:[#allocation10 + $0xd0] sm:$0xff]
    %v174 = vld [vmem:[#allocation10 + $0xd8] sm:$0xff]
    %v175 = vld [vmem:[#allocation10 + $0xe0] sm:$0xff]
    %v176 = vld [vmem:[#allocation10 + $0xe8] sm:$0xff]
    %v177 = vld [vmem:[#allocation10 + $0xf0] sm:$0xff]
    %v178 = vld [vmem:[#allocation10 + $0xf8] sm:$0xff]
    %v211 = vunpack.c.l.b16 %v147
    %v212 = vunpack.c.h.b16 %v147
    %v213 = vunpack.c.l.b16 %v148
    %v214 = vunpack.c.h.b16 %v148
    %v215 = vunpack.c.l.b16 %v149
    %v216 = vunpack.c.h.b16 %v149
    %v217 = vunpack.c.l.b16 %v150
    %v218 = vunpack.c.h.b16 %v150
    %v219 = vunpack.c.l.b16 %v151
    %v220 = vunpack.c.h.b16 %v151
    %v221 = vunpack.c.l.b16 %v152
    %v222 = vunpack.c.h.b16 %v152
    %v223 = vunpack.c.l.b16 %v153
    %v224 = vunpack.c.h.b16 %v153
    %v225 = vunpack.c.l.b16 %v154
    %v226 = vunpack.c.h.b16 %v154
    %v227 = vunpack.c.l.b16 %v155
    %v228 = vunpack.c.h.b16 %v155
    %v229 = vunpack.c.l.b16 %v156
    %v230 = vunpack.c.h.b16 %v156
    %v231 = vunpack.c.l.b16 %v157
    %v232 = vunpack.c.h.b16 %v157
    %v233 = vunpack.c.l.b16 %v158
    %v234 = vunpack.c.h.b16 %v158
    %v235 = vunpack.c.l.b16 %v159
    %v236 = vunpack.c.h.b16 %v159
    %v237 = vunpack.c.l.b16 %v160
    %v238 = vunpack.c.h.b16 %v160
    %v239 = vunpack.c.l.b16 %v161
    %v240 = vunpack.c.h.b16 %v161
    %v241 = vunpack.c.l.b16 %v162
    %v242 = vunpack.c.h.b16 %v162
    %v243 = vunpack.c.l.b16 %v163
    %v244 = vunpack.c.h.b16 %v163
    %v245 = vunpack.c.l.b16 %v164
    %v246 = vunpack.c.h.b16 %v164
    %v247 = vunpack.c.l.b16 %v165
    %v248 = vunpack.c.h.b16 %v165
    %v249 = vunpack.c.l.b16 %v166
    %v250 = vunpack.c.h.b16 %v166
    %v251 = vunpack.c.l.b16 %v167
    %v252 = vunpack.c.h.b16 %v167
    %v253 = vunpack.c.l.b16 %v168
    %v254 = vunpack.c.h.b16 %v168
    %v255 = vunpack.c.l.b16 %v169
    %v256 = vunpack.c.h.b16 %v169
    %v257 = vunpack.c.l.b16 %v170
    %v258 = vunpack.c.h.b16 %v170
    %v259 = vunpack.c.l.b16 %v171
    %v260 = vunpack.c.h.b16 %v171
    %v261 = vunpack.c.l.b16 %v172
    %v262 = vunpack.c.h.b16 %v172
    %v263 = vunpack.c.l.b16 %v173
    %v264 = vunpack.c.h.b16 %v173
    %v265 = vunpack.c.l.b16 %v174
    %v266 = vunpack.c.h.b16 %v174
    %v267 = vunpack.c.l.b16 %v175
    %v268 = vunpack.c.h.b16 %v175
    %v269 = vunpack.c.l.b16 %v176
    %v270 = vunpack.c.h.b16 %v176
    %v271 = vunpack.c.l.b16 %v177
    %v272 = vunpack.c.h.b16 %v177
    %v273 = vunpack.c.l.b16 %v178
    %v274 = vunpack.c.h.b16 %v178
    %v275 = vpack.c.b16 %v215, %v211
    %v276 = vpack.c.b16 %v216, %v212
    %v277 = vpack.c.b16 %v217, %v213
    %v278 = vpack.c.b16 %v218, %v214
    %v279 = vpack.c.b16 %v223, %v219
    %v280 = vpack.c.b16 %v224, %v220
    %v281 = vpack.c.b16 %v225, %v221
    %v282 = vpack.c.b16 %v226, %v222
    %v283 = vpack.c.b16 %v231, %v227
    %v284 = vpack.c.b16 %v232, %v228
    %v285 = vpack.c.b16 %v233, %v229
    %v286 = vpack.c.b16 %v234, %v230
    %v287 = vpack.c.b16 %v239, %v235
    %v288 = vpack.c.b16 %v240, %v236
    %v289 = vpack.c.b16 %v241, %v237
    %v290 = vpack.c.b16 %v242, %v238
    %v291 = vpack.c.b16 %v247, %v243
    %v292 = vpack.c.b16 %v248, %v244
    %v293 = vpack.c.b16 %v249, %v245
    %v294 = vpack.c.b16 %v250, %v246
    %v295 = vpack.c.b16 %v255, %v251
    %v296 = vpack.c.b16 %v256, %v252
    %v297 = vpack.c.b16 %v257, %v253
    %v298 = vpack.c.b16 %v258, %v254
    %v299 = vpack.c.b16 %v263, %v259
    %v300 = vpack.c.b16 %v264, %v260
    %v301 = vpack.c.b16 %v265, %v261
    %v302 = vpack.c.b16 %v266, %v262
    %v303 = vpack.c.b16 %v271, %v267
    %v304 = vpack.c.b16 %v272, %v268
    %v305 = vpack.c.b16 %v273, %v269
    %v306 = vpack.c.b16 %v274, %v270
    %339 = vmatprep.subr.bf16.mxu0 %v276
    %340 = vmatpush1.bf16.msra.mxu0 %v275
    %341 = vmatprep.subr.bf16.mxu0 %v280
    %342 = vmatpush1.bf16.msra.mxu0 %v279
    %343 = vmatprep.subr.bf16.mxu0 %v284
    %344 = vmatpush1.bf16.msra.mxu0 %v283
    %345 = vmatprep.subr.bf16.mxu0 %v288
    %346 = vmatpush1.bf16.msra.mxu0 %v287
    %347 = vmatprep.subr.bf16.mxu0 %v292
    %348 = vmatpush1.bf16.msra.mxu0 %v291
    %349 = vmatprep.subr.bf16.mxu0 %v296
    %350 = vmatpush1.bf16.msra.mxu0 %v295
    %351 = vmatprep.subr.bf16.mxu0 %v300
    %352 = vmatpush1.bf16.msra.mxu0 %v299
    %353 = vmatprep.subr.bf16.mxu0 %v304
    %354 = vmatpush1.bf16.msra.mxu0 %v303
    %355 = vmatprep.subr.bf16.mxu0 0
    %356 = vmatpush1.bf16.msra.mxu0 0
    %357 = vmatprep.subr.bf16.mxu0 0
    %358 = vmatpush1.bf16.msra.mxu0 0
    %359 = vmatprep.subr.bf16.mxu0 0
    %360 = vmatpush1.bf16.msra.mxu0 0
    %361 = vmatprep.subr.bf16.mxu0 0
    %362 = vmatpush1.bf16.msra.mxu0 0
    %363 = vmatprep.subr.bf16.mxu0 0
    %364 = vmatpush1.bf16.msra.mxu0 0
    %365 = vmatprep.subr.bf16.mxu0 0
    %366 = vmatpush1.bf16.msra.mxu0 0
    %367 = vmatprep.subr.bf16.mxu0 0
    %368 = vmatpush1.bf16.msra.mxu0 0
    %369 = vmatprep.subr.bf16.mxu0 0
    %370 = vmatpush1.bf16.msra.mxu0 0
    %371 = vmatprep.mubr.bf16.mxu0 0
    %372 = vmatmul.mubr.bf16.gmra.mrb[0].mxu0 %v141
    %v373 = vpop.f32.mrb[0].mxu0
    %v374 = vadd.f32 0.0, %v373
    %v375 = vpop.f32.mrb[0].mxu0
    %v376 = vadd.f32 0.0, %v375
    %v377 = vpop.f32.mrb[0].mxu0
    %v378 = vadd.f32 0.0, %v377
    %v379 = vpop.f32.mrb[0].mxu0
    %v380 = vadd.f32 0.0, %v379
    %381 = vmatprep.mubr.bf16.mxu0 0
    %382 = vmatmul.mubr.bf16.gmra.mrb[0].mxu0 %v142
    %v383 = vpop.f32.mrb[0].mxu0
    %v384 = vadd.f32 0.0, %v383
    %v385 = vpop.f32.mrb[0].mxu0
    %v386 = vadd.f32 0.0, %v385
    %v387 = vpop.f32.mrb[0].mxu0
    %v388 = vadd.f32 0.0, %v387
    %v389 = vpop.f32.mrb[0].mxu0
    %v390 = vadd.f32 0.0, %v389
    %391 = vmatprep.mubr.bf16.mxu0 0
    %392 = vmatmul.mubr.bf16.gmra.mrb[0].mxu0 %v143
    %v393 = vpop.f32.mrb[0].mxu0
    %v394 = vadd.f32 0.0, %v393
    %v395 = vpop.f32.mrb[0].mxu0
    %v396 = vadd.f32 0.0, %v395
    %v397 = vpop.f32.mrb[0].mxu0
    %v398 = vadd.f32 0.0, %v397
    %v399 = vpop.f32.mrb[0].mxu0
    %v400 = vadd.f32 0.0, %v399
    %401 = vmatprep.mubr.bf16.mxu0 0
    %402 = vmatmul.mubr.bf16.gmra.mrb[0].mxu0 %v144
    %v403 = vpop.f32.mrb[0].mxu0
    %v404 = vadd.f32 0.0, %v403
    %v405 = vpop.f32.mrb[0].mxu0
    %v406 = vadd.f32 0.0, %v405
    %v407 = vpop.f32.mrb[0].mxu0
    %v408 = vadd.f32 0.0, %v407
    %v409 = vpop.f32.mrb[0].mxu0
    %v410 = vadd.f32 0.0, %v409
    %411 = vmatprep.mubr.bf16.mxu0 0
    %412 = vmatmul.mubr.bf16.gmra.mrb[0].mxu0 %v145
    %v413 = vpop.f32.mrb[0].mxu0
    %v414 = vadd.f32 0.0, %v413
    %v415 = vpop.f32.mrb[0].mxu0
    %v416 = vadd.f32 0.0, %v415
    %v417 = vpop.f32.mrb[0].mxu0
    %v418 = vadd.f32 0.0, %v417
    %v419 = vpop.f32.mrb[0].mxu0
    %v420 = vadd.f32 0.0, %v419
    %421 = vmatprep.mubr.bf16.mxu0 0
    %422 = vmatmul.mubr.bf16.gmra.mrb[0].mxu0 %v146
    %v423 = vpop.f32.mrb[0].mxu0
    %v424 = vadd.f32 0.0, %v423
    %v425 = vpop.f32.mrb[0].mxu0
    %v426 = vadd.f32 0.0, %v425
    %v427 = vpop.f32.mrb[0].mxu0
    %v428 = vadd.f32 0.0, %v427
    %v429 = vpop.f32.mrb[0].mxu0
    %v430 = vadd.f32 0.0, %v429
    %431 = vdwg.mxu0
    %432 = vmatprep.subr.bf16.mxu0 %v278
    %433 = vmatpush1.bf16.msra.mxu0 %v277
    %434 = vmatprep.subr.bf16.mxu0 %v282
    %435 = vmatpush1.bf16.msra.mxu0 %v281
    %436 = vmatprep.subr.bf16.mxu0 %v286
    %437 = vmatpush1.bf16.msra.mxu0 %v285
    %438 = vmatprep.subr.bf16.mxu0 %v290
    %439 = vmatpush1.bf16.msra.mxu0 %v289
    %440 = vmatprep.subr.bf16.mxu0 %v294
    %441 = vmatpush1.bf16.msra.mxu0 %v293
    %442 = vmatprep.subr.bf16.mxu0 %v298
    %443 = vmatpush1.bf16.msra.mxu0 %v297
    %444 = vmatprep.subr.bf16.mxu0 %v302
    %445 = vmatpush1.bf16.msra.mxu0 %v301
    %446 = vmatprep.subr.bf16.mxu0 %v306
    %447 = vmatpush1.bf16.msra.mxu0 %v305
    %448 = vmatprep.subr.bf16.mxu0 0
    %449 = vmatpush1.bf16.msra.mxu0 0
    %450 = vmatprep.subr.bf16.mxu0 0
    %451 = vmatpush1.bf16.msra.mxu0 0
    %452 = vmatprep.subr.bf16.mxu0 0
    %453 = vmatpush1.bf16.msra.mxu0 0
    %454 = vmatprep.subr.bf16.mxu0 0
    %455 = vmatpush1.bf16.msra.mxu0 0
    %456 = vmatprep.subr.bf16.mxu0 0
    %457 = vmatpush1.bf16.msra.mxu0 0
    %458 = vmatprep.subr.bf16.mxu0 0
    %459 = vmatpush1.bf16.msra.mxu0 0
    %460 = vmatprep.subr.bf16.mxu0 0
    %461 = vmatpush1.bf16.msra.mxu0 0
    %462 = vmatprep.subr.bf16.mxu0 0
    %463 = vmatpush1.bf16.msra.mxu0 0
    %464 = vmatprep.mubr.bf16.mxu0 0
    %465 = vmatmul.mubr.bf16.gmra.mrb[0].mxu0 %v141
    %v466 = vpop.f32.mrb[0].mxu0
    %v467 = vadd.f32 0.0, %v466
    %v468 = vpop.f32.mrb[0].mxu0
    %v469 = vadd.f32 0.0, %v468
    %v470 = vpop.f32.mrb[0].mxu0
    %v471 = vadd.f32 0.0, %v470
    %v472 = vpop.f32.mrb[0].mxu0
    %v473 = vadd.f32 0.0, %v472
    %474 = vmatprep.mubr.bf16.mxu0 0
    %475 = vmatmul.mubr.bf16.gmra.mrb[0].mxu0 %v142
    %v476 = vpop.f32.mrb[0].mxu0
    %v477 = vadd.f32 0.0, %v476
    %v478 = vpop.f32.mrb[0].mxu0
    %v479 = vadd.f32 0.0, %v478
    %v480 = vpop.f32.mrb[0].mxu0
    %v481 = vadd.f32 0.0, %v480
    %v482 = vpop.f32.mrb[0].mxu0
    %v483 = vadd.f32 0.0, %v482
    %484 = vmatprep.mubr.bf16.mxu0 0
    %485 = vmatmul.mubr.bf16.gmra.mrb[0].mxu0 %v143
    %v486 = vpop.f32.mrb[0].mxu0
    %v487 = vadd.f32 0.0, %v486
    %v488 = vpop.f32.mrb[0].mxu0
    %v489 = vadd.f32 0.0, %v488
    %v490 = vpop.f32.mrb[0].mxu0
    %v491 = vadd.f32 0.0, %v490
    %v492 = vpop.f32.mrb[0].mxu0
    %v493 = vadd.f32 0.0, %v492
    %494 = vmatprep.mubr.bf16.mxu0 0
    %495 = vmatmul.mubr.bf16.gmra.mrb[0].mxu0 %v144
    %v496 = vpop.f32.mrb[0].mxu0
    %v497 = vadd.f32 0.0, %v496
    %v498 = vpop.f32.mrb[0].mxu0
    %v499 = vadd.f32 0.0, %v498
    %v500 = vpop.f32.mrb[0].mxu0
    %v501 = vadd.f32 0.0, %v500
    %v502 = vpop.f32.mrb[0].mxu0
    %v503 = vadd.f32 0.0, %v502
    %504 = vmatprep.mubr.bf16.mxu0 0
    %505 = vmatmul.mubr.bf16.gmra.mrb[0].mxu0 %v145
    %v506 = vpop.f32.mrb[0].mxu0
    %v507 = vadd.f32 0.0, %v506
    %v508 = vpop.f32.mrb[0].mxu0
    %v509 = vadd.f32 0.0, %v508
    %v510 = vpop.f32.mrb[0].mxu0
    %v511 = vadd.f32 0.0, %v510
    %v512 = vpop.f32.mrb[0].mxu0
    %v513 = vadd.f32 0.0, %v512
    %514 = vmatprep.mubr.bf16.mxu0 0
    %515 = vmatmul.mubr.bf16.gmra.mrb[0].mxu0 %v146
    %v516 = vpop.f32.mrb[0].mxu0
    %v517 = vadd.f32 0.0, %v516
    %v518 = vpop.f32.mrb[0].mxu0
    %v519 = vadd.f32 0.0, %v518
    %v520 = vpop.f32.mrb[0].mxu0
    %v521 = vadd.f32 0.0, %v520
    %v522 = vpop.f32.mrb[0].mxu0
    %v523 = vadd.f32 0.0, %v522
    %524 = vdwg.mxu0
    %525 = vst [vmem:[#allocation3] sm:$0xff] %v374
    %526 = vst [vmem:[#allocation3 + $0x8] sm:$0xff] %v376
    %527 = vst [vmem:[#allocation3 + $0x10] sm:$0xff] %v467
    %528 = vst [vmem:[#allocation3 + $0x18] sm:$0xff] %v469
    %529 = vst [vmem:[#allocation3 + $0x20] sm:$0xff] %v378
    %530 = vst [vmem:[#allocation3 + $0x28] sm:$0xff] %v380
    %531 = vst [vmem:[#allocation3 + $0x30] sm:$0xff] %v471
    %532 = vst [vmem:[#allocation3 + $0x38] sm:$0xff] %v473
    %533 = vst [vmem:[#allocation3 + $0x40] sm:$0xff] %v384
    %534 = vst [vmem:[#allocation3 + $0x48] sm:$0xff] %v386
    %535 = vst [vmem:[#allocation3 + $0x50] sm:$0xff] %v477
    %536 = vst [vmem:[#allocation3 + $0x58] sm:$0xff] %v479
    %537 = vst [vmem:[#allocation3 + $0x60] sm:$0xff] %v388
    %538 = vst [vmem:[#allocation3 + $0x68] sm:$0xff] %v390
    %539 = vst [vmem:[#allocation3 + $0x70] sm:$0xff] %v481
    %540 = vst [vmem:[#allocation3 + $0x78] sm:$0xff] %v483
    %541 = vst [vmem:[#allocation3 + $0x80] sm:$0xff] %v394
    %542 = vst [vmem:[#allocation3 + $0x88] sm:$0xff] %v396
    %543 = vst [vmem:[#allocation3 + $0x90] sm:$0xff] %v487
    %544 = vst [vmem:[#allocation3 + $0x98] sm:$0xff] %v489
    %545 = vst [vmem:[#allocation3 + $0xa0] sm:$0xff] %v398
    %546 = vst [vmem:[#allocation3 + $0xa8] sm:$0xff] %v400
    %547 = vst [vmem:[#allocation3 + $0xb0] sm:$0xff] %v491
    %548 = vst [vmem:[#allocation3 + $0xb8] sm:$0xff] %v493
    %549 = vst [vmem:[#allocation3 + $0xc0] sm:$0xff] %v404
    %550 = vst [vmem:[#allocation3 + $0xc8] sm:$0xff] %v406
    %551 = vst [vmem:[#allocation3 + $0xd0] sm:$0xff] %v497
    %552 = vst [vmem:[#allocation3 + $0xd8] sm:$0xff] %v499
    %553 = vst [vmem:[#allocation3 + $0xe0] sm:$0xff] %v408
    %554 = vst [vmem:[#allocation3 + $0xe8] sm:$0xff] %v410
    %555 = vst [vmem:[#allocation3 + $0xf0] sm:$0xff] %v501
    %556 = vst [vmem:[#allocation3 + $0xf8] sm:$0xff] %v503
    %557 = vst [vmem:[#allocation3 + $0x100] sm:$0xff] %v414
    %558 = vst [vmem:[#allocation3 + $0x108] sm:$0xff] %v416
    %559 = vst [vmem:[#allocation3 + $0x110] sm:$0xff] %v507
    %560 = vst [vmem:[#allocation3 + $0x118] sm:$0xff] %v509
    %561 = vst [vmem:[#allocation3 + $0x120] sm:$0xff] %v418
    %562 = vst [vmem:[#allocation3 + $0x128] sm:$0xff] %v420
    %563 = vst [vmem:[#allocation3 + $0x130] sm:$0xff] %v511
    %564 = vst [vmem:[#allocation3 + $0x138] sm:$0xff] %v513
    %565 = vst [vmem:[#allocation3 + $0x140] sm:$0xff] %v424
    %566 = vst [vmem:[#allocation3 + $0x148] sm:$0xff] %v426
    %567 = vst [vmem:[#allocation3 + $0x150] sm:$0xff] %v517
    %568 = vst [vmem:[#allocation3 + $0x158] sm:$0xff] %v519
    %569 = vst [vmem:[#allocation3 + $0x160] sm:$0xff] %v428
    %570 = vst [vmem:[#allocation3 + $0x168] sm:$0xff] %v430
    %571 = vst [vmem:[#allocation3 + $0x170] sm:$0xff] %v521
    %572 = vst [vmem:[#allocation3 + $0x178] sm:$0xff] %v523
    %v573 = vld [vmem:[#allocation4] sm:$0xff]
    %v574 = vld [vmem:[#allocation4 + $0x8] sm:$0xff]
    %v575 = vld [vmem:[#allocation4 + $0x10] sm:$0xff]
    %v576 = vld [vmem:[#allocation4 + $0x18] sm:$0xff]
    %v577 = vld [vmem:[#allocation4 + $0x20] sm:$0xff]
    %v578 = vld [vmem:[#allocation4 + $0x28] sm:$0xff]
    %v579 = vld [vmem:[#allocation4 + $0x30] sm:$0xff]
    %v580 = vld [vmem:[#allocation4 + $0x38] sm:$0xff]
    %v581 = vld [vmem:[#allocation4 + $0x40] sm:$0xff]
    %v582 = vld [vmem:[#allocation4 + $0x48] sm:$0xff]
    %v583 = vld [vmem:[#allocation4 + $0x50] sm:$0xff]
    %v584 = vld [vmem:[#allocation4 + $0x58] sm:$0xff]
    %v585 = vld [vmem:[#allocation3] sm:$0xff]
    %v586 = vld [vmem:[#allocation3 + $0x20] sm:$0xff]
    %v587 = vld [vmem:[#allocation3 + $0x40] sm:$0xff]
    %v588 = vld [vmem:[#allocation3 + $0x60] sm:$0xff]
    %v589 = vld [vmem:[#allocation3 + $0x80] sm:$0xff]
    %v590 = vld [vmem:[#allocation3 + $0xa0] sm:$0xff]
    %v591 = vld [vmem:[#allocation3 + $0xc0] sm:$0xff]
    %v592 = vld [vmem:[#allocation3 + $0xe0] sm:$0xff]
    %v593 = vld [vmem:[#allocation3 + $0x100] sm:$0xff]
    %v594 = vld [vmem:[#allocation3 + $0x120] sm:$0xff]
    %v595 = vld [vmem:[#allocation3 + $0x140] sm:$0xff]
    %v596 = vld [vmem:[#allocation3 + $0x160] sm:$0xff]
    %s597 = scalar_lea.vmem [#allocation4], 96
    %v598 = vld [vmem:[%s597] sm:$0xff]
    %v599 = vld [vmem:[%s597 + $0x8] sm:$0xff]
    %v600 = vld [vmem:[%s597 + $0x10] sm:$0xff]
    %v601 = vld [vmem:[%s597 + $0x18] sm:$0xff]
    %v602 = vld [vmem:[%s597 + $0x20] sm:$0xff]
    %v603 = vld [vmem:[%s597 + $0x28] sm:$0xff]
    %v604 = vld [vmem:[%s597 + $0x30] sm:$0xff]
    %v605 = vld [vmem:[%s597 + $0x38] sm:$0xff]
    %v606 = vld [vmem:[%s597 + $0x40] sm:$0xff]
    %v607 = vld [vmem:[%s597 + $0x48] sm:$0xff]
    %v608 = vld [vmem:[%s597 + $0x50] sm:$0xff]
    %v609 = vld [vmem:[%s597 + $0x58] sm:$0xff]
    %v610 = vld [vmem:[#allocation3 + $0x8] sm:$0xff]
    %v611 = vld [vmem:[#allocation3 + $0x28] sm:$0xff]
    %v612 = vld [vmem:[#allocation3 + $0x48] sm:$0xff]
    %v613 = vld [vmem:[#allocation3 + $0x68] sm:$0xff]
    %v614 = vld [vmem:[#allocation3 + $0x88] sm:$0xff]
    %v615 = vld [vmem:[#allocation3 + $0xa8] sm:$0xff]
    %v616 = vld [vmem:[#allocation3 + $0xc8] sm:$0xff]
    %v617 = vld [vmem:[#allocation3 + $0xe8] sm:$0xff]
    %v618 = vld [vmem:[#allocation3 + $0x108] sm:$0xff]
    %v619 = vld [vmem:[#allocation3 + $0x128] sm:$0xff]
    %v620 = vld [vmem:[#allocation3 + $0x148] sm:$0xff]
    %v621 = vld [vmem:[#allocation3 + $0x168] sm:$0xff]
    %vm622 = vcmask 785408
    %v624 = vsel %vm622, %v598, 0
    %v627 = vsel %vm622, %v599, 0
    %v630 = vsel %vm622, %v600, 0
    %v633 = vsel %vm622, %v601, 0
    %v636 = vsel %vm622, %v602, 0
    %v639 = vsel %vm622, %v603, 0
    %v642 = vsel %vm622, %v604, 0
    %v645 = vsel %vm622, %v605, 0
    %v648 = vsel %vm622, %v606, 0
    %v651 = vsel %vm622, %v607, 0
    %v654 = vsel %vm622, %v608, 0
    %v657 = vsel %vm622, %v609, 0
    %659 = vmatprep.subr.mxu0 0.0
    %660 = vmatpush1.msra.mxu0 %v610
    %661 = vmatprep.subr.mxu0 0.0
    %662 = vmatpush1.msra.mxu0 %v611
    %663 = vmatprep.subr.mxu0 0.0
    %664 = vmatpush1.msra.mxu0 %v612
    %665 = vmatprep.subr.mxu0 0.0
    %666 = vmatpush1.msra.mxu0 %v613
    %667 = vmatprep.subr.mxu0 0.0
    %668 = vmatpush1.msra.mxu0 %v614
    %669 = vmatprep.subr.mxu0 0.0
    %670 = vmatpush1.msra.mxu0 %v615
    %671 = vmatprep.subr.mxu0 0.0
    %672 = vmatpush1.msra.mxu0 %v616
    %673 = vmatprep.subr.mxu0 0.0
    %674 = vmatpush1.msra.mxu0 %v617
    %675 = vmatprep.subr.mxu0 0.0
    %676 = vmatpush1.msra.mxu0 %v618
    %677 = vmatprep.subr.mxu0 0.0
    %678 = vmatpush1.msra.mxu0 %v619
    %679 = vmatprep.subr.mxu0 0.0
    %680 = vmatpush1.msra.mxu0 %v620
    %681 = vmatprep.subr.mxu0 0.0
    %682 = vmatpush1.msra.mxu0 %v621
    %683 = vmatprep.subr.mxu0 0.0
    %684 = vmatpush1.msra.mxu0 0.0
    %685 = vmatprep.subr.mxu0 0.0
    %686 = vmatpush1.msra.mxu0 0.0
    %687 = vmatprep.subr.mxu0 0.0
    %688 = vmatpush1.msra.mxu0 0.0
    %689 = vmatprep.subr.mxu0 0.0
    %690 = vmatpush1.msra.mxu0 0.0
    %691 = vmatprep.subr.mxu0 0.0
    %692 = vmatpush1.msra.mxu0 0.0
    %693 = vmatprep.subr.mxu0 0.0
    %694 = vmatpush1.msra.mxu0 0.0
    %695 = vmatprep.subr.mxu0 0.0
    %696 = vmatpush1.msra.mxu0 0.0
    %697 = vmatprep.subr.mxu0 0.0
    %698 = vmatpush1.msra.mxu0 0.0
    %699 = vmatprep.subr.mxu0 0.0
    %700 = vmatpush1.msra.mxu0 0.0
    %701 = vmatprep.subr.mxu0 0.0
    %702 = vmatpush1.msra.mxu0 0.0
    %703 = vmatprep.subr.mxu0 0.0
    %704 = vmatpush1.msra.mxu0 0.0
    %705 = vmatprep.subr.mxu0 0.0
    %706 = vmatpush1.msra.mxu0 0.0
    %707 = vmatprep.subr.mxu0 0.0
    %708 = vmatpush1.msra.mxu0 0.0
    %709 = vmatprep.subr.mxu0 0.0
    %710 = vmatpush1.msra.mxu0 0.0
    %711 = vmatprep.subr.mxu0 0.0
    %712 = vmatpush1.msra.mxu0 0.0
    %713 = vmatprep.subr.mxu0 0.0
    %714 = vmatpush1.msra.mxu0 0.0
    %715 = vmatprep.subr.mxu0 0.0
    %716 = vmatpush1.msra.mxu0 0.0
    %717 = vmatprep.subr.mxu0 0.0
    %718 = vmatpush1.msra.mxu0 0.0
    %719 = vmatprep.subr.mxu0 0.0
    %720 = vmatpush1.msra.mxu0 0.0
    %721 = vmatprep.subr.mxu0 0.0
    %722 = vmatpush1.msra.mxu0 0.0
    %723 = vmatprep.mubr.f32.mxu0 0.0
    %724 = vmatmul.mubr.f32.gmra.mrb[0].mxu0 %v624
    %v725 = vpop.f32.mrb[0].mxu0
    %v726 = vadd.f32 0.0, %v725
    %v727 = vpop.f32.mrb[0].mxu0
    %728 = vmatprep.mubr.f32.mxu0 0.0
    %729 = vmatmul.mubr.f32.gmra.mrb[0].mxu0 %v627
    %v730 = vpop.f32.mrb[0].mxu0
    %v731 = vadd.f32 0.0, %v730
    %v732 = vpop.f32.mrb[0].mxu0
    %733 = vmatprep.mubr.f32.mxu0 0.0
    %734 = vmatmul.mubr.f32.gmra.mrb[0].mxu0 %v630
    %v735 = vpop.f32.mrb[0].mxu0
    %v736 = vadd.f32 0.0, %v735
    %v737 = vpop.f32.mrb[0].mxu0
    %738 = vmatprep.mubr.f32.mxu0 0.0
    %739 = vmatmul.mubr.f32.gmra.mrb[0].mxu0 %v633
    %v740 = vpop.f32.mrb[0].mxu0
    %v741 = vadd.f32 0.0, %v740
    %v742 = vpop.f32.mrb[0].mxu0
    %743 = vmatprep.mubr.f32.mxu0 0.0
    %744 = vmatmul.mubr.f32.gmra.mrb[0].mxu0 %v636
    %v745 = vpop.f32.mrb[0].mxu0
    %v746 = vadd.f32 0.0, %v745
    %v747 = vpop.f32.mrb[0].mxu0
    %748 = vmatprep.mubr.f32.mxu0 0.0
    %749 = vmatmul.mubr.f32.gmra.mrb[0].mxu0 %v639
    %v750 = vpop.f32.mrb[0].mxu0
    %v751 = vadd.f32 0.0, %v750
    %v752 = vpop.f32.mrb[0].mxu0
    %753 = vmatprep.mubr.f32.mxu0 0.0
    %754 = vmatmul.mubr.f32.gmra.mrb[0].mxu0 %v642
    %v755 = vpop.f32.mrb[0].mxu0
    %v756 = vadd.f32 0.0, %v755
    %v757 = vpop.f32.mrb[0].mxu0
    %758 = vmatprep.mubr.f32.mxu0 0.0
    %759 = vmatmul.mubr.f32.gmra.mrb[0].mxu0 %v645
    %v760 = vpop.f32.mrb[0].mxu0
    %v761 = vadd.f32 0.0, %v760
    %v762 = vpop.f32.mrb[0].mxu0
    %763 = vmatprep.mubr.f32.mxu0 0.0
    %764 = vmatmul.mubr.f32.gmra.mrb[0].mxu0 %v648
    %v765 = vpop.f32.mrb[0].mxu0
    %v766 = vadd.f32 0.0, %v765
    %v767 = vpop.f32.mrb[0].mxu0
    %768 = vmatprep.mubr.f32.mxu0 0.0
    %769 = vmatmul.mubr.f32.gmra.mrb[0].mxu0 %v651
    %v770 = vpop.f32.mrb[0].mxu0
    %v771 = vadd.f32 0.0, %v770
    %v772 = vpop.f32.mrb[0].mxu0
    %773 = vmatprep.mubr.f32.mxu0 0.0
    %774 = vmatmul.mubr.f32.gmra.mrb[0].mxu0 %v654
    %v775 = vpop.f32.mrb[0].mxu0
    %v776 = vadd.f32 0.0, %v775
    %v777 = vpop.f32.mrb[0].mxu0
    %778 = vmatprep.mubr.f32.mxu0 0.0
    %779 = vmatmul.mubr.f32.gmra.mrb[0].mxu0 %v657
    %v780 = vpop.f32.mrb[0].mxu0
    %v781 = vadd.f32 0.0, %v780
    %v782 = vpop.f32.mrb[0].mxu0
    %783 = vdwg.mxu0
    %v785 = vsel %vm622, %v573, 0
    %v788 = vsel %vm622, %v574, 0
    %v791 = vsel %vm622, %v575, 0
    %v794 = vsel %vm622, %v576, 0
    %v797 = vsel %vm622, %v577, 0
    %v800 = vsel %vm622, %v578, 0
    %v803 = vsel %vm622, %v579, 0
    %v806 = vsel %vm622, %v580, 0
    %v809 = vsel %vm622, %v581, 0
    %v812 = vsel %vm622, %v582, 0
    %v815 = vsel %vm622, %v583, 0
    %v818 = vsel %vm622, %v584, 0
    %820 = vmatprep.subr.mxu0 0.0
    %821 = vmatpush1.msra.mxu0 %v585
    %822 = vmatprep.subr.mxu0 0.0
    %823 = vmatpush1.msra.mxu0 %v586
    %824 = vmatprep.subr.mxu0 0.0
    %825 = vmatpush1.msra.mxu0 %v587
    %826 = vmatprep.subr.mxu0 0.0
    %827 = vmatpush1.msra.mxu0 %v588
    %828 = vmatprep.subr.mxu0 0.0
    %829 = vmatpush1.msra.mxu0 %v589
    %830 = vmatprep.subr.mxu0 0.0
    %831 = vmatpush1.msra.mxu0 %v590
    %832 = vmatprep.subr.mxu0 0.0
    %833 = vmatpush1.msra.mxu0 %v591
    %834 = vmatprep.subr.mxu0 0.0
    %835 = vmatpush1.msra.mxu0 %v592
    %836 = vmatprep.subr.mxu0 0.0
    %837 = vmatpush1.msra.mxu0 %v593
    %838 = vmatprep.subr.mxu0 0.0
    %839 = vmatpush1.msra.mxu0 %v594
    %840 = vmatprep.subr.mxu0 0.0
    %841 = vmatpush1.msra.mxu0 %v595
    %842 = vmatprep.subr.mxu0 0.0
    %843 = vmatpush1.msra.mxu0 %v596
    %844 = vmatprep.subr.mxu0 0.0
    %845 = vmatpush1.msra.mxu0 0.0
    %846 = vmatprep.subr.mxu0 0.0
    %847 = vmatpush1.msra.mxu0 0.0
    %848 = vmatprep.subr.mxu0 0.0
    %849 = vmatpush1.msra.mxu0 0.0
    %850 = vmatprep.subr.mxu0 0.0
    %851 = vmatpush1.msra.mxu0 0.0
    %852 = vmatprep.subr.mxu0 0.0
    %853 = vmatpush1.msra.mxu0 0.0
    %854 = vmatprep.subr.mxu0 0.0
    %855 = vmatpush1.msra.mxu0 0.0
    %856 = vmatprep.subr.mxu0 0.0
    %857 = vmatpush1.msra.mxu0 0.0
    %858 = vmatprep.subr.mxu0 0.0
    %859 = vmatpush1.msra.mxu0 0.0
    %860 = vmatprep.subr.mxu0 0.0
    %861 = vmatpush1.msra.mxu0 0.0
    %862 = vmatprep.subr.mxu0 0.0
    %863 = vmatpush1.msra.mxu0 0.0
    %864 = vmatprep.subr.mxu0 0.0
    %865 = vmatpush1.msra.mxu0 0.0
    %866 = vmatprep.subr.mxu0 0.0
    %867 = vmatpush1.msra.mxu0 0.0
    %868 = vmatprep.subr.mxu0 0.0
    %869 = vmatpush1.msra.mxu0 0.0
    %870 = vmatprep.subr.mxu0 0.0
    %871 = vmatpush1.msra.mxu0 0.0
    %872 = vmatprep.subr.mxu0 0.0
    %873 = vmatpush1.msra.mxu0 0.0
    %874 = vmatprep.subr.mxu0 0.0
    %875 = vmatpush1.msra.mxu0 0.0
    %876 = vmatprep.subr.mxu0 0.0
    %877 = vmatpush1.msra.mxu0 0.0
    %878 = vmatprep.subr.mxu0 0.0
    %879 = vmatpush1.msra.mxu0 0.0
    %880 = vmatprep.subr.mxu0 0.0
    %881 = vmatpush1.msra.mxu0 0.0
    %882 = vmatprep.subr.mxu0 0.0
    %883 = vmatpush1.msra.mxu0 0.0
    %884 = vmatprep.mubr.f32.mxu0 0.0
    %885 = vmatmul.mubr.f32.gmra.mrb[0].mxu0 %v785
    %v886 = vpop.f32.mrb[0].mxu0
    %v887 = vadd.f32 %v726, %v886
    %v888 = vpop.f32.mrb[0].mxu0
    %889 = vmatprep.mubr.f32.mxu0 0.0
    %890 = vmatmul.mubr.f32.gmra.mrb[0].mxu0 %v788
    %v891 = vpop.f32.mrb[0].mxu0
    %v892 = vadd.f32 %v731, %v891
    %v893 = vpop.f32.mrb[0].mxu0
    %894 = vmatprep.mubr.f32.mxu0 0.0
    %895 = vmatmul.mubr.f32.gmra.mrb[0].mxu0 %v791
    %v896 = vpop.f32.mrb[0].mxu0
    %v897 = vadd.f32 %v736, %v896
    %v898 = vpop.f32.mrb[0].mxu0
    %899 = vmatprep.mubr.f32.mxu0 0.0
    %900 = vmatmul.mubr.f32.gmra.mrb[0].mxu0 %v794
    %v901 = vpop.f32.mrb[0].mxu0
    %v902 = vadd.f32 %v741, %v901
    %v903 = vpop.f32.mrb[0].mxu0
    %904 = vmatprep.mubr.f32.mxu0 0.0
    %905 = vmatmul.mubr.f32.gmra.mrb[0].mxu0 %v797
    %v906 = vpop.f32.mrb[0].mxu0
    %v907 = vadd.f32 %v746, %v906
    %v908 = vpop.f32.mrb[0].mxu0
    %909 = vmatprep.mubr.f32.mxu0 0.0
    %910 = vmatmul.mubr.f32.gmra.mrb[0].mxu0 %v800
    %v911 = vpop.f32.mrb[0].mxu0
    %v912 = vadd.f32 %v751, %v911
    %v913 = vpop.f32.mrb[0].mxu0
    %914 = vmatprep.mubr.f32.mxu0 0.0
    %915 = vmatmul.mubr.f32.gmra.mrb[0].mxu0 %v803
    %v916 = vpop.f32.mrb[0].mxu0
    %v917 = vadd.f32 %v756, %v916
    %v918 = vpop.f32.mrb[0].mxu0
    %919 = vmatprep.mubr.f32.mxu0 0.0
    %920 = vmatmul.mubr.f32.gmra.mrb[0].mxu0 %v806
    %v921 = vpop.f32.mrb[0].mxu0
    %v922 = vadd.f32 %v761, %v921
    %v923 = vpop.f32.mrb[0].mxu0
    %924 = vmatprep.mubr.f32.mxu0 0.0
    %925 = vmatmul.mubr.f32.gmra.mrb[0].mxu0 %v809
    %v926 = vpop.f32.mrb[0].mxu0
    %v927 = vadd.f32 %v766, %v926
    %v928 = vpop.f32.mrb[0].mxu0
    %929 = vmatprep.mubr.f32.mxu0 0.0
    %930 = vmatmul.mubr.f32.gmra.mrb[0].mxu0 %v812
    %v931 = vpop.f32.mrb[0].mxu0
    %v932 = vadd.f32 %v771, %v931
    %v933 = vpop.f32.mrb[0].mxu0
    %934 = vmatprep.mubr.f32.mxu0 0.0
    %935 = vmatmul.mubr.f32.gmra.mrb[0].mxu0 %v815
    %v936 = vpop.f32.mrb[0].mxu0
    %v937 = vadd.f32 %v776, %v936
    %v938 = vpop.f32.mrb[0].mxu0
    %939 = vmatprep.mubr.f32.mxu0 0.0
    %940 = vmatmul.mubr.f32.gmra.mrb[0].mxu0 %v818
    %v941 = vpop.f32.mrb[0].mxu0
    %v942 = vadd.f32 %v781, %v941
    %v943 = vpop.f32.mrb[0].mxu0
    %944 = vdwg.mxu0
    %s945 = scalar_lea.vmem [#allocation4], 192
    %v946 = vld [vmem:[%s945] sm:$0xff]
    %v947 = vld [vmem:[%s945 + $0x8] sm:$0xff]
    %v948 = vld [vmem:[%s945 + $0x10] sm:$0xff]
    %v949 = vld [vmem:[%s945 + $0x18] sm:$0xff]
    %v950 = vld [vmem:[%s945 + $0x20] sm:$0xff]
    %v951 = vld [vmem:[%s945 + $0x28] sm:$0xff]
    %v952 = vld [vmem:[%s945 + $0x30] sm:$0xff]
    %v953 = vld [vmem:[%s945 + $0x38] sm:$0xff]
    %v954 = vld [vmem:[%s945 + $0x40] sm:$0xff]
    %v955 = vld [vmem:[%s945 + $0x48] sm:$0xff]
    %v956 = vld [vmem:[%s945 + $0x50] sm:$0xff]
    %v957 = vld [vmem:[%s945 + $0x58] sm:$0xff]
    %v958 = vld [vmem:[#allocation3 + $0x10] sm:$0xff]
    %v959 = vld [vmem:[#allocation3 + $0x30] sm:$0xff]
    %v960 = vld [vmem:[#allocation3 + $0x50] sm:$0xff]
    %v961 = vld [vmem:[#allocation3 + $0x70] sm:$0xff]
    %v962 = vld [vmem:[#allocation3 + $0x90] sm:$0xff]
    %v963 = vld [vmem:[#allocation3 + $0xb0] sm:$0xff]
    %v964 = vld [vmem:[#allocation3 + $0xd0] sm:$0xff]
    %v965 = vld [vmem:[#allocation3 + $0xf0] sm:$0xff]
    %v966 = vld [vmem:[#allocation3 + $0x110] sm:$0xff]
    %v967 = vld [vmem:[#allocation3 + $0x130] sm:$0xff]
    %v968 = vld [vmem:[#allocation3 + $0x150] sm:$0xff]
    %v969 = vld [vmem:[#allocation3 + $0x170] sm:$0xff]
    %v971 = vsel %vm622, %v946, 0
    %v974 = vsel %vm622, %v947, 0
    %v977 = vsel %vm622, %v948, 0
    %v980 = vsel %vm622, %v949, 0
    %v983 = vsel %vm622, %v950, 0
    %v986 = vsel %vm622, %v951, 0
    %v989 = vsel %vm622, %v952, 0
    %v992 = vsel %vm622, %v953, 0
    %v995 = vsel %vm622, %v954, 0
    %v998 = vsel %vm622, %v955, 0
    %v1001 = vsel %vm622, %v956, 0
    %v1004 = vsel %vm622, %v957, 0
    %1006 = vmatprep.subr.mxu0 0.0
    %1007 = vmatpush1.msra.mxu0 %v958
    %1008 = vmatprep.subr.mxu0 0.0
    %1009 = vmatpush1.msra.mxu0 %v959
    %1010 = vmatprep.subr.mxu0 0.0
    %1011 = vmatpush1.msra.mxu0 %v960
    %1012 = vmatprep.subr.mxu0 0.0
    %1013 = vmatpush1.msra.mxu0 %v961
    %1014 = vmatprep.subr.mxu0 0.0
    %1015 = vmatpush1.msra.mxu0 %v962
    %1016 = vmatprep.subr.mxu0 0.0
    %1017 = vmatpush1.msra.mxu0 %v963
    %1018 = vmatprep.subr.mxu0 0.0
    %1019 = vmatpush1.msra.mxu0 %v964
    %1020 = vmatprep.subr.mxu0 0.0
    %1021 = vmatpush1.msra.mxu0 %v965
    %1022 = vmatprep.subr.mxu0 0.0
    %1023 = vmatpush1.msra.mxu0 %v966
    %1024 = vmatprep.subr.mxu0 0.0
    %1025 = vmatpush1.msra.mxu0 %v967
    %1026 = vmatprep.subr.mxu0 0.0
    %1027 = vmatpush1.msra.mxu0 %v968
    %1028 = vmatprep.subr.mxu0 0.0
    %1029 = vmatpush1.msra.mxu0 %v969
    %1030 = vmatprep.subr.mxu0 0.0
    %1031 = vmatpush1.msra.mxu0 0.0
    %1032 = vmatprep.subr.mxu0 0.0
    %1033 = vmatpush1.msra.mxu0 0.0
    %1034 = vmatprep.subr.mxu0 0.0
    %1035 = vmatpush1.msra.mxu0 0.0
    %1036 = vmatprep.subr.mxu0 0.0
    %1037 = vmatpush1.msra.mxu0 0.0
    %1038 = vmatprep.subr.mxu0 0.0
    %1039 = vmatpush1.msra.mxu0 0.0
    %1040 = vmatprep.subr.mxu0 0.0
    %1041 = vmatpush1.msra.mxu0 0.0
    %1042 = vmatprep.subr.mxu0 0.0
    %1043 = vmatpush1.msra.mxu0 0.0
    %1044 = vmatprep.subr.mxu0 0.0
    %1045 = vmatpush1.msra.mxu0 0.0
    %1046 = vmatprep.subr.mxu0 0.0
    %1047 = vmatpush1.msra.mxu0 0.0
    %1048 = vmatprep.subr.mxu0 0.0
    %1049 = vmatpush1.msra.mxu0 0.0
    %1050 = vmatprep.subr.mxu0 0.0
    %1051 = vmatpush1.msra.mxu0 0.0
    %1052 = vmatprep.subr.mxu0 0.0
    %1053 = vmatpush1.msra.mxu0 0.0
    %1054 = vmatprep.subr.mxu0 0.0
    %1055 = vmatpush1.msra.mxu0 0.0
    %1056 = vmatprep.subr.mxu0 0.0
    %1057 = vmatpush1.msra.mxu0 0.0
    %1058 = vmatprep.subr.mxu0 0.0
    %1059 = vmatpush1.msra.mxu0 0.0
    %1060 = vmatprep.subr.mxu0 0.0
    %1061 = vmatpush1.msra.mxu0 0.0
    %1062 = vmatprep.subr.mxu0 0.0
    %1063 = vmatpush1.msra.mxu0 0.0
    %1064 = vmatprep.subr.mxu0 0.0
    %1065 = vmatpush1.msra.mxu0 0.0
    %1066 = vmatprep.subr.mxu0 0.0
    %1067 = vmatpush1.msra.mxu0 0.0
    %1068 = vmatprep.subr.mxu0 0.0
    %1069 = vmatpush1.msra.mxu0 0.0
    %1070 = vmatprep.mubr.f32.mxu0 0.0
    %1071 = vmatmul.mubr.f32.gmra.mrb[0].mxu0 %v971
    %v1072 = vpop.f32.mrb[0].mxu0
    %v1073 = vadd.f32 0.0, %v1072
    %v1074 = vpop.f32.mrb[0].mxu0
    %1075 = vmatprep.mubr.f32.mxu0 0.0
    %1076 = vmatmul.mubr.f32.gmra.mrb[0].mxu0 %v974
    %v1077 = vpop.f32.mrb[0].mxu0
    %v1078 = vadd.f32 0.0, %v1077
    %v1079 = vpop.f32.mrb[0].mxu0
    %1080 = vmatprep.mubr.f32.mxu0 0.0
    %1081 = vmatmul.mubr.f32.gmra.mrb[0].mxu0 %v977
    %v1082 = vpop.f32.mrb[0].mxu0
    %v1083 = vadd.f32 0.0, %v1082
    %v1084 = vpop.f32.mrb[0].mxu0
    %1085 = vmatprep.mubr.f32.mxu0 0.0
    %1086 = vmatmul.mubr.f32.gmra.mrb[0].mxu0 %v980
    %v1087 = vpop.f32.mrb[0].mxu0
    %v1088 = vadd.f32 0.0, %v1087
    %v1089 = vpop.f32.mrb[0].mxu0
    %1090 = vmatprep.mubr.f32.mxu0 0.0
    %1091 = vmatmul.mubr.f32.gmra.mrb[0].mxu0 %v983
    %v1092 = vpop.f32.mrb[0].mxu0
    %v1093 = vadd.f32 0.0, %v1092
    %v1094 = vpop.f32.mrb[0].mxu0
    %1095 = vmatprep.mubr.f32.mxu0 0.0
    %1096 = vmatmul.mubr.f32.gmra.mrb[0].mxu0 %v986
    %v1097 = vpop.f32.mrb[0].mxu0
    %v1098 = vadd.f32 0.0, %v1097
    %v1099 = vpop.f32.mrb[0].mxu0
    %1100 = vmatprep.mubr.f32.mxu0 0.0
    %1101 = vmatmul.mubr.f32.gmra.mrb[0].mxu0 %v989
    %v1102 = vpop.f32.mrb[0].mxu0
    %v1103 = vadd.f32 0.0, %v1102
    %v1104 = vpop.f32.mrb[0].mxu0
    %1105 = vmatprep.mubr.f32.mxu0 0.0
    %1106 = vmatmul.mubr.f32.gmra.mrb[0].mxu0 %v992
    %v1107 = vpop.f32.mrb[0].mxu0
    %v1108 = vadd.f32 0.0, %v1107
    %v1109 = vpop.f32.mrb[0].mxu0
    %1110 = vmatprep.mubr.f32.mxu0 0.0
    %1111 = vmatmul.mubr.f32.gmra.mrb[0].mxu0 %v995
    %v1112 = vpop.f32.mrb[0].mxu0
    %v1113 = vadd.f32 0.0, %v1112
    %v1114 = vpop.f32.mrb[0].mxu0
    %1115 = vmatprep.mubr.f32.mxu0 0.0
    %1116 = vmatmul.mubr.f32.gmra.mrb[0].mxu0 %v998
    %v1117 = vpop.f32.mrb[0].mxu0
    %v1118 = vadd.f32 0.0, %v1117
    %v1119 = vpop.f32.mrb[0].mxu0
    %1120 = vmatprep.mubr.f32.mxu0 0.0
    %1121 = vmatmul.mubr.f32.gmra.mrb[0].mxu0 %v1001
    %v1122 = vpop.f32.mrb[0].mxu0
    %v1123 = vadd.f32 0.0, %v1122
    %v1124 = vpop.f32.mrb[0].mxu0
    %1125 = vmatprep.mubr.f32.mxu0 0.0
    %1126 = vmatmul.mubr.f32.gmra.mrb[0].mxu0 %v1004
    %v1127 = vpop.f32.mrb[0].mxu0
    %v1128 = vadd.f32 0.0, %v1127
    %v1129 = vpop.f32.mrb[0].mxu0
    %1130 = vdwg.mxu0
    %v1131 = vadd.f32 %v887, %v1073
    %v1132 = vadd.f32 %v892, %v1078
    %v1133 = vadd.f32 %v897, %v1083
    %v1134 = vadd.f32 %v902, %v1088
    %v1135 = vadd.f32 %v907, %v1093
    %v1136 = vadd.f32 %v912, %v1098
    %v1137 = vadd.f32 %v917, %v1103
    %v1138 = vadd.f32 %v922, %v1108
    %v1139 = vadd.f32 %v927, %v1113
    %v1140 = vadd.f32 %v932, %v1118
    %v1141 = vadd.f32 %v937, %v1123
    %v1142 = vadd.f32 %v942, %v1128
    %s1143 = scalar_lea.vmem [#allocation4], 288
    %v1144 = vld [vmem:[%s1143] sm:$0xff]
    %v1145 = vld [vmem:[%s1143 + $0x8] sm:$0xff]
    %v1146 = vld [vmem:[%s1143 + $0x10] sm:$0xff]
    %v1147 = vld [vmem:[%s1143 + $0x18] sm:$0xff]
    %v1148 = vld [vmem:[%s1143 + $0x20] sm:$0xff]
    %v1149 = vld [vmem:[%s1143 + $0x28] sm:$0xff]
    %v1150 = vld [vmem:[%s1143 + $0x30] sm:$0xff]
    %v1151 = vld [vmem:[%s1143 + $0x38] sm:$0xff]
    %v1152 = vld [vmem:[%s1143 + $0x40] sm:$0xff]
    %v1153 = vld [vmem:[%s1143 + $0x48] sm:$0xff]
    %v1154 = vld [vmem:[%s1143 + $0x50] sm:$0xff]
    %v1155 = vld [vmem:[%s1143 + $0x58] sm:$0xff]
    %v1156 = vld [vmem:[#allocation3 + $0x18] sm:$0xff]
    %v1157 = vld [vmem:[#allocation3 + $0x38] sm:$0xff]
    %v1158 = vld [vmem:[#allocation3 + $0x58] sm:$0xff]
    %v1159 = vld [vmem:[#allocation3 + $0x78] sm:$0xff]
    %v1160 = vld [vmem:[#allocation3 + $0x98] sm:$0xff]
    %v1161 = vld [vmem:[#allocation3 + $0xb8] sm:$0xff]
    %v1162 = vld [vmem:[#allocation3 + $0xd8] sm:$0xff]
    %v1163 = vld [vmem:[#allocation3 + $0xf8] sm:$0xff]
    %v1164 = vld [vmem:[#allocation3 + $0x118] sm:$0xff]
    %v1165 = vld [vmem:[#allocation3 + $0x138] sm:$0xff]
    %v1166 = vld [vmem:[#allocation3 + $0x158] sm:$0xff]
    %v1167 = vld [vmem:[#allocation3 + $0x178] sm:$0xff]
    %v1169 = vsel %vm622, %v1144, 0
    %v1172 = vsel %vm622, %v1145, 0
    %v1175 = vsel %vm622, %v1146, 0
    %v1178 = vsel %vm622, %v1147, 0
    %v1181 = vsel %vm622, %v1148, 0
    %v1184 = vsel %vm622, %v1149, 0
    %v1187 = vsel %vm622, %v1150, 0
    %v1190 = vsel %vm622, %v1151, 0
    %v1193 = vsel %vm622, %v1152, 0
    %v1196 = vsel %vm622, %v1153, 0
    %v1199 = vsel %vm622, %v1154, 0
    %v1202 = vsel %vm622, %v1155, 0
    %1204 = vmatprep.subr.mxu0 0.0
    %1205 = vmatpush1.msra.mxu0 %v1156
    %1206 = vmatprep.subr.mxu0 0.0
    %1207 = vmatpush1.msra.mxu0 %v1157
    %1208 = vmatprep.subr.mxu0 0.0
    %1209 = vmatpush1.msra.mxu0 %v1158
    %1210 = vmatprep.subr.mxu0 0.0
    %1211 = vmatpush1.msra.mxu0 %v1159
    %1212 = vmatprep.subr.mxu0 0.0
    %1213 = vmatpush1.msra.mxu0 %v1160
    %1214 = vmatprep.subr.mxu0 0.0
    %1215 = vmatpush1.msra.mxu0 %v1161
    %1216 = vmatprep.subr.mxu0 0.0
    %1217 = vmatpush1.msra.mxu0 %v1162
    %1218 = vmatprep.subr.mxu0 0.0
    %1219 = vmatpush1.msra.mxu0 %v1163
    %1220 = vmatprep.subr.mxu0 0.0
    %1221 = vmatpush1.msra.mxu0 %v1164
    %1222 = vmatprep.subr.mxu0 0.0
    %1223 = vmatpush1.msra.mxu0 %v1165
    %1224 = vmatprep.subr.mxu0 0.0
    %1225 = vmatpush1.msra.mxu0 %v1166
    %1226 = vmatprep.subr.mxu0 0.0
    %1227 = vmatpush1.msra.mxu0 %v1167
    %1228 = vmatprep.subr.mxu0 0.0
    %1229 = vmatpush1.msra.mxu0 0.0
    %1230 = vmatprep.subr.mxu0 0.0
    %1231 = vmatpush1.msra.mxu0 0.0
    %1232 = vmatprep.subr.mxu0 0.0
    %1233 = vmatpush1.msra.mxu0 0.0
    %1234 = vmatprep.subr.mxu0 0.0
    %1235 = vmatpush1.msra.mxu0 0.0
    %1236 = vmatprep.subr.mxu0 0.0
    %1237 = vmatpush1.msra.mxu0 0.0
    %1238 = vmatprep.subr.mxu0 0.0
    %1239 = vmatpush1.msra.mxu0 0.0
    %1240 = vmatprep.subr.mxu0 0.0
    %1241 = vmatpush1.msra.mxu0 0.0
    %1242 = vmatprep.subr.mxu0 0.0
    %1243 = vmatpush1.msra.mxu0 0.0
    %1244 = vmatprep.subr.mxu0 0.0
    %1245 = vmatpush1.msra.mxu0 0.0
    %1246 = vmatprep.subr.mxu0 0.0
    %1247 = vmatpush1.msra.mxu0 0.0
    %1248 = vmatprep.subr.mxu0 0.0
    %1249 = vmatpush1.msra.mxu0 0.0
    %1250 = vmatprep.subr.mxu0 0.0
    %1251 = vmatpush1.msra.mxu0 0.0
    %1252 = vmatprep.subr.mxu0 0.0
    %1253 = vmatpush1.msra.mxu0 0.0
    %1254 = vmatprep.subr.mxu0 0.0
    %1255 = vmatpush1.msra.mxu0 0.0
    %1256 = vmatprep.subr.mxu0 0.0
    %1257 = vmatpush1.msra.mxu0 0.0
    %1258 = vmatprep.subr.mxu0 0.0
    %1259 = vmatpush1.msra.mxu0 0.0
    %1260 = vmatprep.subr.mxu0 0.0
    %1261 = vmatpush1.msra.mxu0 0.0
    %1262 = vmatprep.subr.mxu0 0.0
    %1263 = vmatpush1.msra.mxu0 0.0
    %1264 = vmatprep.subr.mxu0 0.0
    %1265 = vmatpush1.msra.mxu0 0.0
    %1266 = vmatprep.subr.mxu0 0.0
    %1267 = vmatpush1.msra.mxu0 0.0
    %1268 = vmatprep.mubr.f32.mxu0 0.0
    %1269 = vmatmul.mubr.f32.gmra.mrb[0].mxu0 %v1169
    %v1270 = vpop.f32.mrb[0].mxu0
    %v1271 = vadd.f32 0.0, %v1270
    %v1272 = vpop.f32.mrb[0].mxu0
    %1273 = vmatprep.mubr.f32.mxu0 0.0
    %1274 = vmatmul.mubr.f32.gmra.mrb[0].mxu0 %v1172
    %v1275 = vpop.f32.mrb[0].mxu0
    %v1276 = vadd.f32 0.0, %v1275
    %v1277 = vpop.f32.mrb[0].mxu0
    %1278 = vmatprep.mubr.f32.mxu0 0.0
    %1279 = vmatmul.mubr.f32.gmra.mrb[0].mxu0 %v1175
    %v1280 = vpop.f32.mrb[0].mxu0
    %v1281 = vadd.f32 0.0, %v1280
    %v1282 = vpop.f32.mrb[0].mxu0
    %1283 = vmatprep.mubr.f32.mxu0 0.0
    %1284 = vmatmul.mubr.f32.gmra.mrb[0].mxu0 %v1178
    %v1285 = vpop.f32.mrb[0].mxu0
    %v1286 = vadd.f32 0.0, %v1285
    %v1287 = vpop.f32.mrb[0].mxu0
    %1288 = vmatprep.mubr.f32.mxu0 0.0
    %1289 = vmatmul.mubr.f32.gmra.mrb[0].mxu0 %v1181
    %v1290 = vpop.f32.mrb[0].mxu0
    %v1291 = vadd.f32 0.0, %v1290
    %v1292 = vpop.f32.mrb[0].mxu0
    %1293 = vmatprep.mubr.f32.mxu0 0.0
    %1294 = vmatmul.mubr.f32.gmra.mrb[0].mxu0 %v1184
    %v1295 = vpop.f32.mrb[0].mxu0
    %v1296 = vadd.f32 0.0, %v1295
    %v1297 = vpop.f32.mrb[0].mxu0
    %1298 = vmatprep.mubr.f32.mxu0 0.0
    %1299 = vmatmul.mubr.f32.gmra.mrb[0].mxu0 %v1187
    %v1300 = vpop.f32.mrb[0].mxu0
    %v1301 = vadd.f32 0.0, %v1300
    %v1302 = vpop.f32.mrb[0].mxu0
    %1303 = vmatprep.mubr.f32.mxu0 0.0
    %1304 = vmatmul.mubr.f32.gmra.mrb[0].mxu0 %v1190
    %v1305 = vpop.f32.mrb[0].mxu0
    %v1306 = vadd.f32 0.0, %v1305
    %v1307 = vpop.f32.mrb[0].mxu0
    %1308 = vmatprep.mubr.f32.mxu0 0.0
    %1309 = vmatmul.mubr.f32.gmra.mrb[0].mxu0 %v1193
    %v1310 = vpop.f32.mrb[0].mxu0
    %v1311 = vadd.f32 0.0, %v1310
    %v1312 = vpop.f32.mrb[0].mxu0
    %1313 = vmatprep.mubr.f32.mxu0 0.0
    %1314 = vmatmul.mubr.f32.gmra.mrb[0].mxu0 %v1196
    %v1315 = vpop.f32.mrb[0].mxu0
    %v1316 = vadd.f32 0.0, %v1315
    %v1317 = vpop.f32.mrb[0].mxu0
    %1318 = vmatprep.mubr.f32.mxu0 0.0
    %1319 = vmatmul.mubr.f32.gmra.mrb[0].mxu0 %v1199
    %v1320 = vpop.f32.mrb[0].mxu0
    %v1321 = vadd.f32 0.0, %v1320
    %v1322 = vpop.f32.mrb[0].mxu0
    %1323 = vmatprep.mubr.f32.mxu0 0.0
    %1324 = vmatmul.mubr.f32.gmra.mrb[0].mxu0 %v1202
    %v1325 = vpop.f32.mrb[0].mxu0
    %v1326 = vadd.f32 0.0, %v1325
    %v1327 = vpop.f32.mrb[0].mxu0
    %1328 = vdwg.mxu0
    %v1329 = vadd.f32 %v1131, %v1271
    %v1330 = vadd.f32 %v1132, %v1276
    %v1331 = vadd.f32 %v1133, %v1281
    %v1332 = vadd.f32 %v1134, %v1286
    %v1333 = vadd.f32 %v1135, %v1291
    %v1334 = vadd.f32 %v1136, %v1296
    %v1335 = vadd.f32 %v1137, %v1301
    %v1336 = vadd.f32 %v1138, %v1306
    %v1337 = vadd.f32 %v1139, %v1311
    %v1338 = vadd.f32 %v1140, %v1316
    %v1339 = vadd.f32 %v1141, %v1321
    %v1340 = vadd.f32 %v1142, %v1326
    %vm1341 = vcmp.ge.f32.partialorder %v1329, 0.0
    %vm1342 = vcmp.ge.f32.partialorder %v1330, 0.0
    %vm1343 = vcmp.ge.f32.partialorder %v1331, 0.0
    %vm1344 = vcmp.ge.f32.partialorder %v1332, 0.0
    %vm1345 = vcmp.ge.f32.partialorder %v1333, 0.0
    %vm1346 = vcmp.ge.f32.partialorder %v1334, 0.0
    %vm1347 = vcmp.ge.f32.partialorder %v1335, 0.0
    %vm1348 = vcmp.ge.f32.partialorder %v1336, 0.0
    %vm1349 = vcmp.ge.f32.partialorder %v1337, 0.0
    %vm1350 = vcmp.ge.f32.partialorder %v1338, 0.0
    %vm1351 = vcmp.ge.f32.partialorder %v1339, 0.0
    %vm1352 = vcmp.ge.f32.partialorder %v1340, 0.0
    %v1353 = vmul.f32 %v1329, 0.2
    %v1354 = vmul.f32 %v1330, 0.2
    %v1355 = vmul.f32 %v1331, 0.2
    %v1356 = vmul.f32 %v1332, 0.2
    %v1357 = vmul.f32 %v1333, 0.2
    %v1358 = vmul.f32 %v1334, 0.2
    %v1359 = vmul.f32 %v1335, 0.2
    %v1360 = vmul.f32 %v1336, 0.2
    %v1361 = vmul.f32 %v1337, 0.2
    %v1362 = vmul.f32 %v1338, 0.2
    %v1363 = vmul.f32 %v1339, 0.2
    %v1364 = vmul.f32 %v1340, 0.2
    %v1365 = vsel %vm1341, %v1329, %v1353
    %v1366 = vsel %vm1342, %v1330, %v1354
    %v1367 = vsel %vm1343, %v1331, %v1355
    %v1368 = vsel %vm1344, %v1332, %v1356
    %v1369 = vsel %vm1345, %v1333, %v1357
    %v1370 = vsel %vm1346, %v1334, %v1358
    %v1371 = vsel %vm1347, %v1335, %v1359
    %v1372 = vsel %vm1348, %v1336, %v1360
    %v1373 = vsel %vm1349, %v1337, %v1361
    %v1374 = vsel %vm1350, %v1338, %v1362
    %v1375 = vsel %vm1351, %v1339, %v1363
    %v1376 = vsel %vm1352, %v1340, %v1364
    %1377 = vst [vmem:[#allocation2] sm:$0xff] %v1365
    %1378 = vst [vmem:[#allocation2 + $0x8] sm:$0xff] %v1366
    %1379 = vst [vmem:[#allocation2 + $0x10] sm:$0xff] %v1367
    %1380 = vst [vmem:[#allocation2 + $0x18] sm:$0xff] %v1368
    %1381 = vst [vmem:[#allocation2 + $0x20] sm:$0xff] %v1369
    %1382 = vst [vmem:[#allocation2 + $0x28] sm:$0xff] %v1370
    %1383 = vst [vmem:[#allocation2 + $0x30] sm:$0xff] %v1371
    %1384 = vst [vmem:[#allocation2 + $0x38] sm:$0xff] %v1372
    %1385 = vst [vmem:[#allocation2 + $0x40] sm:$0xff] %v1373
    %1386 = vst [vmem:[#allocation2 + $0x48] sm:$0xff] %v1374
    %1387 = vst [vmem:[#allocation2 + $0x50] sm:$0xff] %v1375
    %1388 = vst [vmem:[#allocation2 + $0x58] sm:$0xff] %v1376
    %v1389 = vld [vmem:[#allocation2] sm:$0xff]
    %v1390 = vld [vmem:[#allocation2 + $0x8] sm:$0xff]
    %v1391 = vld [vmem:[#allocation2 + $0x10] sm:$0xff]
    %v1392 = vld [vmem:[#allocation2 + $0x18] sm:$0xff]
    %v1393 = vld [vmem:[#allocation2 + $0x20] sm:$0xff]
    %v1394 = vld [vmem:[#allocation2 + $0x28] sm:$0xff]
    %v1395 = vld [vmem:[#allocation2 + $0x30] sm:$0xff]
    %v1396 = vld [vmem:[#allocation2 + $0x38] sm:$0xff]
    %v1397 = vld [vmem:[#allocation2 + $0x40] sm:$0xff]
    %v1398 = vld [vmem:[#allocation2 + $0x48] sm:$0xff]
    %v1399 = vld [vmem:[#allocation2 + $0x50] sm:$0xff]
    %v1400 = vld [vmem:[#allocation2 + $0x58] sm:$0xff]
    %v1401 = vpack.c.bf16 %v1390, %v1389
    %v1402 = vpack.c.bf16 %v1392, %v1391
    %v1403 = vpack.c.bf16 %v1394, %v1393
    %v1404 = vpack.c.bf16 %v1396, %v1395
    %v1405 = vpack.c.bf16 %v1398, %v1397
    %v1406 = vpack.c.bf16 %v1400, %v1399
    %s1407 = scalar_lea.vmem [#allocation10], 256
    %v1408 = vld [vmem:[%s1407] sm:$0xff]
    %v1409 = vld [vmem:[%s1407 + $0x8] sm:$0xff]
    %v1410 = vld [vmem:[%s1407 + $0x10] sm:$0xff]
    %v1411 = vld [vmem:[%s1407 + $0x18] sm:$0xff]
    %v1412 = vld [vmem:[%s1407 + $0x20] sm:$0xff]
    %v1413 = vld [vmem:[%s1407 + $0x28] sm:$0xff]
    %v1414 = vld [vmem:[%s1407 + $0x30] sm:$0xff]
    %v1415 = vld [vmem:[%s1407 + $0x38] sm:$0xff]
    %v1416 = vld [vmem:[%s1407 + $0x40] sm:$0xff]
    %v1417 = vld [vmem:[%s1407 + $0x48] sm:$0xff]
    %v1418 = vld [vmem:[%s1407 + $0x50] sm:$0xff]
    %v1419 = vld [vmem:[%s1407 + $0x58] sm:$0xff]
    %v1420 = vld [vmem:[%s1407 + $0x60] sm:$0xff]
    %v1421 = vld [vmem:[%s1407 + $0x68] sm:$0xff]
    %v1422 = vld [vmem:[%s1407 + $0x70] sm:$0xff]
    %v1423 = vld [vmem:[%s1407 + $0x78] sm:$0xff]
    %v1424 = vld [vmem:[%s1407 + $0x80] sm:$0xff]
    %v1425 = vld [vmem:[%s1407 + $0x88] sm:$0xff]
    %v1426 = vld [vmem:[%s1407 + $0x90] sm:$0xff]
    %v1427 = vld [vmem:[%s1407 + $0x98] sm:$0xff]
    %v1428 = vld [vmem:[%s1407 + $0xa0] sm:$0xff]
    %v1429 = vld [vmem:[%s1407 + $0xa8] sm:$0xff]
    %v1430 = vld [vmem:[%s1407 + $0xb0] sm:$0xff]
    %v1431 = vld [vmem:[%s1407 + $0xb8] sm:$0xff]
    %v1432 = vld [vmem:[%s1407 + $0xc0] sm:$0xff]
    %v1433 = vld [vmem:[%s1407 + $0xc8] sm:$0xff]
    %v1434 = vld [vmem:[%s1407 + $0xd0] sm:$0xff]
    %v1435 = vld [vmem:[%s1407 + $0xd8] sm:$0xff]
    %v1436 = vld [vmem:[%s1407 + $0xe0] sm:$0xff]
    %v1437 = vld [vmem:[%s1407 + $0xe8] sm:$0xff]
    %v1438 = vld [vmem:[%s1407 + $0xf0] sm:$0xff]
    %v1439 = vld [vmem:[%s1407 + $0xf8] sm:$0xff]
    %v1472 = vunpack.c.l.b16 %v1408
    %v1473 = vunpack.c.h.b16 %v1408
    %v1474 = vunpack.c.l.b16 %v1409
    %v1475 = vunpack.c.h.b16 %v1409
    %v1476 = vunpack.c.l.b16 %v1410
    %v1477 = vunpack.c.h.b16 %v1410
    %v1478 = vunpack.c.l.b16 %v1411
    %v1479 = vunpack.c.h.b16 %v1411
    %v1480 = vunpack.c.l.b16 %v1412
    %v1481 = vunpack.c.h.b16 %v1412
    %v1482 = vunpack.c.l.b16 %v1413
    %v1483 = vunpack.c.h.b16 %v1413
    %v1484 = vunpack.c.l.b16 %v1414
    %v1485 = vunpack.c.h.b16 %v1414
    %v1486 = vunpack.c.l.b16 %v1415
    %v1487 = vunpack.c.h.b16 %v1415
    %v1488 = vunpack.c.l.b16 %v1416
    %v1489 = vunpack.c.h.b16 %v1416
    %v1490 = vunpack.c.l.b16 %v1417
    %v1491 = vunpack.c.h.b16 %v1417
    %v1492 = vunpack.c.l.b16 %v1418
    %v1493 = vunpack.c.h.b16 %v1418
    %v1494 = vunpack.c.l.b16 %v1419
    %v1495 = vunpack.c.h.b16 %v1419
    %v1496 = vunpack.c.l.b16 %v1420
    %v1497 = vunpack.c.h.b16 %v1420
    %v1498 = vunpack.c.l.b16 %v1421
    %v1499 = vunpack.c.h.b16 %v1421
    %v1500 = vunpack.c.l.b16 %v1422
    %v1501 = vunpack.c.h.b16 %v1422
    %v1502 = vunpack.c.l.b16 %v1423
    %v1503 = vunpack.c.h.b16 %v1423
    %v1504 = vunpack.c.l.b16 %v1424
    %v1505 = vunpack.c.h.b16 %v1424
    %v1506 = vunpack.c.l.b16 %v1425
    %v1507 = vunpack.c.h.b16 %v1425
    %v1508 = vunpack.c.l.b16 %v1426
    %v1509 = vunpack.c.h.b16 %v1426
    %v1510 = vunpack.c.l.b16 %v1427
    %v1511 = vunpack.c.h.b16 %v1427
    %v1512 = vunpack.c.l.b16 %v1428
    %v1513 = vunpack.c.h.b16 %v1428
    %v1514 = vunpack.c.l.b16 %v1429
    %v1515 = vunpack.c.h.b16 %v1429
    %v1516 = vunpack.c.l.b16 %v1430
    %v1517 = vunpack.c.h.b16 %v1430
    %v1518 = vunpack.c.l.b16 %v1431
    %v1519 = vunpack.c.h.b16 %v1431
    %v1520 = vunpack.c.l.b16 %v1432
    %v1521 = vunpack.c.h.b16 %v1432
    %v1522 = vunpack.c.l.b16 %v1433
    %v1523 = vunpack.c.h.b16 %v1433
    %v1524 = vunpack.c.l.b16 %v1434
    %v1525 = vunpack.c.h.b16 %v1434
    %v1526 = vunpack.c.l.b16 %v1435
    %v1527 = vunpack.c.h.b16 %v1435
    %v1528 = vunpack.c.l.b16 %v1436
    %v1529 = vunpack.c.h.b16 %v1436
    %v1530 = vunpack.c.l.b16 %v1437
    %v1531 = vunpack.c.h.b16 %v1437
    %v1532 = vunpack.c.l.b16 %v1438
    %v1533 = vunpack.c.h.b16 %v1438
    %v1534 = vunpack.c.l.b16 %v1439
    %v1535 = vunpack.c.h.b16 %v1439
    %v1536 = vpack.c.b16 %v1476, %v1472
    %v1537 = vpack.c.b16 %v1477, %v1473
    %v1538 = vpack.c.b16 %v1478, %v1474
    %v1539 = vpack.c.b16 %v1479, %v1475
    %v1540 = vpack.c.b16 %v1484, %v1480
    %v1541 = vpack.c.b16 %v1485, %v1481
    %v1542 = vpack.c.b16 %v1486, %v1482
    %v1543 = vpack.c.b16 %v1487, %v1483
    %v1544 = vpack.c.b16 %v1492, %v1488
    %v1545 = vpack.c.b16 %v1493, %v1489
    %v1546 = vpack.c.b16 %v1494, %v1490
    %v1547 = vpack.c.b16 %v1495, %v1491
    %v1548 = vpack.c.b16 %v1500, %v1496
    %v1549 = vpack.c.b16 %v1501, %v1497
    %v1550 = vpack.c.b16 %v1502, %v1498
    %v1551 = vpack.c.b16 %v1503, %v1499
    %v1552 = vpack.c.b16 %v1508, %v1504
    %v1553 = vpack.c.b16 %v1509, %v1505
    %v1554 = vpack.c.b16 %v1510, %v1506
    %v1555 = vpack.c.b16 %v1511, %v1507
    %v1556 = vpack.c.b16 %v1516, %v1512
    %v1557 = vpack.c.b16 %v1517, %v1513
    %v1558 = vpack.c.b16 %v1518, %v1514
    %v1559 = vpack.c.b16 %v1519, %v1515
    %v1560 = vpack.c.b16 %v1524, %v1520
    %v1561 = vpack.c.b16 %v1525, %v1521
    %v1562 = vpack.c.b16 %v1526, %v1522
    %v1563 = vpack.c.b16 %v1527, %v1523
    %v1564 = vpack.c.b16 %v1532, %v1528
    %v1565 = vpack.c.b16 %v1533, %v1529
    %v1566 = vpack.c.b16 %v1534, %v1530
    %v1567 = vpack.c.b16 %v1535, %v1531
    %1600 = vmatprep.subr.bf16.mxu0 %v1537
    %1601 = vmatpush1.bf16.msra.mxu0 %v1536
    %1602 = vmatprep.subr.bf16.mxu0 %v1541
    %1603 = vmatpush1.bf16.msra.mxu0 %v1540
    %1604 = vmatprep.subr.bf16.mxu0 %v1545
    %1605 = vmatpush1.bf16.msra.mxu0 %v1544
    %1606 = vmatprep.subr.bf16.mxu0 %v1549
    %1607 = vmatpush1.bf16.msra.mxu0 %v1548
    %1608 = vmatprep.subr.bf16.mxu0 %v1553
    %1609 = vmatpush1.bf16.msra.mxu0 %v1552
    %1610 = vmatprep.subr.bf16.mxu0 %v1557
    %1611 = vmatpush1.bf16.msra.mxu0 %v1556
    %1612 = vmatprep.subr.bf16.mxu0 %v1561
    %1613 = vmatpush1.bf16.msra.mxu0 %v1560
    %1614 = vmatprep.subr.bf16.mxu0 %v1565
    %1615 = vmatpush1.bf16.msra.mxu0 %v1564
    %1616 = vmatprep.subr.bf16.mxu0 0
    %1617 = vmatpush1.bf16.msra.mxu0 0
    %1618 = vmatprep.subr.bf16.mxu0 0
    %1619 = vmatpush1.bf16.msra.mxu0 0
    %1620 = vmatprep.subr.bf16.mxu0 0
    %1621 = vmatpush1.bf16.msra.mxu0 0
    %1622 = vmatprep.subr.bf16.mxu0 0
    %1623 = vmatpush1.bf16.msra.mxu0 0
    %1624 = vmatprep.subr.bf16.mxu0 0
    %1625 = vmatpush1.bf16.msra.mxu0 0
    %1626 = vmatprep.subr.bf16.mxu0 0
    %1627 = vmatpush1.bf16.msra.mxu0 0
    %1628 = vmatprep.subr.bf16.mxu0 0
    %1629 = vmatpush1.bf16.msra.mxu0 0
    %1630 = vmatprep.subr.bf16.mxu0 0
    %1631 = vmatpush1.bf16.msra.mxu0 0
    %1632 = vmatprep.mubr.bf16.mxu0 0
    %1633 = vmatmul.mubr.bf16.gmra.mrb[0].mxu0 %v1401
    %v1634 = vpop.f32.mrb[0].mxu0
    %v1635 = vadd.f32 0.0, %v1634
    %v1636 = vpop.f32.mrb[0].mxu0
    %v1637 = vadd.f32 0.0, %v1636
    %v1638 = vpop.f32.mrb[0].mxu0
    %v1639 = vadd.f32 0.0, %v1638
    %v1640 = vpop.f32.mrb[0].mxu0
    %v1641 = vadd.f32 0.0, %v1640
    %1642 = vmatprep.mubr.bf16.mxu0 0
    %1643 = vmatmul.mubr.bf16.gmra.mrb[0].mxu0 %v1402
    %v1644 = vpop.f32.mrb[0].mxu0
    %v1645 = vadd.f32 0.0, %v1644
    %v1646 = vpop.f32.mrb[0].mxu0
    %v1647 = vadd.f32 0.0, %v1646
    %v1648 = vpop.f32.mrb[0].mxu0
    %v1649 = vadd.f32 0.0, %v1648
    %v1650 = vpop.f32.mrb[0].mxu0
    %v1651 = vadd.f32 0.0, %v1650
    %1652 = vmatprep.mubr.bf16.mxu0 0
    %1653 = vmatmul.mubr.bf16.gmra.mrb[0].mxu0 %v1403
    %v1654 = vpop.f32.mrb[0].mxu0
    %v1655 = vadd.f32 0.0, %v1654
    %v1656 = vpop.f32.mrb[0].mxu0
    %v1657 = vadd.f32 0.0, %v1656
    %v1658 = vpop.f32.mrb[0].mxu0
    %v1659 = vadd.f32 0.0, %v1658
    %v1660 = vpop.f32.mrb[0].mxu0
    %v1661 = vadd.f32 0.0, %v1660
    %1662 = vmatprep.mubr.bf16.mxu0 0
    %1663 = vmatmul.mubr.bf16.gmra.mrb[0].mxu0 %v1404
    %v1664 = vpop.f32.mrb[0].mxu0
    %v1665 = vadd.f32 0.0, %v1664
    %v1666 = vpop.f32.mrb[0].mxu0
    %v1667 = vadd.f32 0.0, %v1666
    %v1668 = vpop.f32.mrb[0].mxu0
    %v1669 = vadd.f32 0.0, %v1668
    %v1670 = vpop.f32.mrb[0].mxu0
    %v1671 = vadd.f32 0.0, %v1670
    %1672 = vmatprep.mubr.bf16.mxu0 0
    %1673 = vmatmul.mubr.bf16.gmra.mrb[0].mxu0 %v1405
    %v1674 = vpop.f32.mrb[0].mxu0
    %v1675 = vadd.f32 0.0, %v1674
    %v1676 = vpop.f32.mrb[0].mxu0
    %v1677 = vadd.f32 0.0, %v1676
    %v1678 = vpop.f32.mrb[0].mxu0
    %v1679 = vadd.f32 0.0, %v1678
    %v1680 = vpop.f32.mrb[0].mxu0
    %v1681 = vadd.f32 0.0, %v1680
    %1682 = vmatprep.mubr.bf16.mxu0 0
    %1683 = vmatmul.mubr.bf16.gmra.mrb[0].mxu0 %v1406
    %v1684 = vpop.f32.mrb[0].mxu0
    %v1685 = vadd.f32 0.0, %v1684
    %v1686 = vpop.f32.mrb[0].mxu0
    %v1687 = vadd.f32 0.0, %v1686
    %v1688 = vpop.f32.mrb[0].mxu0
    %v1689 = vadd.f32 0.0, %v1688
    %v1690 = vpop.f32.mrb[0].mxu0
    %v1691 = vadd.f32 0.0, %v1690
    %1692 = vdwg.mxu0
    %1693 = vmatprep.subr.bf16.mxu0 %v1539
    %1694 = vmatpush1.bf16.msra.mxu0 %v1538
    %1695 = vmatprep.subr.bf16.mxu0 %v1543
    %1696 = vmatpush1.bf16.msra.mxu0 %v1542
    %1697 = vmatprep.subr.bf16.mxu0 %v1547
    %1698 = vmatpush1.bf16.msra.mxu0 %v1546
    %1699 = vmatprep.subr.bf16.mxu0 %v1551
    %1700 = vmatpush1.bf16.msra.mxu0 %v1550
    %1701 = vmatprep.subr.bf16.mxu0 %v1555
    %1702 = vmatpush1.bf16.msra.mxu0 %v1554
    %1703 = vmatprep.subr.bf16.mxu0 %v1559
    %1704 = vmatpush1.bf16.msra.mxu0 %v1558
    %1705 = vmatprep.subr.bf16.mxu0 %v1563
    %1706 = vmatpush1.bf16.msra.mxu0 %v1562
    %1707 = vmatprep.subr.bf16.mxu0 %v1567
    %1708 = vmatpush1.bf16.msra.mxu0 %v1566
    %1709 = vmatprep.subr.bf16.mxu0 0
    %1710 = vmatpush1.bf16.msra.mxu0 0
    %1711 = vmatprep.subr.bf16.mxu0 0
    %1712 = vmatpush1.bf16.msra.mxu0 0
    %1713 = vmatprep.subr.bf16.mxu0 0
    %1714 = vmatpush1.bf16.msra.mxu0 0
    %1715 = vmatprep.subr.bf16.mxu0 0
    %1716 = vmatpush1.bf16.msra.mxu0 0
    %1717 = vmatprep.subr.bf16.mxu0 0
    %1718 = vmatpush1.bf16.msra.mxu0 0
    %1719 = vmatprep.subr.bf16.mxu0 0
    %1720 = vmatpush1.bf16.msra.mxu0 0
    %1721 = vmatprep.subr.bf16.mxu0 0
    %1722 = vmatpush1.bf16.msra.mxu0 0
    %1723 = vmatprep.subr.bf16.mxu0 0
    %1724 = vmatpush1.bf16.msra.mxu0 0
    %1725 = vmatprep.mubr.bf16.mxu0 0
    %1726 = vmatmul.mubr.bf16.gmra.mrb[0].mxu0 %v1401
    %v1727 = vpop.f32.mrb[0].mxu0
    %v1728 = vadd.f32 0.0, %v1727
    %v1729 = vpop.f32.mrb[0].mxu0
    %v1730 = vadd.f32 0.0, %v1729
    %v1731 = vpop.f32.mrb[0].mxu0
    %v1732 = vadd.f32 0.0, %v1731
    %v1733 = vpop.f32.mrb[0].mxu0
    %v1734 = vadd.f32 0.0, %v1733
    %1735 = vmatprep.mubr.bf16.mxu0 0
    %1736 = vmatmul.mubr.bf16.gmra.mrb[0].mxu0 %v1402
    %v1737 = vpop.f32.mrb[0].mxu0
    %v1738 = vadd.f32 0.0, %v1737
    %v1739 = vpop.f32.mrb[0].mxu0
    %v1740 = vadd.f32 0.0, %v1739
    %v1741 = vpop.f32.mrb[0].mxu0
    %v1742 = vadd.f32 0.0, %v1741
    %v1743 = vpop.f32.mrb[0].mxu0
    %v1744 = vadd.f32 0.0, %v1743
    %1745 = vmatprep.mubr.bf16.mxu0 0
    %1746 = vmatmul.mubr.bf16.gmra.mrb[0].mxu0 %v1403
    %v1747 = vpop.f32.mrb[0].mxu0
    %v1748 = vadd.f32 0.0, %v1747
    %v1749 = vpop.f32.mrb[0].mxu0
    %v1750 = vadd.f32 0.0, %v1749
    %v1751 = vpop.f32.mrb[0].mxu0
    %v1752 = vadd.f32 0.0, %v1751
    %v1753 = vpop.f32.mrb[0].mxu0
    %v1754 = vadd.f32 0.0, %v1753
    %1755 = vmatprep.mubr.bf16.mxu0 0
    %1756 = vmatmul.mubr.bf16.gmra.mrb[0].mxu0 %v1404
    %v1757 = vpop.f32.mrb[0].mxu0
    %v1758 = vadd.f32 0.0, %v1757
    %v1759 = vpop.f32.mrb[0].mxu0
    %v1760 = vadd.f32 0.0, %v1759
    %v1761 = vpop.f32.mrb[0].mxu0
    %v1762 = vadd.f32 0.0, %v1761
    %v1763 = vpop.f32.mrb[0].mxu0
    %v1764 = vadd.f32 0.0, %v1763
    %1765 = vmatprep.mubr.bf16.mxu0 0
    %1766 = vmatmul.mubr.bf16.gmra.mrb[0].mxu0 %v1405
    %v1767 = vpop.f32.mrb[0].mxu0
    %v1768 = vadd.f32 0.0, %v1767
    %v1769 = vpop.f32.mrb[0].mxu0
    %v1770 = vadd.f32 0.0, %v1769
    %v1771 = vpop.f32.mrb[0].mxu0
    %v1772 = vadd.f32 0.0, %v1771
    %v1773 = vpop.f32.mrb[0].mxu0
    %v1774 = vadd.f32 0.0, %v1773
    %1775 = vmatprep.mubr.bf16.mxu0 0
    %1776 = vmatmul.mubr.bf16.gmra.mrb[0].mxu0 %v1406
    %v1777 = vpop.f32.mrb[0].mxu0
    %v1778 = vadd.f32 0.0, %v1777
    %v1779 = vpop.f32.mrb[0].mxu0
    %v1780 = vadd.f32 0.0, %v1779
    %v1781 = vpop.f32.mrb[0].mxu0
    %v1782 = vadd.f32 0.0, %v1781
    %v1783 = vpop.f32.mrb[0].mxu0
    %v1784 = vadd.f32 0.0, %v1783
    %1785 = vdwg.mxu0
    %1786 = vst [vmem:[#allocation3] sm:$0xff] %v1635
    %1787 = vst [vmem:[#allocation3 + $0x8] sm:$0xff] %v1637
    %1788 = vst [vmem:[#allocation3 + $0x10] sm:$0xff] %v1728
    %1789 = vst [vmem:[#allocation3 + $0x18] sm:$0xff] %v1730
    %1790 = vst [vmem:[#allocation3 + $0x20] sm:$0xff] %v1639
    %1791 = vst [vmem:[#allocation3 + $0x28] sm:$0xff] %v1641
    %1792 = vst [vmem:[#allocation3 + $0x30] sm:$0xff] %v1732
    %1793 = vst [vmem:[#allocation3 + $0x38] sm:$0xff] %v1734
    %1794 = vst [vmem:[#allocation3 + $0x40] sm:$0xff] %v1645
    %1795 = vst [vmem:[#allocation3 + $0x48] sm:$0xff] %v1647
    %1796 = vst [vmem:[#allocation3 + $0x50] sm:$0xff] %v1738
    %1797 = vst [vmem:[#allocation3 + $0x58] sm:$0xff] %v1740
    %1798 = vst [vmem:[#allocation3 + $0x60] sm:$0xff] %v1649
    %1799 = vst [vmem:[#allocation3 + $0x68] sm:$0xff] %v1651
    %1800 = vst [vmem:[#allocation3 + $0x70] sm:$0xff] %v1742
    %1801 = vst [vmem:[#allocation3 + $0x78] sm:$0xff] %v1744
    %1802 = vst [vmem:[#allocation3 + $0x80] sm:$0xff] %v1655
    %1803 = vst [vmem:[#allocation3 + $0x88] sm:$0xff] %v1657
    %1804 = vst [vmem:[#allocation3 + $0x90] sm:$0xff] %v1748
    %1805 = vst [vmem:[#allocation3 + $0x98] sm:$0xff] %v1750
    %1806 = vst [vmem:[#allocation3 + $0xa0] sm:$0xff] %v1659
    %1807 = vst [vmem:[#allocation3 + $0xa8] sm:$0xff] %v1661
    %1808 = vst [vmem:[#allocation3 + $0xb0] sm:$0xff] %v1752
    %1809 = vst [vmem:[#allocation3 + $0xb8] sm:$0xff] %v1754
    %1810 = vst [vmem:[#allocation3 + $0xc0] sm:$0xff] %v1665
    %1811 = vst [vmem:[#allocation3 + $0xc8] sm:$0xff] %v1667
    %1812 = vst [vmem:[#allocation3 + $0xd0] sm:$0xff] %v1758
    %1813 = vst [vmem:[#allocation3 + $0xd8] sm:$0xff] %v1760
    %1814 = vst [vmem:[#allocation3 + $0xe0] sm:$0xff] %v1669
    %1815 = vst [vmem:[#allocation3 + $0xe8] sm:$0xff] %v1671
    %1816 = vst [vmem:[#allocation3 + $0xf0] sm:$0xff] %v1762
    %1817 = vst [vmem:[#allocation3 + $0xf8] sm:$0xff] %v1764
    %1818 = vst [vmem:[#allocation3 + $0x100] sm:$0xff] %v1675
    %1819 = vst [vmem:[#allocation3 + $0x108] sm:$0xff] %v1677
    %1820 = vst [vmem:[#allocation3 + $0x110] sm:$0xff] %v1768
    %1821 = vst [vmem:[#allocation3 + $0x118] sm:$0xff] %v1770
    %1822 = vst [vmem:[#allocation3 + $0x120] sm:$0xff] %v1679
    %1823 = vst [vmem:[#allocation3 + $0x128] sm:$0xff] %v1681
    %1824 = vst [vmem:[#allocation3 + $0x130] sm:$0xff] %v1772
    %1825 = vst [vmem:[#allocation3 + $0x138] sm:$0xff] %v1774
    %1826 = vst [vmem:[#allocation3 + $0x140] sm:$0xff] %v1685
    %1827 = vst [vmem:[#allocation3 + $0x148] sm:$0xff] %v1687
    %1828 = vst [vmem:[#allocation3 + $0x150] sm:$0xff] %v1778
    %1829 = vst [vmem:[#allocation3 + $0x158] sm:$0xff] %v1780
    %1830 = vst [vmem:[#allocation3 + $0x160] sm:$0xff] %v1689
    %1831 = vst [vmem:[#allocation3 + $0x168] sm:$0xff] %v1691
    %1832 = vst [vmem:[#allocation3 + $0x170] sm:$0xff] %v1782
    %1833 = vst [vmem:[#allocation3 + $0x178] sm:$0xff] %v1784
    %v1834 = vld [vmem:[#allocation4] sm:$0xff]
    %v1835 = vld [vmem:[#allocation4 + $0x8] sm:$0xff]
    %v1836 = vld [vmem:[#allocation4 + $0x10] sm:$0xff]
    %v1837 = vld [vmem:[#allocation4 + $0x18] sm:$0xff]
    %v1838 = vld [vmem:[#allocation4 + $0x20] sm:$0xff]
    %v1839 = vld [vmem:[#allocation4 + $0x28] sm:$0xff]
    %v1840 = vld [vmem:[#allocation4 + $0x30] sm:$0xff]
    %v1841 = vld [vmem:[#allocation4 + $0x38] sm:$0xff]
    %v1842 = vld [vmem:[#allocation4 + $0x40] sm:$0xff]
    %v1843 = vld [vmem:[#allocation4 + $0x48] sm:$0xff]
    %v1844 = vld [vmem:[#allocation4 + $0x50] sm:$0xff]
    %v1845 = vld [vmem:[#allocation4 + $0x58] sm:$0xff]
    %v1846 = vld [vmem:[#allocation3] sm:$0xff]
    %v1847 = vld [vmem:[#allocation3 + $0x20] sm:$0xff]
    %v1848 = vld [vmem:[#allocation3 + $0x40] sm:$0xff]
    %v1849 = vld [vmem:[#allocation3 + $0x60] sm:$0xff]
    %v1850 = vld [vmem:[#allocation3 + $0x80] sm:$0xff]
    %v1851 = vld [vmem:[#allocation3 + $0xa0] sm:$0xff]
    %v1852 = vld [vmem:[#allocation3 + $0xc0] sm:$0xff]
    %v1853 = vld [vmem:[#allocation3 + $0xe0] sm:$0xff]
    %v1854 = vld [vmem:[#allocation3 + $0x100] sm:$0xff]
    %v1855 = vld [vmem:[#allocation3 + $0x120] sm:$0xff]
    %v1856 = vld [vmem:[#allocation3 + $0x140] sm:$0xff]
    %v1857 = vld [vmem:[#allocation3 + $0x160] sm:$0xff]
    %v1858 = vld [vmem:[%s597] sm:$0xff]
    %v1859 = vld [vmem:[%s597 + $0x8] sm:$0xff]
    %v1860 = vld [vmem:[%s597 + $0x10] sm:$0xff]
    %v1861 = vld [vmem:[%s597 + $0x18] sm:$0xff]
    %v1862 = vld [vmem:[%s597 + $0x20] sm:$0xff]
    %v1863 = vld [vmem:[%s597 + $0x28] sm:$0xff]
    %v1864 = vld [vmem:[%s597 + $0x30] sm:$0xff]
    %v1865 = vld [vmem:[%s597 + $0x38] sm:$0xff]
    %v1866 = vld [vmem:[%s597 + $0x40] sm:$0xff]
    %v1867 = vld [vmem:[%s597 + $0x48] sm:$0xff]
    %v1868 = vld [vmem:[%s597 + $0x50] sm:$0xff]
    %v1869 = vld [vmem:[%s597 + $0x58] sm:$0xff]
    %v1870 = vld [vmem:[#allocation3 + $0x8] sm:$0xff]
    %v1871 = vld [vmem:[#allocation3 + $0x28] sm:$0xff]
    %v1872 = vld [vmem:[#allocation3 + $0x48] sm:$0xff]
    %v1873 = vld [vmem:[#allocation3 + $0x68] sm:$0xff]
    %v1874 = vld [vmem:[#allocation3 + $0x88] sm:$0xff]
    %v1875 = vld [vmem:[#allocation3 + $0xa8] sm:$0xff]
    %v1876 = vld [vmem:[#allocation3 + $0xc8] sm:$0xff]
    %v1877 = vld [vmem:[#allocation3 + $0xe8] sm:$0xff]
    %v1878 = vld [vmem:[#allocation3 + $0x108] sm:$0xff]
    %v1879 = vld [vmem:[#allocation3 + $0x128] sm:$0xff]
    %v1880 = vld [vmem:[#allocation3 + $0x148] sm:$0xff]
    %v1881 = vld [vmem:[#allocation3 + $0x168] sm:$0xff]
    %v1883 = vsel %vm622, %v1858, 0
    %v1886 = vsel %vm622, %v1859, 0
    %v1889 = vsel %vm622, %v1860, 0
    %v1892 = vsel %vm622, %v1861, 0
    %v1895 = vsel %vm622, %v1862, 0
    %v1898 = vsel %vm622, %v1863, 0
    %v1901 = vsel %vm622, %v1864, 0
    %v1904 = vsel %vm622, %v1865, 0
    %v1907 = vsel %vm622, %v1866, 0
    %v1910 = vsel %vm622, %v1867, 0
    %v1913 = vsel %vm622, %v1868, 0
    %v1916 = vsel %vm622, %v1869, 0
    %1918 = vmatprep.subr.mxu0 0.0
    %1919 = vmatpush1.msra.mxu0 %v1870
    %1920 = vmatprep.subr.mxu0 0.0
    %1921 = vmatpush1.msra.mxu0 %v1871
    %1922 = vmatprep.subr.mxu0 0.0
    %1923 = vmatpush1.msra.mxu0 %v1872
    %1924 = vmatprep.subr.mxu0 0.0
    %1925 = vmatpush1.msra.mxu0 %v1873
    %1926 = vmatprep.subr.mxu0 0.0
    %1927 = vmatpush1.msra.mxu0 %v1874
    %1928 = vmatprep.subr.mxu0 0.0
    %1929 = vmatpush1.msra.mxu0 %v1875
    %1930 = vmatprep.subr.mxu0 0.0
    %1931 = vmatpush1.msra.mxu0 %v1876
    %1932 = vmatprep.subr.mxu0 0.0
    %1933 = vmatpush1.msra.mxu0 %v1877
    %1934 = vmatprep.subr.mxu0 0.0
    %1935 = vmatpush1.msra.mxu0 %v1878
    %1936 = vmatprep.subr.mxu0 0.0
    %1937 = vmatpush1.msra.mxu0 %v1879
    %1938 = vmatprep.subr.mxu0 0.0
    %1939 = vmatpush1.msra.mxu0 %v1880
    %1940 = vmatprep.subr.mxu0 0.0
    %1941 = vmatpush1.msra.mxu0 %v1881
    %1942 = vmatprep.subr.mxu0 0.0
    %1943 = vmatpush1.msra.mxu0 0.0
    %1944 = vmatprep.subr.mxu0 0.0
    %1945 = vmatpush1.msra.mxu0 0.0
    %1946 = vmatprep.subr.mxu0 0.0
    %1947 = vmatpush1.msra.mxu0 0.0
    %1948 = vmatprep.subr.mxu0 0.0
    %1949 = vmatpush1.msra.mxu0 0.0
    %1950 = vmatprep.subr.mxu0 0.0
    %1951 = vmatpush1.msra.mxu0 0.0
    %1952 = vmatprep.subr.mxu0 0.0
    %1953 = vmatpush1.msra.mxu0 0.0
    %1954 = vmatprep.subr.mxu0 0.0
    %1955 = vmatpush1.msra.mxu0 0.0
    %1956 = vmatprep.subr.mxu0 0.0
    %1957 = vmatpush1.msra.mxu0 0.0
    %1958 = vmatprep.subr.mxu0 0.0
    %1959 = vmatpush1.msra.mxu0 0.0
    %1960 = vmatprep.subr.mxu0 0.0
    %1961 = vmatpush1.msra.mxu0 0.0
    %1962 = vmatprep.subr.mxu0 0.0
    %1963 = vmatpush1.msra.mxu0 0.0
    %1964 = vmatprep.subr.mxu0 0.0
    %1965 = vmatpush1.msra.mxu0 0.0
    %1966 = vmatprep.subr.mxu0 0.0
    %1967 = vmatpush1.msra.mxu0 0.0
    %1968 = vmatprep.subr.mxu0 0.0
    %1969 = vmatpush1.msra.mxu0 0.0
    %1970 = vmatprep.subr.mxu0 0.0
    %1971 = vmatpush1.msra.mxu0 0.0
    %1972 = vmatprep.subr.mxu0 0.0
    %1973 = vmatpush1.msra.mxu0 0.0
    %1974 = vmatprep.subr.mxu0 0.0
    %1975 = vmatpush1.msra.mxu0 0.0
    %1976 = vmatprep.subr.mxu0 0.0
    %1977 = vmatpush1.msra.mxu0 0.0
    %1978 = vmatprep.subr.mxu0 0.0
    %1979 = vmatpush1.msra.mxu0 0.0
    %1980 = vmatprep.subr.mxu0 0.0
    %1981 = vmatpush1.msra.mxu0 0.0
    %1982 = vmatprep.mubr.f32.mxu0 0.0
    %1983 = vmatmul.mubr.f32.gmra.mrb[0].mxu0 %v1883
    %v1984 = vpop.f32.mrb[0].mxu0
    %v1985 = vadd.f32 0.0, %v1984
    %v1986 = vpop.f32.mrb[0].mxu0
    %1987 = vmatprep.mubr.f32.mxu0 0.0
    %1988 = vmatmul.mubr.f32.gmra.mrb[0].mxu0 %v1886
    %v1989 = vpop.f32.mrb[0].mxu0
    %v1990 = vadd.f32 0.0, %v1989
    %v1991 = vpop.f32.mrb[0].mxu0
    %1992 = vmatprep.mubr.f32.mxu0 0.0
    %1993 = vmatmul.mubr.f32.gmra.mrb[0].mxu0 %v1889
    %v1994 = vpop.f32.mrb[0].mxu0
    %v1995 = vadd.f32 0.0, %v1994
    %v1996 = vpop.f32.mrb[0].mxu0
    %1997 = vmatprep.mubr.f32.mxu0 0.0
    %1998 = vmatmul.mubr.f32.gmra.mrb[0].mxu0 %v1892
    %v1999 = vpop.f32.mrb[0].mxu0
    %v2000 = vadd.f32 0.0, %v1999
    %v2001 = vpop.f32.mrb[0].mxu0
    %2002 = vmatprep.mubr.f32.mxu0 0.0
    %2003 = vmatmul.mubr.f32.gmra.mrb[0].mxu0 %v1895
    %v2004 = vpop.f32.mrb[0].mxu0
    %v2005 = vadd.f32 0.0, %v2004
    %v2006 = vpop.f32.mrb[0].mxu0
    %2007 = vmatprep.mubr.f32.mxu0 0.0
    %2008 = vmatmul.mubr.f32.gmra.mrb[0].mxu0 %v1898
    %v2009 = vpop.f32.mrb[0].mxu0
    %v2010 = vadd.f32 0.0, %v2009
    %v2011 = vpop.f32.mrb[0].mxu0
    %2012 = vmatprep.mubr.f32.mxu0 0.0
    %2013 = vmatmul.mubr.f32.gmra.mrb[0].mxu0 %v1901
    %v2014 = vpop.f32.mrb[0].mxu0
    %v2015 = vadd.f32 0.0, %v2014
    %v2016 = vpop.f32.mrb[0].mxu0
    %2017 = vmatprep.mubr.f32.mxu0 0.0
    %2018 = vmatmul.mubr.f32.gmra.mrb[0].mxu0 %v1904
    %v2019 = vpop.f32.mrb[0].mxu0
    %v2020 = vadd.f32 0.0, %v2019
    %v2021 = vpop.f32.mrb[0].mxu0
    %2022 = vmatprep.mubr.f32.mxu0 0.0
    %2023 = vmatmul.mubr.f32.gmra.mrb[0].mxu0 %v1907
    %v2024 = vpop.f32.mrb[0].mxu0
    %v2025 = vadd.f32 0.0, %v2024
    %v2026 = vpop.f32.mrb[0].mxu0
    %2027 = vmatprep.mubr.f32.mxu0 0.0
    %2028 = vmatmul.mubr.f32.gmra.mrb[0].mxu0 %v1910
    %v2029 = vpop.f32.mrb[0].mxu0
    %v2030 = vadd.f32 0.0, %v2029
    %v2031 = vpop.f32.mrb[0].mxu0
    %2032 = vmatprep.mubr.f32.mxu0 0.0
    %2033 = vmatmul.mubr.f32.gmra.mrb[0].mxu0 %v1913
    %v2034 = vpop.f32.mrb[0].mxu0
    %v2035 = vadd.f32 0.0, %v2034
    %v2036 = vpop.f32.mrb[0].mxu0
    %2037 = vmatprep.mubr.f32.mxu0 0.0
    %2038 = vmatmul.mubr.f32.gmra.mrb[0].mxu0 %v1916
    %v2039 = vpop.f32.mrb[0].mxu0
    %v2040 = vadd.f32 0.0, %v2039
    %v2041 = vpop.f32.mrb[0].mxu0
    %2042 = vdwg.mxu0
    %v2044 = vsel %vm622, %v1834, 0
    %v2047 = vsel %vm622, %v1835, 0
    %v2050 = vsel %vm622, %v1836, 0
    %v2053 = vsel %vm622, %v1837, 0
    %v2056 = vsel %vm622, %v1838, 0
    %v2059 = vsel %vm622, %v1839, 0
    %v2062 = vsel %vm622, %v1840, 0
    %v2065 = vsel %vm622, %v1841, 0
    %v2068 = vsel %vm622, %v1842, 0
    %v2071 = vsel %vm622, %v1843, 0
    %v2074 = vsel %vm622, %v1844, 0
    %v2077 = vsel %vm622, %v1845, 0
    %2079 = vmatprep.subr.mxu0 0.0
    %2080 = vmatpush1.msra.mxu0 %v1846
    %2081 = vmatprep.subr.mxu0 0.0
    %2082 = vmatpush1.msra.mxu0 %v1847
    %2083 = vmatprep.subr.mxu0 0.0
    %2084 = vmatpush1.msra.mxu0 %v1848
    %2085 = vmatprep.subr.mxu0 0.0
    %2086 = vmatpush1.msra.mxu0 %v1849
    %2087 = vmatprep.subr.mxu0 0.0
    %2088 = vmatpush1.msra.mxu0 %v1850
    %2089 = vmatprep.subr.mxu0 0.0
    %2090 = vmatpush1.msra.mxu0 %v1851
    %2091 = vmatprep.subr.mxu0 0.0
    %2092 = vmatpush1.msra.mxu0 %v1852
    %2093 = vmatprep.subr.mxu0 0.0
    %2094 = vmatpush1.msra.mxu0 %v1853
    %2095 = vmatprep.subr.mxu0 0.0
    %2096 = vmatpush1.msra.mxu0 %v1854
    %2097 = vmatprep.subr.mxu0 0.0
    %2098 = vmatpush1.msra.mxu0 %v1855
    %2099 = vmatprep.subr.mxu0 0.0
    %2100 = vmatpush1.msra.mxu0 %v1856
    %2101 = vmatprep.subr.mxu0 0.0
    %2102 = vmatpush1.msra.mxu0 %v1857
    %2103 = vmatprep.subr.mxu0 0.0
    %2104 = vmatpush1.msra.mxu0 0.0
    %2105 = vmatprep.subr.mxu0 0.0
    %2106 = vmatpush1.msra.mxu0 0.0
    %2107 = vmatprep.subr.mxu0 0.0
    %2108 = vmatpush1.msra.mxu0 0.0
    %2109 = vmatprep.subr.mxu0 0.0
    %2110 = vmatpush1.msra.mxu0 0.0
    %2111 = vmatprep.subr.mxu0 0.0
    %2112 = vmatpush1.msra.mxu0 0.0
    %2113 = vmatprep.subr.mxu0 0.0
    %2114 = vmatpush1.msra.mxu0 0.0
    %2115 = vmatprep.subr.mxu0 0.0
    %2116 = vmatpush1.msra.mxu0 0.0
    %2117 = vmatprep.subr.mxu0 0.0
    %2118 = vmatpush1.msra.mxu0 0.0
    %2119 = vmatprep.subr.mxu0 0.0
    %2120 = vmatpush1.msra.mxu0 0.0
    %2121 = vmatprep.subr.mxu0 0.0
    %2122 = vmatpush1.msra.mxu0 0.0
    %2123 = vmatprep.subr.mxu0 0.0
    %2124 = vmatpush1.msra.mxu0 0.0
    %2125 = vmatprep.subr.mxu0 0.0
    %2126 = vmatpush1.msra.mxu0 0.0
    %2127 = vmatprep.subr.mxu0 0.0
    %2128 = vmatpush1.msra.mxu0 0.0
    %2129 = vmatprep.subr.mxu0 0.0
    %2130 = vmatpush1.msra.mxu0 0.0
    %2131 = vmatprep.subr.mxu0 0.0
    %2132 = vmatpush1.msra.mxu0 0.0
    %2133 = vmatprep.subr.mxu0 0.0
    %2134 = vmatpush1.msra.mxu0 0.0
    %2135 = vmatprep.subr.mxu0 0.0
    %2136 = vmatpush1.msra.mxu0 0.0
    %2137 = vmatprep.subr.mxu0 0.0
    %2138 = vmatpush1.msra.mxu0 0.0
    %2139 = vmatprep.subr.mxu0 0.0
    %2140 = vmatpush1.msra.mxu0 0.0
    %2141 = vmatprep.subr.mxu0 0.0
    %2142 = vmatpush1.msra.mxu0 0.0
    %2143 = vmatprep.mubr.f32.mxu0 0.0
    %2144 = vmatmul.mubr.f32.gmra.mrb[0].mxu0 %v2044
    %v2145 = vpop.f32.mrb[0].mxu0
    %v2146 = vadd.f32 %v1985, %v2145
    %v2147 = vpop.f32.mrb[0].mxu0
    %2148 = vmatprep.mubr.f32.mxu0 0.0
    %2149 = vmatmul.mubr.f32.gmra.mrb[0].mxu0 %v2047
    %v2150 = vpop.f32.mrb[0].mxu0
    %v2151 = vadd.f32 %v1990, %v2150
    %v2152 = vpop.f32.mrb[0].mxu0
    %2153 = vmatprep.mubr.f32.mxu0 0.0
    %2154 = vmatmul.mubr.f32.gmra.mrb[0].mxu0 %v2050
    %v2155 = vpop.f32.mrb[0].mxu0
    %v2156 = vadd.f32 %v1995, %v2155
    %v2157 = vpop.f32.mrb[0].mxu0
    %2158 = vmatprep.mubr.f32.mxu0 0.0
    %2159 = vmatmul.mubr.f32.gmra.mrb[0].mxu0 %v2053
    %v2160 = vpop.f32.mrb[0].mxu0
    %v2161 = vadd.f32 %v2000, %v2160
    %v2162 = vpop.f32.mrb[0].mxu0
    %2163 = vmatprep.mubr.f32.mxu0 0.0
    %2164 = vmatmul.mubr.f32.gmra.mrb[0].mxu0 %v2056
    %v2165 = vpop.f32.mrb[0].mxu0
    %v2166 = vadd.f32 %v2005, %v2165
    %v2167 = vpop.f32.mrb[0].mxu0
    %2168 = vmatprep.mubr.f32.mxu0 0.0
    %2169 = vmatmul.mubr.f32.gmra.mrb[0].mxu0 %v2059
    %v2170 = vpop.f32.mrb[0].mxu0
    %v2171 = vadd.f32 %v2010, %v2170
    %v2172 = vpop.f32.mrb[0].mxu0
    %2173 = vmatprep.mubr.f32.mxu0 0.0
    %2174 = vmatmul.mubr.f32.gmra.mrb[0].mxu0 %v2062
    %v2175 = vpop.f32.mrb[0].mxu0
    %v2176 = vadd.f32 %v2015, %v2175
    %v2177 = vpop.f32.mrb[0].mxu0
    %2178 = vmatprep.mubr.f32.mxu0 0.0
    %2179 = vmatmul.mubr.f32.gmra.mrb[0].mxu0 %v2065
    %v2180 = vpop.f32.mrb[0].mxu0
    %v2181 = vadd.f32 %v2020, %v2180
    %v2182 = vpop.f32.mrb[0].mxu0
    %2183 = vmatprep.mubr.f32.mxu0 0.0
    %2184 = vmatmul.mubr.f32.gmra.mrb[0].mxu0 %v2068
    %v2185 = vpop.f32.mrb[0].mxu0
    %v2186 = vadd.f32 %v2025, %v2185
    %v2187 = vpop.f32.mrb[0].mxu0
    %2188 = vmatprep.mubr.f32.mxu0 0.0
    %2189 = vmatmul.mubr.f32.gmra.mrb[0].mxu0 %v2071
    %v2190 = vpop.f32.mrb[0].mxu0
    %v2191 = vadd.f32 %v2030, %v2190
    %v2192 = vpop.f32.mrb[0].mxu0
    %2193 = vmatprep.mubr.f32.mxu0 0.0
    %2194 = vmatmul.mubr.f32.gmra.mrb[0].mxu0 %v2074
    %v2195 = vpop.f32.mrb[0].mxu0
    %v2196 = vadd.f32 %v2035, %v2195
    %v2197 = vpop.f32.mrb[0].mxu0
    %2198 = vmatprep.mubr.f32.mxu0 0.0
    %2199 = vmatmul.mubr.f32.gmra.mrb[0].mxu0 %v2077
    %v2200 = vpop.f32.mrb[0].mxu0
    %v2201 = vadd.f32 %v2040, %v2200
    %v2202 = vpop.f32.mrb[0].mxu0
    %2203 = vdwg.mxu0
    %v2204 = vld [vmem:[%s945] sm:$0xff]
    %v2205 = vld [vmem:[%s945 + $0x8] sm:$0xff]
    %v2206 = vld [vmem:[%s945 + $0x10] sm:$0xff]
    %v2207 = vld [vmem:[%s945 + $0x18] sm:$0xff]
    %v2208 = vld [vmem:[%s945 + $0x20] sm:$0xff]
    %v2209 = vld [vmem:[%s945 + $0x28] sm:$0xff]
    %v2210 = vld [vmem:[%s945 + $0x30] sm:$0xff]
    %v2211 = vld [vmem:[%s945 + $0x38] sm:$0xff]
    %v2212 = vld [vmem:[%s945 + $0x40] sm:$0xff]
    %v2213 = vld [vmem:[%s945 + $0x48] sm:$0xff]
    %v2214 = vld [vmem:[%s945 + $0x50] sm:$0xff]
    %v2215 = vld [vmem:[%s945 + $0x58] sm:$0xff]
    %v2216 = vld [vmem:[#allocation3 + $0x10] sm:$0xff]
    %v2217 = vld [vmem:[#allocation3 + $0x30] sm:$0xff]
    %v2218 = vld [vmem:[#allocation3 + $0x50] sm:$0xff]
    %v2219 = vld [vmem:[#allocation3 + $0x70] sm:$0xff]
    %v2220 = vld [vmem:[#allocation3 + $0x90] sm:$0xff]
    %v2221 = vld [vmem:[#allocation3 + $0xb0] sm:$0xff]
    %v2222 = vld [vmem:[#allocation3 + $0xd0] sm:$0xff]
    %v2223 = vld [vmem:[#allocation3 + $0xf0] sm:$0xff]
    %v2224 = vld [vmem:[#allocation3 + $0x110] sm:$0xff]
    %v2225 = vld [vmem:[#allocation3 + $0x130] sm:$0xff]
    %v2226 = vld [vmem:[#allocation3 + $0x150] sm:$0xff]
    %v2227 = vld [vmem:[#allocation3 + $0x170] sm:$0xff]
    %v2229 = vsel %vm622, %v2204, 0
    %v2232 = vsel %vm622, %v2205, 0
    %v2235 = vsel %vm622, %v2206, 0
    %v2238 = vsel %vm622, %v2207, 0
    %v2241 = vsel %vm622, %v2208, 0
    %v2244 = vsel %vm622, %v2209, 0
    %v2247 = vsel %vm622, %v2210, 0
    %v2250 = vsel %vm622, %v2211, 0
    %v2253 = vsel %vm622, %v2212, 0
    %v2256 = vsel %vm622, %v2213, 0
    %v2259 = vsel %vm622, %v2214, 0
    %v2262 = vsel %vm622, %v2215, 0
    %2264 = vmatprep.subr.mxu0 0.0
    %2265 = vmatpush1.msra.mxu0 %v2216
    %2266 = vmatprep.subr.mxu0 0.0
    %2267 = vmatpush1.msra.mxu0 %v2217
    %2268 = vmatprep.subr.mxu0 0.0
    %2269 = vmatpush1.msra.mxu0 %v2218
    %2270 = vmatprep.subr.mxu0 0.0
    %2271 = vmatpush1.msra.mxu0 %v2219
    %2272 = vmatprep.subr.mxu0 0.0
    %2273 = vmatpush1.msra.mxu0 %v2220
    %2274 = vmatprep.subr.mxu0 0.0
    %2275 = vmatpush1.msra.mxu0 %v2221
    %2276 = vmatprep.subr.mxu0 0.0
    %2277 = vmatpush1.msra.mxu0 %v2222
    %2278 = vmatprep.subr.mxu0 0.0
    %2279 = vmatpush1.msra.mxu0 %v2223
    %2280 = vmatprep.subr.mxu0 0.0
    %2281 = vmatpush1.msra.mxu0 %v2224
    %2282 = vmatprep.subr.mxu0 0.0
    %2283 = vmatpush1.msra.mxu0 %v2225
    %2284 = vmatprep.subr.mxu0 0.0
    %2285 = vmatpush1.msra.mxu0 %v2226
    %2286 = vmatprep.subr.mxu0 0.0
    %2287 = vmatpush1.msra.mxu0 %v2227
    %2288 = vmatprep.subr.mxu0 0.0
    %2289 = vmatpush1.msra.mxu0 0.0
    %2290 = vmatprep.subr.mxu0 0.0
    %2291 = vmatpush1.msra.mxu0 0.0
    %2292 = vmatprep.subr.mxu0 0.0
    %2293 = vmatpush1.msra.mxu0 0.0
    %2294 = vmatprep.subr.mxu0 0.0
    %2295 = vmatpush1.msra.mxu0 0.0
    %2296 = vmatprep.subr.mxu0 0.0
    %2297 = vmatpush1.msra.mxu0 0.0
    %2298 = vmatprep.subr.mxu0 0.0
    %2299 = vmatpush1.msra.mxu0 0.0
    %2300 = vmatprep.subr.mxu0 0.0
    %2301 = vmatpush1.msra.mxu0 0.0
    %2302 = vmatprep.subr.mxu0 0.0
    %2303 = vmatpush1.msra.mxu0 0.0
    %2304 = vmatprep.subr.mxu0 0.0
    %2305 = vmatpush1.msra.mxu0 0.0
    %2306 = vmatprep.subr.mxu0 0.0
    %2307 = vmatpush1.msra.mxu0 0.0
    %2308 = vmatprep.subr.mxu0 0.0
    %2309 = vmatpush1.msra.mxu0 0.0
    %2310 = vmatprep.subr.mxu0 0.0
    %2311 = vmatpush1.msra.mxu0 0.0
    %2312 = vmatprep.subr.mxu0 0.0
    %2313 = vmatpush1.msra.mxu0 0.0
    %2314 = vmatprep.subr.mxu0 0.0
    %2315 = vmatpush1.msra.mxu0 0.0
    %2316 = vmatprep.subr.mxu0 0.0
    %2317 = vmatpush1.msra.mxu0 0.0
    %2318 = vmatprep.subr.mxu0 0.0
    %2319 = vmatpush1.msra.mxu0 0.0
    %2320 = vmatprep.subr.mxu0 0.0
    %2321 = vmatpush1.msra.mxu0 0.0
    %2322 = vmatprep.subr.mxu0 0.0
    %2323 = vmatpush1.msra.mxu0 0.0
    %2324 = vmatprep.subr.mxu0 0.0
    %2325 = vmatpush1.msra.mxu0 0.0
    %2326 = vmatprep.subr.mxu0 0.0
    %2327 = vmatpush1.msra.mxu0 0.0
    %2328 = vmatprep.mubr.f32.mxu0 0.0
    %2329 = vmatmul.mubr.f32.gmra.mrb[0].mxu0 %v2229
    %v2330 = vpop.f32.mrb[0].mxu0
    %v2331 = vadd.f32 0.0, %v2330
    %v2332 = vpop.f32.mrb[0].mxu0
    %2333 = vmatprep.mubr.f32.mxu0 0.0
    %2334 = vmatmul.mubr.f32.gmra.mrb[0].mxu0 %v2232
    %v2335 = vpop.f32.mrb[0].mxu0
    %v2336 = vadd.f32 0.0, %v2335
    %v2337 = vpop.f32.mrb[0].mxu0
    %2338 = vmatprep.mubr.f32.mxu0 0.0
    %2339 = vmatmul.mubr.f32.gmra.mrb[0].mxu0 %v2235
    %v2340 = vpop.f32.mrb[0].mxu0
    %v2341 = vadd.f32 0.0, %v2340
    %v2342 = vpop.f32.mrb[0].mxu0
    %2343 = vmatprep.mubr.f32.mxu0 0.0
    %2344 = vmatmul.mubr.f32.gmra.mrb[0].mxu0 %v2238
    %v2345 = vpop.f32.mrb[0].mxu0
    %v2346 = vadd.f32 0.0, %v2345
    %v2347 = vpop.f32.mrb[0].mxu0
    %2348 = vmatprep.mubr.f32.mxu0 0.0
    %2349 = vmatmul.mubr.f32.gmra.mrb[0].mxu0 %v2241
    %v2350 = vpop.f32.mrb[0].mxu0
    %v2351 = vadd.f32 0.0, %v2350
    %v2352 = vpop.f32.mrb[0].mxu0
    %2353 = vmatprep.mubr.f32.mxu0 0.0
    %2354 = vmatmul.mubr.f32.gmra.mrb[0].mxu0 %v2244
    %v2355 = vpop.f32.mrb[0].mxu0
    %v2356 = vadd.f32 0.0, %v2355
    %v2357 = vpop.f32.mrb[0].mxu0
    %2358 = vmatprep.mubr.f32.mxu0 0.0
    %2359 = vmatmul.mubr.f32.gmra.mrb[0].mxu0 %v2247
    %v2360 = vpop.f32.mrb[0].mxu0
    %v2361 = vadd.f32 0.0, %v2360
    %v2362 = vpop.f32.mrb[0].mxu0
    %2363 = vmatprep.mubr.f32.mxu0 0.0
    %2364 = vmatmul.mubr.f32.gmra.mrb[0].mxu0 %v2250
    %v2365 = vpop.f32.mrb[0].mxu0
    %v2366 = vadd.f32 0.0, %v2365
    %v2367 = vpop.f32.mrb[0].mxu0
    %2368 = vmatprep.mubr.f32.mxu0 0.0
    %2369 = vmatmul.mubr.f32.gmra.mrb[0].mxu0 %v2253
    %v2370 = vpop.f32.mrb[0].mxu0
    %v2371 = vadd.f32 0.0, %v2370
    %v2372 = vpop.f32.mrb[0].mxu0
    %2373 = vmatprep.mubr.f32.mxu0 0.0
    %2374 = vmatmul.mubr.f32.gmra.mrb[0].mxu0 %v2256
    %v2375 = vpop.f32.mrb[0].mxu0
    %v2376 = vadd.f32 0.0, %v2375
    %v2377 = vpop.f32.mrb[0].mxu0
    %2378 = vmatprep.mubr.f32.mxu0 0.0
    %2379 = vmatmul.mubr.f32.gmra.mrb[0].mxu0 %v2259
    %v2380 = vpop.f32.mrb[0].mxu0
    %v2381 = vadd.f32 0.0, %v2380
    %v2382 = vpop.f32.mrb[0].mxu0
    %2383 = vmatprep.mubr.f32.mxu0 0.0
    %2384 = vmatmul.mubr.f32.gmra.mrb[0].mxu0 %v2262
    %v2385 = vpop.f32.mrb[0].mxu0
    %v2386 = vadd.f32 0.0, %v2385
    %v2387 = vpop.f32.mrb[0].mxu0
    %2388 = vdwg.mxu0
    %v2389 = vadd.f32 %v2146, %v2331
    %v2390 = vadd.f32 %v2151, %v2336
    %v2391 = vadd.f32 %v2156, %v2341
    %v2392 = vadd.f32 %v2161, %v2346
    %v2393 = vadd.f32 %v2166, %v2351
    %v2394 = vadd.f32 %v2171, %v2356
    %v2395 = vadd.f32 %v2176, %v2361
    %v2396 = vadd.f32 %v2181, %v2366
    %v2397 = vadd.f32 %v2186, %v2371
    %v2398 = vadd.f32 %v2191, %v2376
    %v2399 = vadd.f32 %v2196, %v2381
    %v2400 = vadd.f32 %v2201, %v2386
    %v2401 = vld [vmem:[%s1143] sm:$0xff]
    %v2402 = vld [vmem:[%s1143 + $0x8] sm:$0xff]
    %v2403 = vld [vmem:[%s1143 + $0x10] sm:$0xff]
    %v2404 = vld [vmem:[%s1143 + $0x18] sm:$0xff]
    %v2405 = vld [vmem:[%s1143 + $0x20] sm:$0xff]
    %v2406 = vld [vmem:[%s1143 + $0x28] sm:$0xff]
    %v2407 = vld [vmem:[%s1143 + $0x30] sm:$0xff]
    %v2408 = vld [vmem:[%s1143 + $0x38] sm:$0xff]
    %v2409 = vld [vmem:[%s1143 + $0x40] sm:$0xff]
    %v2410 = vld [vmem:[%s1143 + $0x48] sm:$0xff]
    %v2411 = vld [vmem:[%s1143 + $0x50] sm:$0xff]
    %v2412 = vld [vmem:[%s1143 + $0x58] sm:$0xff]
    %v2413 = vld [vmem:[#allocation3 + $0x18] sm:$0xff]
    %v2414 = vld [vmem:[#allocation3 + $0x38] sm:$0xff]
    %v2415 = vld [vmem:[#allocation3 + $0x58] sm:$0xff]
    %v2416 = vld [vmem:[#allocation3 + $0x78] sm:$0xff]
    %v2417 = vld [vmem:[#allocation3 + $0x98] sm:$0xff]
    %v2418 = vld [vmem:[#allocation3 + $0xb8] sm:$0xff]
    %v2419 = vld [vmem:[#allocation3 + $0xd8] sm:$0xff]
    %v2420 = vld [vmem:[#allocation3 + $0xf8] sm:$0xff]
    %v2421 = vld [vmem:[#allocation3 + $0x118] sm:$0xff]
    %v2422 = vld [vmem:[#allocation3 + $0x138] sm:$0xff]
    %v2423 = vld [vmem:[#allocation3 + $0x158] sm:$0xff]
    %v2424 = vld [vmem:[#allocation3 + $0x178] sm:$0xff]
    %v2426 = vsel %vm622, %v2401, 0
    %v2429 = vsel %vm622, %v2402, 0
    %v2432 = vsel %vm622, %v2403, 0
    %v2435 = vsel %vm622, %v2404, 0
    %v2438 = vsel %vm622, %v2405, 0
    %v2441 = vsel %vm622, %v2406, 0
    %v2444 = vsel %vm622, %v2407, 0
    %v2447 = vsel %vm622, %v2408, 0
    %v2450 = vsel %vm622, %v2409, 0
    %v2453 = vsel %vm622, %v2410, 0
    %v2456 = vsel %vm622, %v2411, 0
    %v2459 = vsel %vm622, %v2412, 0
    %2461 = vmatprep.subr.mxu0 0.0
    %2462 = vmatpush1.msra.mxu0 %v2413
    %2463 = vmatprep.subr.mxu0 0.0
    %2464 = vmatpush1.msra.mxu0 %v2414
    %2465 = vmatprep.subr.mxu0 0.0
    %2466 = vmatpush1.msra.mxu0 %v2415
    %2467 = vmatprep.subr.mxu0 0.0
    %2468 = vmatpush1.msra.mxu0 %v2416
    %2469 = vmatprep.subr.mxu0 0.0
    %2470 = vmatpush1.msra.mxu0 %v2417
    %2471 = vmatprep.subr.mxu0 0.0
    %2472 = vmatpush1.msra.mxu0 %v2418
    %2473 = vmatprep.subr.mxu0 0.0
    %2474 = vmatpush1.msra.mxu0 %v2419
    %2475 = vmatprep.subr.mxu0 0.0
    %2476 = vmatpush1.msra.mxu0 %v2420
    %2477 = vmatprep.subr.mxu0 0.0
    %2478 = vmatpush1.msra.mxu0 %v2421
    %2479 = vmatprep.subr.mxu0 0.0
    %2480 = vmatpush1.msra.mxu0 %v2422
    %2481 = vmatprep.subr.mxu0 0.0
    %2482 = vmatpush1.msra.mxu0 %v2423
    %2483 = vmatprep.subr.mxu0 0.0
    %2484 = vmatpush1.msra.mxu0 %v2424
    %2485 = vmatprep.subr.mxu0 0.0
    %2486 = vmatpush1.msra.mxu0 0.0
    %2487 = vmatprep.subr.mxu0 0.0
    %2488 = vmatpush1.msra.mxu0 0.0
    %2489 = vmatprep.subr.mxu0 0.0
    %2490 = vmatpush1.msra.mxu0 0.0
    %2491 = vmatprep.subr.mxu0 0.0
    %2492 = vmatpush1.msra.mxu0 0.0
    %2493 = vmatprep.subr.mxu0 0.0
    %2494 = vmatpush1.msra.mxu0 0.0
    %2495 = vmatprep.subr.mxu0 0.0
    %2496 = vmatpush1.msra.mxu0 0.0
    %2497 = vmatprep.subr.mxu0 0.0
    %2498 = vmatpush1.msra.mxu0 0.0
    %2499 = vmatprep.subr.mxu0 0.0
    %2500 = vmatpush1.msra.mxu0 0.0
    %2501 = vmatprep.subr.mxu0 0.0
    %2502 = vmatpush1.msra.mxu0 0.0
    %2503 = vmatprep.subr.mxu0 0.0
    %2504 = vmatpush1.msra.mxu0 0.0
    %2505 = vmatprep.subr.mxu0 0.0
    %2506 = vmatpush1.msra.mxu0 0.0
    %2507 = vmatprep.subr.mxu0 0.0
    %2508 = vmatpush1.msra.mxu0 0.0
    %2509 = vmatprep.subr.mxu0 0.0
    %2510 = vmatpush1.msra.mxu0 0.0
    %2511 = vmatprep.subr.mxu0 0.0
    %2512 = vmatpush1.msra.mxu0 0.0
    %2513 = vmatprep.subr.mxu0 0.0
    %2514 = vmatpush1.msra.mxu0 0.0
    %2515 = vmatprep.subr.mxu0 0.0
    %2516 = vmatpush1.msra.mxu0 0.0
    %2517 = vmatprep.subr.mxu0 0.0
    %2518 = vmatpush1.msra.mxu0 0.0
    %2519 = vmatprep.subr.mxu0 0.0
    %2520 = vmatpush1.msra.mxu0 0.0
    %2521 = vmatprep.subr.mxu0 0.0
    %2522 = vmatpush1.msra.mxu0 0.0
    %2523 = vmatprep.subr.mxu0 0.0
    %2524 = vmatpush1.msra.mxu0 0.0
    %2525 = vmatprep.mubr.f32.mxu0 0.0
    %2526 = vmatmul.mubr.f32.gmra.mrb[0].mxu0 %v2426
    %v2527 = vpop.f32.mrb[0].mxu0
    %v2528 = vadd.f32 0.0, %v2527
    %v2529 = vpop.f32.mrb[0].mxu0
    %2530 = vmatprep.mubr.f32.mxu0 0.0
    %2531 = vmatmul.mubr.f32.gmra.mrb[0].mxu0 %v2429
    %v2532 = vpop.f32.mrb[0].mxu0
    %v2533 = vadd.f32 0.0, %v2532
    %v2534 = vpop.f32.mrb[0].mxu0
    %2535 = vmatprep.mubr.f32.mxu0 0.0
    %2536 = vmatmul.mubr.f32.gmra.mrb[0].mxu0 %v2432
    %v2537 = vpop.f32.mrb[0].mxu0
    %v2538 = vadd.f32 0.0, %v2537
    %v2539 = vpop.f32.mrb[0].mxu0
    %2540 = vmatprep.mubr.f32.mxu0 0.0
    %2541 = vmatmul.mubr.f32.gmra.mrb[0].mxu0 %v2435
    %v2542 = vpop.f32.mrb[0].mxu0
    %v2543 = vadd.f32 0.0, %v2542
    %v2544 = vpop.f32.mrb[0].mxu0
    %2545 = vmatprep.mubr.f32.mxu0 0.0
    %2546 = vmatmul.mubr.f32.gmra.mrb[0].mxu0 %v2438
    %v2547 = vpop.f32.mrb[0].mxu0
    %v2548 = vadd.f32 0.0, %v2547
    %v2549 = vpop.f32.mrb[0].mxu0
    %2550 = vmatprep.mubr.f32.mxu0 0.0
    %2551 = vmatmul.mubr.f32.gmra.mrb[0].mxu0 %v2441
    %v2552 = vpop.f32.mrb[0].mxu0
    %v2553 = vadd.f32 0.0, %v2552
    %v2554 = vpop.f32.mrb[0].mxu0
    %2555 = vmatprep.mubr.f32.mxu0 0.0
    %2556 = vmatmul.mubr.f32.gmra.mrb[0].mxu0 %v2444
    %v2557 = vpop.f32.mrb[0].mxu0
    %v2558 = vadd.f32 0.0, %v2557
    %v2559 = vpop.f32.mrb[0].mxu0
    %2560 = vmatprep.mubr.f32.mxu0 0.0
    %2561 = vmatmul.mubr.f32.gmra.mrb[0].mxu0 %v2447
    %v2562 = vpop.f32.mrb[0].mxu0
    %v2563 = vadd.f32 0.0, %v2562
    %v2564 = vpop.f32.mrb[0].mxu0
    %2565 = vmatprep.mubr.f32.mxu0 0.0
    %2566 = vmatmul.mubr.f32.gmra.mrb[0].mxu0 %v2450
    %v2567 = vpop.f32.mrb[0].mxu0
    %v2568 = vadd.f32 0.0, %v2567
    %v2569 = vpop.f32.mrb[0].mxu0
    %2570 = vmatprep.mubr.f32.mxu0 0.0
    %2571 = vmatmul.mubr.f32.gmra.mrb[0].mxu0 %v2453
    %v2572 = vpop.f32.mrb[0].mxu0
    %v2573 = vadd.f32 0.0, %v2572
    %v2574 = vpop.f32.mrb[0].mxu0
    %2575 = vmatprep.mubr.f32.mxu0 0.0
    %2576 = vmatmul.mubr.f32.gmra.mrb[0].mxu0 %v2456
    %v2577 = vpop.f32.mrb[0].mxu0
    %v2578 = vadd.f32 0.0, %v2577
    %v2579 = vpop.f32.mrb[0].mxu0
    %2580 = vmatprep.mubr.f32.mxu0 0.0
    %2581 = vmatmul.mubr.f32.gmra.mrb[0].mxu0 %v2459
    %v2582 = vpop.f32.mrb[0].mxu0
    %v2583 = vadd.f32 0.0, %v2582
    %v2584 = vpop.f32.mrb[0].mxu0
    %2585 = vdwg.mxu0
    %v2586 = vadd.f32 %v2389, %v2528
    %v2587 = vadd.f32 %v2390, %v2533
    %v2588 = vadd.f32 %v2391, %v2538
    %v2589 = vadd.f32 %v2392, %v2543
    %v2590 = vadd.f32 %v2393, %v2548
    %v2591 = vadd.f32 %v2394, %v2553
    %v2592 = vadd.f32 %v2395, %v2558
    %v2593 = vadd.f32 %v2396, %v2563
    %v2594 = vadd.f32 %v2397, %v2568
    %v2595 = vadd.f32 %v2398, %v2573
    %v2596 = vadd.f32 %v2399, %v2578
    %v2597 = vadd.f32 %v2400, %v2583
    %vm2598 = vcmp.ge.f32.partialorder %v2586, 0.0
    %vm2599 = vcmp.ge.f32.partialorder %v2587, 0.0
    %vm2600 = vcmp.ge.f32.partialorder %v2588, 0.0
    %vm2601 = vcmp.ge.f32.partialorder %v2589, 0.0
    %vm2602 = vcmp.ge.f32.partialorder %v2590, 0.0
    %vm2603 = vcmp.ge.f32.partialorder %v2591, 0.0
    %vm2604 = vcmp.ge.f32.partialorder %v2592, 0.0
    %vm2605 = vcmp.ge.f32.partialorder %v2593, 0.0
    %vm2606 = vcmp.ge.f32.partialorder %v2594, 0.0
    %vm2607 = vcmp.ge.f32.partialorder %v2595, 0.0
    %vm2608 = vcmp.ge.f32.partialorder %v2596, 0.0
    %vm2609 = vcmp.ge.f32.partialorder %v2597, 0.0
    %v2610 = vmul.f32 %v2586, 0.2
    %v2611 = vmul.f32 %v2587, 0.2
    %v2612 = vmul.f32 %v2588, 0.2
    %v2613 = vmul.f32 %v2589, 0.2
    %v2614 = vmul.f32 %v2590, 0.2
    %v2615 = vmul.f32 %v2591, 0.2
    %v2616 = vmul.f32 %v2592, 0.2
    %v2617 = vmul.f32 %v2593, 0.2
    %v2618 = vmul.f32 %v2594, 0.2
    %v2619 = vmul.f32 %v2595, 0.2
    %v2620 = vmul.f32 %v2596, 0.2
    %v2621 = vmul.f32 %v2597, 0.2
    %v2622 = vsel %vm2598, %v2586, %v2610
    %v2623 = vsel %vm2599, %v2587, %v2611
    %v2624 = vsel %vm2600, %v2588, %v2612
    %v2625 = vsel %vm2601, %v2589, %v2613
    %v2626 = vsel %vm2602, %v2590, %v2614
    %v2627 = vsel %vm2603, %v2591, %v2615
    %v2628 = vsel %vm2604, %v2592, %v2616
    %v2629 = vsel %vm2605, %v2593, %v2617
    %v2630 = vsel %vm2606, %v2594, %v2618
    %v2631 = vsel %vm2607, %v2595, %v2619
    %v2632 = vsel %vm2608, %v2596, %v2620
    %v2633 = vsel %vm2609, %v2597, %v2621
    %2634 = vst [vmem:[#allocation2] sm:$0xff] %v2622
    %2635 = vst [vmem:[#allocation2 + $0x8] sm:$0xff] %v2623
    %2636 = vst [vmem:[#allocation2 + $0x10] sm:$0xff] %v2624
    %2637 = vst [vmem:[#allocation2 + $0x18] sm:$0xff] %v2625
    %2638 = vst [vmem:[#allocation2 + $0x20] sm:$0xff] %v2626
    %2639 = vst [vmem:[#allocation2 + $0x28] sm:$0xff] %v2627
    %2640 = vst [vmem:[#allocation2 + $0x30] sm:$0xff] %v2628
    %2641 = vst [vmem:[#allocation2 + $0x38] sm:$0xff] %v2629
    %2642 = vst [vmem:[#allocation2 + $0x40] sm:$0xff] %v2630
    %2643 = vst [vmem:[#allocation2 + $0x48] sm:$0xff] %v2631
    %2644 = vst [vmem:[#allocation2 + $0x50] sm:$0xff] %v2632
    %2645 = vst [vmem:[#allocation2 + $0x58] sm:$0xff] %v2633
    %v2646 = vld [vmem:[#allocation2] sm:$0xff]
    %v2647 = vld [vmem:[#allocation2 + $0x8] sm:$0xff]
    %v2648 = vld [vmem:[#allocation2 + $0x10] sm:$0xff]
    %v2649 = vld [vmem:[#allocation2 + $0x18] sm:$0xff]
    %v2650 = vld [vmem:[#allocation2 + $0x20] sm:$0xff]
    %v2651 = vld [vmem:[#allocation2 + $0x28] sm:$0xff]
    %v2652 = vld [vmem:[#allocation2 + $0x30] sm:$0xff]
    %v2653 = vld [vmem:[#allocation2 + $0x38] sm:$0xff]
    %v2654 = vld [vmem:[#allocation2 + $0x40] sm:$0xff]
    %v2655 = vld [vmem:[#allocation2 + $0x48] sm:$0xff]
    %v2656 = vld [vmem:[#allocation2 + $0x50] sm:$0xff]
    %v2657 = vld [vmem:[#allocation2 + $0x58] sm:$0xff]
    %v2658 = vpack.c.bf16 %v2647, %v2646
    %v2659 = vpack.c.bf16 %v2649, %v2648
    %v2660 = vpack.c.bf16 %v2651, %v2650
    %v2661 = vpack.c.bf16 %v2653, %v2652
    %v2662 = vpack.c.bf16 %v2655, %v2654
    %v2663 = vpack.c.bf16 %v2657, %v2656
    %s2664 = scalar_lea.vmem [#allocation10], 512
    %v2665 = vld [vmem:[%s2664] sm:$0xff]
    %v2666 = vld [vmem:[%s2664 + $0x8] sm:$0xff]
    %v2667 = vld [vmem:[%s2664 + $0x10] sm:$0xff]
    %v2668 = vld [vmem:[%s2664 + $0x18] sm:$0xff]
    %v2669 = vld [vmem:[%s2664 + $0x20] sm:$0xff]
    %v2670 = vld [vmem:[%s2664 + $0x28] sm:$0xff]
    %v2671 = vld [vmem:[%s2664 + $0x30] sm:$0xff]
    %v2672 = vld [vmem:[%s2664 + $0x38] sm:$0xff]
    %v2673 = vld [vmem:[%s2664 + $0x40] sm:$0xff]
    %v2674 = vld [vmem:[%s2664 + $0x48] sm:$0xff]
    %v2675 = vld [vmem:[%s2664 + $0x50] sm:$0xff]
    %v2676 = vld [vmem:[%s2664 + $0x58] sm:$0xff]
    %v2677 = vld [vmem:[%s2664 + $0x60] sm:$0xff]
    %v2678 = vld [vmem:[%s2664 + $0x68] sm:$0xff]
    %v2679 = vld [vmem:[%s2664 + $0x70] sm:$0xff]
    %v2680 = vld [vmem:[%s2664 + $0x78] sm:$0xff]
    %v2681 = vld [vmem:[%s2664 + $0x80] sm:$0xff]
    %v2682 = vld [vmem:[%s2664 + $0x88] sm:$0xff]
    %v2683 = vld [vmem:[%s2664 + $0x90] sm:$0xff]
    %v2684 = vld [vmem:[%s2664 + $0x98] sm:$0xff]
    %v2685 = vld [vmem:[%s2664 + $0xa0] sm:$0xff]
    %v2686 = vld [vmem:[%s2664 + $0xa8] sm:$0xff]
    %v2687 = vld [vmem:[%s2664 + $0xb0] sm:$0xff]
    %v2688 = vld [vmem:[%s2664 + $0xb8] sm:$0xff]
    %v2689 = vld [vmem:[%s2664 + $0xc0] sm:$0xff]
    %v2690 = vld [vmem:[%s2664 + $0xc8] sm:$0xff]
    %v2691 = vld [vmem:[%s2664 + $0xd0] sm:$0xff]
    %v2692 = vld [vmem:[%s2664 + $0xd8] sm:$0xff]
    %v2693 = vld [vmem:[%s2664 + $0xe0] sm:$0xff]
    %v2694 = vld [vmem:[%s2664 + $0xe8] sm:$0xff]
    %v2695 = vld [vmem:[%s2664 + $0xf0] sm:$0xff]
    %v2696 = vld [vmem:[%s2664 + $0xf8] sm:$0xff]
    %v2729 = vunpack.c.l.b16 %v2665
    %v2730 = vunpack.c.h.b16 %v2665
    %v2731 = vunpack.c.l.b16 %v2666
    %v2732 = vunpack.c.h.b16 %v2666
    %v2733 = vunpack.c.l.b16 %v2667
    %v2734 = vunpack.c.h.b16 %v2667
    %v2735 = vunpack.c.l.b16 %v2668
    %v2736 = vunpack.c.h.b16 %v2668
    %v2737 = vunpack.c.l.b16 %v2669
    %v2738 = vunpack.c.h.b16 %v2669
    %v2739 = vunpack.c.l.b16 %v2670
    %v2740 = vunpack.c.h.b16 %v2670
    %v2741 = vunpack.c.l.b16 %v2671
    %v2742 = vunpack.c.h.b16 %v2671
    %v2743 = vunpack.c.l.b16 %v2672
    %v2744 = vunpack.c.h.b16 %v2672
    %v2745 = vunpack.c.l.b16 %v2673
    %v2746 = vunpack.c.h.b16 %v2673
    %v2747 = vunpack.c.l.b16 %v2674
    %v2748 = vunpack.c.h.b16 %v2674
    %v2749 = vunpack.c.l.b16 %v2675
    %v2750 = vunpack.c.h.b16 %v2675
    %v2751 = vunpack.c.l.b16 %v2676
    %v2752 = vunpack.c.h.b16 %v2676
    %v2753 = vunpack.c.l.b16 %v2677
    %v2754 = vunpack.c.h.b16 %v2677
    %v2755 = vunpack.c.l.b16 %v2678
    %v2756 = vunpack.c.h.b16 %v2678
    %v2757 = vunpack.c.l.b16 %v2679
    %v2758 = vunpack.c.h.b16 %v2679
    %v2759 = vunpack.c.l.b16 %v2680
    %v2760 = vunpack.c.h.b16 %v2680
    %v2761 = vunpack.c.l.b16 %v2681
    %v2762 = vunpack.c.h.b16 %v2681
    %v2763 = vunpack.c.l.b16 %v2682
    %v2764 = vunpack.c.h.b16 %v2682
    %v2765 = vunpack.c.l.b16 %v2683
    %v2766 = vunpack.c.h.b16 %v2683
    %v2767 = vunpack.c.l.b16 %v2684
    %v2768 = vunpack.c.h.b16 %v2684
    %v2769 = vunpack.c.l.b16 %v2685
    %v2770 = vunpack.c.h.b16 %v2685
    %v2771 = vunpack.c.l.b16 %v2686
    %v2772 = vunpack.c.h.b16 %v2686
    %v2773 = vunpack.c.l.b16 %v2687
    %v2774 = vunpack.c.h.b16 %v2687
    %v2775 = vunpack.c.l.b16 %v2688
    %v2776 = vunpack.c.h.b16 %v2688
    %v2777 = vunpack.c.l.b16 %v2689
    %v2778 = vunpack.c.h.b16 %v2689
    %v2779 = vunpack.c.l.b16 %v2690
    %v2780 = vunpack.c.h.b16 %v2690
    %v2781 = vunpack.c.l.b16 %v2691
    %v2782 = vunpack.c.h.b16 %v2691
    %v2783 = vunpack.c.l.b16 %v2692
    %v2784 = vunpack.c.h.b16 %v2692
    %v2785 = vunpack.c.l.b16 %v2693
    %v2786 = vunpack.c.h.b16 %v2693
    %v2787 = vunpack.c.l.b16 %v2694
    %v2788 = vunpack.c.h.b16 %v2694
    %v2789 = vunpack.c.l.b16 %v2695
    %v2790 = vunpack.c.h.b16 %v2695
    %v2791 = vunpack.c.l.b16 %v2696
    %v2792 = vunpack.c.h.b16 %v2696
    %v2793 = vpack.c.b16 %v2733, %v2729
    %v2794 = vpack.c.b16 %v2734, %v2730
    %v2795 = vpack.c.b16 %v2735, %v2731
    %v2796 = vpack.c.b16 %v2736, %v2732
    %v2797 = vpack.c.b16 %v2741, %v2737
    %v2798 = vpack.c.b16 %v2742, %v2738
    %v2799 = vpack.c.b16 %v2743, %v2739
    %v2800 = vpack.c.b16 %v2744, %v2740
    %v2801 = vpack.c.b16 %v2749, %v2745
    %v2802 = vpack.c.b16 %v2750, %v2746
    %v2803 = vpack.c.b16 %v2751, %v2747
    %v2804 = vpack.c.b16 %v2752, %v2748
    %v2805 = vpack.c.b16 %v2757, %v2753
    %v2806 = vpack.c.b16 %v2758, %v2754
    %v2807 = vpack.c.b16 %v2759, %v2755
    %v2808 = vpack.c.b16 %v2760, %v2756
    %v2809 = vpack.c.b16 %v2765, %v2761
    %v2810 = vpack.c.b16 %v2766, %v2762
    %v2811 = vpack.c.b16 %v2767, %v2763
    %v2812 = vpack.c.b16 %v2768, %v2764
    %v2813 = vpack.c.b16 %v2773, %v2769
    %v2814 = vpack.c.b16 %v2774, %v2770
    %v2815 = vpack.c.b16 %v2775, %v2771
    %v2816 = vpack.c.b16 %v2776, %v2772
    %v2817 = vpack.c.b16 %v2781, %v2777
    %v2818 = vpack.c.b16 %v2782, %v2778
    %v2819 = vpack.c.b16 %v2783, %v2779
    %v2820 = vpack.c.b16 %v2784, %v2780
    %v2821 = vpack.c.b16 %v2789, %v2785
    %v2822 = vpack.c.b16 %v2790, %v2786
    %v2823 = vpack.c.b16 %v2791, %v2787
    %v2824 = vpack.c.b16 %v2792, %v2788
    %2857 = vmatprep.subr.bf16.mxu0 %v2794
    %2858 = vmatpush1.bf16.msra.mxu0 %v2793
    %2859 = vmatprep.subr.bf16.mxu0 %v2798
    %2860 = vmatpush1.bf16.msra.mxu0 %v2797
    %2861 = vmatprep.subr.bf16.mxu0 %v2802
    %2862 = vmatpush1.bf16.msra.mxu0 %v2801
    %2863 = vmatprep.subr.bf16.mxu0 %v2806
    %2864 = vmatpush1.bf16.msra.mxu0 %v2805
    %2865 = vmatprep.subr.bf16.mxu0 %v2810
    %2866 = vmatpush1.bf16.msra.mxu0 %v2809
    %2867 = vmatprep.subr.bf16.mxu0 %v2814
    %2868 = vmatpush1.bf16.msra.mxu0 %v2813
    %2869 = vmatprep.subr.bf16.mxu0 %v2818
    %2870 = vmatpush1.bf16.msra.mxu0 %v2817
    %2871 = vmatprep.subr.bf16.mxu0 %v2822
    %2872 = vmatpush1.bf16.msra.mxu0 %v2821
    %2873 = vmatprep.subr.bf16.mxu0 0
    %2874 = vmatpush1.bf16.msra.mxu0 0
    %2875 = vmatprep.subr.bf16.mxu0 0
    %2876 = vmatpush1.bf16.msra.mxu0 0
    %2877 = vmatprep.subr.bf16.mxu0 0
    %2878 = vmatpush1.bf16.msra.mxu0 0
    %2879 = vmatprep.subr.bf16.mxu0 0
    %2880 = vmatpush1.bf16.msra.mxu0 0
    %2881 = vmatprep.subr.bf16.mxu0 0
    %2882 = vmatpush1.bf16.msra.mxu0 0
    %2883 = vmatprep.subr.bf16.mxu0 0
    %2884 = vmatpush1.bf16.msra.mxu0 0
    %2885 = vmatprep.subr.bf16.mxu0 0
    %2886 = vmatpush1.bf16.msra.mxu0 0
    %2887 = vmatprep.subr.bf16.mxu0 0
    %2888 = vmatpush1.bf16.msra.mxu0 0
    %2889 = vmatprep.mubr.bf16.mxu0 0
    %2890 = vmatmul.mubr.bf16.gmra.mrb[0].mxu0 %v2658
    %v2891 = vpop.f32.mrb[0].mxu0
    %v2892 = vadd.f32 0.0, %v2891
    %v2893 = vpop.f32.mrb[0].mxu0
    %v2894 = vadd.f32 0.0, %v2893
    %v2895 = vpop.f32.mrb[0].mxu0
    %v2896 = vadd.f32 0.0, %v2895
    %v2897 = vpop.f32.mrb[0].mxu0
    %v2898 = vadd.f32 0.0, %v2897
    %2899 = vmatprep.mubr.bf16.mxu0 0
    %2900 = vmatmul.mubr.bf16.gmra.mrb[0].mxu0 %v2659
    %v2901 = vpop.f32.mrb[0].mxu0
    %v2902 = vadd.f32 0.0, %v2901
    %v2903 = vpop.f32.mrb[0].mxu0
    %v2904 = vadd.f32 0.0, %v2903
    %v2905 = vpop.f32.mrb[0].mxu0
    %v2906 = vadd.f32 0.0, %v2905
    %v2907 = vpop.f32.mrb[0].mxu0
    %v2908 = vadd.f32 0.0, %v2907
    %2909 = vmatprep.mubr.bf16.mxu0 0
    %2910 = vmatmul.mubr.bf16.gmra.mrb[0].mxu0 %v2660
    %v2911 = vpop.f32.mrb[0].mxu0
    %v2912 = vadd.f32 0.0, %v2911
    %v2913 = vpop.f32.mrb[0].mxu0
    %v2914 = vadd.f32 0.0, %v2913
    %v2915 = vpop.f32.mrb[0].mxu0
    %v2916 = vadd.f32 0.0, %v2915
    %v2917 = vpop.f32.mrb[0].mxu0
    %v2918 = vadd.f32 0.0, %v2917
    %2919 = vmatprep.mubr.bf16.mxu0 0
    %2920 = vmatmul.mubr.bf16.gmra.mrb[0].mxu0 %v2661
    %v2921 = vpop.f32.mrb[0].mxu0
    %v2922 = vadd.f32 0.0, %v2921
    %v2923 = vpop.f32.mrb[0].mxu0
    %v2924 = vadd.f32 0.0, %v2923
    %v2925 = vpop.f32.mrb[0].mxu0
    %v2926 = vadd.f32 0.0, %v2925
    %v2927 = vpop.f32.mrb[0].mxu0
    %v2928 = vadd.f32 0.0, %v2927
    %2929 = vmatprep.mubr.bf16.mxu0 0
    %2930 = vmatmul.mubr.bf16.gmra.mrb[0].mxu0 %v2662
    %v2931 = vpop.f32.mrb[0].mxu0
    %v2932 = vadd.f32 0.0, %v2931
    %v2933 = vpop.f32.mrb[0].mxu0
    %v2934 = vadd.f32 0.0, %v2933
    %v2935 = vpop.f32.mrb[0].mxu0
    %v2936 = vadd.f32 0.0, %v2935
    %v2937 = vpop.f32.mrb[0].mxu0
    %v2938 = vadd.f32 0.0, %v2937
    %2939 = vmatprep.mubr.bf16.mxu0 0
    %2940 = vmatmul.mubr.bf16.gmra.mrb[0].mxu0 %v2663
    %v2941 = vpop.f32.mrb[0].mxu0
    %v2942 = vadd.f32 0.0, %v2941
    %v2943 = vpop.f32.mrb[0].mxu0
    %v2944 = vadd.f32 0.0, %v2943
    %v2945 = vpop.f32.mrb[0].mxu0
    %v2946 = vadd.f32 0.0, %v2945
    %v2947 = vpop.f32.mrb[0].mxu0
    %v2948 = vadd.f32 0.0, %v2947
    %2949 = vdwg.mxu0
    %2950 = vmatprep.subr.bf16.mxu0 %v2796
    %2951 = vmatpush1.bf16.msra.mxu0 %v2795
    %2952 = vmatprep.subr.bf16.mxu0 %v2800
    %2953 = vmatpush1.bf16.msra.mxu0 %v2799
    %2954 = vmatprep.subr.bf16.mxu0 %v2804
    %2955 = vmatpush1.bf16.msra.mxu0 %v2803
    %2956 = vmatprep.subr.bf16.mxu0 %v2808
    %2957 = vmatpush1.bf16.msra.mxu0 %v2807
    %2958 = vmatprep.subr.bf16.mxu0 %v2812
    %2959 = vmatpush1.bf16.msra.mxu0 %v2811
    %2960 = vmatprep.subr.bf16.mxu0 %v2816
    %2961 = vmatpush1.bf16.msra.mxu0 %v2815
    %2962 = vmatprep.subr.bf16.mxu0 %v2820
    %2963 = vmatpush1.bf16.msra.mxu0 %v2819
    %2964 = vmatprep.subr.bf16.mxu0 %v2824
    %2965 = vmatpush1.bf16.msra.mxu0 %v2823
    %2966 = vmatprep.subr.bf16.mxu0 0
    %2967 = vmatpush1.bf16.msra.mxu0 0
    %2968 = vmatprep.subr.bf16.mxu0 0
    %2969 = vmatpush1.bf16.msra.mxu0 0
    %2970 = vmatprep.subr.bf16.mxu0 0
    %2971 = vmatpush1.bf16.msra.mxu0 0
    %2972 = vmatprep.subr.bf16.mxu0 0
    %2973 = vmatpush1.bf16.msra.mxu0 0
    %2974 = vmatprep.subr.bf16.mxu0 0
    %2975 = vmatpush1.bf16.msra.mxu0 0
    %2976 = vmatprep.subr.bf16.mxu0 0
    %2977 = vmatpush1.bf16.msra.mxu0 0
    %2978 = vmatprep.subr.bf16.mxu0 0
    %2979 = vmatpush1.bf16.msra.mxu0 0
    %2980 = vmatprep.subr.bf16.mxu0 0
    %2981 = vmatpush1.bf16.msra.mxu0 0
    %2982 = vmatprep.mubr.bf16.mxu0 0
    %2983 = vmatmul.mubr.bf16.gmra.mrb[0].mxu0 %v2658
    %v2984 = vpop.f32.mrb[0].mxu0
    %v2985 = vadd.f32 0.0, %v2984
    %v2986 = vpop.f32.mrb[0].mxu0
    %v2987 = vadd.f32 0.0, %v2986
    %v2988 = vpop.f32.mrb[0].mxu0
    %v2989 = vadd.f32 0.0, %v2988
    %v2990 = vpop.f32.mrb[0].mxu0
    %v2991 = vadd.f32 0.0, %v2990
    %2992 = vmatprep.mubr.bf16.mxu0 0
    %2993 = vmatmul.mubr.bf16.gmra.mrb[0].mxu0 %v2659
    %v2994 = vpop.f32.mrb[0].mxu0
    %v2995 = vadd.f32 0.0, %v2994
    %v2996 = vpop.f32.mrb[0].mxu0
    %v2997 = vadd.f32 0.0, %v2996
    %v2998 = vpop.f32.mrb[0].mxu0
    %v2999 = vadd.f32 0.0, %v2998
    %v3000 = vpop.f32.mrb[0].mxu0
    %v3001 = vadd.f32 0.0, %v3000
    %3002 = vmatprep.mubr.bf16.mxu0 0
    %3003 = vmatmul.mubr.bf16.gmra.mrb[0].mxu0 %v2660
    %v3004 = vpop.f32.mrb[0].mxu0
    %v3005 = vadd.f32 0.0, %v3004
    %v3006 = vpop.f32.mrb[0].mxu0
    %v3007 = vadd.f32 0.0, %v3006
    %v3008 = vpop.f32.mrb[0].mxu0
    %v3009 = vadd.f32 0.0, %v3008
    %v3010 = vpop.f32.mrb[0].mxu0
    %v3011 = vadd.f32 0.0, %v3010
    %3012 = vmatprep.mubr.bf16.mxu0 0
    %3013 = vmatmul.mubr.bf16.gmra.mrb[0].mxu0 %v2661
    %v3014 = vpop.f32.mrb[0].mxu0
    %v3015 = vadd.f32 0.0, %v3014
    %v3016 = vpop.f32.mrb[0].mxu0
    %v3017 = vadd.f32 0.0, %v3016
    %v3018 = vpop.f32.mrb[0].mxu0
    %v3019 = vadd.f32 0.0, %v3018
    %v3020 = vpop.f32.mrb[0].mxu0
    %v3021 = vadd.f32 0.0, %v3020
    %3022 = vmatprep.mubr.bf16.mxu0 0
    %3023 = vmatmul.mubr.bf16.gmra.mrb[0].mxu0 %v2662
    %v3024 = vpop.f32.mrb[0].mxu0
    %v3025 = vadd.f32 0.0, %v3024
    %v3026 = vpop.f32.mrb[0].mxu0
    %v3027 = vadd.f32 0.0, %v3026
    %v3028 = vpop.f32.mrb[0].mxu0
    %v3029 = vadd.f32 0.0, %v3028
    %v3030 = vpop.f32.mrb[0].mxu0
    %v3031 = vadd.f32 0.0, %v3030
    %3032 = vmatprep.mubr.bf16.mxu0 0
    %3033 = vmatmul.mubr.bf16.gmra.mrb[0].mxu0 %v2663
    %v3034 = vpop.f32.mrb[0].mxu0
    %v3035 = vadd.f32 0.0, %v3034
    %v3036 = vpop.f32.mrb[0].mxu0
    %v3037 = vadd.f32 0.0, %v3036
    %v3038 = vpop.f32.mrb[0].mxu0
    %v3039 = vadd.f32 0.0, %v3038
    %v3040 = vpop.f32.mrb[0].mxu0
    %v3041 = vadd.f32 0.0, %v3040
    %3042 = vdwg.mxu0
    %3043 = vst [vmem:[#allocation3] sm:$0xff] %v2892
    %3044 = vst [vmem:[#allocation3 + $0x8] sm:$0xff] %v2894
    %3045 = vst [vmem:[#allocation3 + $0x10] sm:$0xff] %v2985
    %3046 = vst [vmem:[#allocation3 + $0x18] sm:$0xff] %v2987
    %3047 = vst [vmem:[#allocation3 + $0x20] sm:$0xff] %v2896
    %3048 = vst [vmem:[#allocation3 + $0x28] sm:$0xff] %v2898
    %3049 = vst [vmem:[#allocation3 + $0x30] sm:$0xff] %v2989
    %3050 = vst [vmem:[#allocation3 + $0x38] sm:$0xff] %v2991
    %3051 = vst [vmem:[#allocation3 + $0x40] sm:$0xff] %v2902
    %3052 = vst [vmem:[#allocation3 + $0x48] sm:$0xff] %v2904
    %3053 = vst [vmem:[#allocation3 + $0x50] sm:$0xff] %v2995
    %3054 = vst [vmem:[#allocation3 + $0x58] sm:$0xff] %v2997
    %3055 = vst [vmem:[#allocation3 + $0x60] sm:$0xff] %v2906
    %3056 = vst [vmem:[#allocation3 + $0x68] sm:$0xff] %v2908
    %3057 = vst [vmem:[#allocation3 + $0x70] sm:$0xff] %v2999
    %3058 = vst [vmem:[#allocation3 + $0x78] sm:$0xff] %v3001
    %3059 = vst [vmem:[#allocation3 + $0x80] sm:$0xff] %v2912
    %3060 = vst [vmem:[#allocation3 + $0x88] sm:$0xff] %v2914
    %3061 = vst [vmem:[#allocation3 + $0x90] sm:$0xff] %v3005
    %3062 = vst [vmem:[#allocation3 + $0x98] sm:$0xff] %v3007
    %3063 = vst [vmem:[#allocation3 + $0xa0] sm:$0xff] %v2916
    %3064 = vst [vmem:[#allocation3 + $0xa8] sm:$0xff] %v2918
    %3065 = vst [vmem:[#allocation3 + $0xb0] sm:$0xff] %v3009
    %3066 = vst [vmem:[#allocation3 + $0xb8] sm:$0xff] %v3011
    %3067 = vst [vmem:[#allocation3 + $0xc0] sm:$0xff] %v2922
    %3068 = vst [vmem:[#allocation3 + $0xc8] sm:$0xff] %v2924
    %3069 = vst [vmem:[#allocation3 + $0xd0] sm:$0xff] %v3015
    %3070 = vst [vmem:[#allocation3 + $0xd8] sm:$0xff] %v3017
    %3071 = vst [vmem:[#allocation3 + $0xe0] sm:$0xff] %v2926
    %3072 = vst [vmem:[#allocation3 + $0xe8] sm:$0xff] %v2928
    %3073 = vst [vmem:[#allocation3 + $0xf0] sm:$0xff] %v3019
    %3074 = vst [vmem:[#allocation3 + $0xf8] sm:$0xff] %v3021
    %3075 = vst [vmem:[#allocation3 + $0x100] sm:$0xff] %v2932
    %3076 = vst [vmem:[#allocation3 + $0x108] sm:$0xff] %v2934
    %3077 = vst [vmem:[#allocation3 + $0x110] sm:$0xff] %v3025
    %3078 = vst [vmem:[#allocation3 + $0x118] sm:$0xff] %v3027
    %3079 = vst [vmem:[#allocation3 + $0x120] sm:$0xff] %v2936
    %3080 = vst [vmem:[#allocation3 + $0x128] sm:$0xff] %v2938
    %3081 = vst [vmem:[#allocation3 + $0x130] sm:$0xff] %v3029
    %3082 = vst [vmem:[#allocation3 + $0x138] sm:$0xff] %v3031
    %3083 = vst [vmem:[#allocation3 + $0x140] sm:$0xff] %v2942
    %3084 = vst [vmem:[#allocation3 + $0x148] sm:$0xff] %v2944
    %3085 = vst [vmem:[#allocation3 + $0x150] sm:$0xff] %v3035
    %3086 = vst [vmem:[#allocation3 + $0x158] sm:$0xff] %v3037
    %3087 = vst [vmem:[#allocation3 + $0x160] sm:$0xff] %v2946
    %3088 = vst [vmem:[#allocation3 + $0x168] sm:$0xff] %v2948
    %3089 = vst [vmem:[#allocation3 + $0x170] sm:$0xff] %v3039
    %3090 = vst [vmem:[#allocation3 + $0x178] sm:$0xff] %v3041
    %v3091 = vld [vmem:[#allocation4] sm:$0xff]
    %v3092 = vld [vmem:[#allocation4 + $0x8] sm:$0xff]
    %v3093 = vld [vmem:[#allocation4 + $0x10] sm:$0xff]
    %v3094 = vld [vmem:[#allocation4 + $0x18] sm:$0xff]
    %v3095 = vld [vmem:[#allocation4 + $0x20] sm:$0xff]
    %v3096 = vld [vmem:[#allocation4 + $0x28] sm:$0xff]
    %v3097 = vld [vmem:[#allocation4 + $0x30] sm:$0xff]
    %v3098 = vld [vmem:[#allocation4 + $0x38] sm:$0xff]
    %v3099 = vld [vmem:[#allocation4 + $0x40] sm:$0xff]
    %v3100 = vld [vmem:[#allocation4 + $0x48] sm:$0xff]
    %v3101 = vld [vmem:[#allocation4 + $0x50] sm:$0xff]
    %v3102 = vld [vmem:[#allocation4 + $0x58] sm:$0xff]
    %v3103 = vld [vmem:[#allocation3] sm:$0xff]
    %v3104 = vld [vmem:[#allocation3 + $0x20] sm:$0xff]
    %v3105 = vld [vmem:[#allocation3 + $0x40] sm:$0xff]
    %v3106 = vld [vmem:[#allocation3 + $0x60] sm:$0xff]
    %v3107 = vld [vmem:[#allocation3 + $0x80] sm:$0xff]
    %v3108 = vld [vmem:[#allocation3 + $0xa0] sm:$0xff]
    %v3109 = vld [vmem:[#allocation3 + $0xc0] sm:$0xff]
    %v3110 = vld [vmem:[#allocation3 + $0xe0] sm:$0xff]
    %v3111 = vld [vmem:[#allocation3 + $0x100] sm:$0xff]
    %v3112 = vld [vmem:[#allocation3 + $0x120] sm:$0xff]
    %v3113 = vld [vmem:[#allocation3 + $0x140] sm:$0xff]
    %v3114 = vld [vmem:[#allocation3 + $0x160] sm:$0xff]
    %v3115 = vld [vmem:[%s597] sm:$0xff]
    %v3116 = vld [vmem:[%s597 + $0x8] sm:$0xff]
    %v3117 = vld [vmem:[%s597 + $0x10] sm:$0xff]
    %v3118 = vld [vmem:[%s597 + $0x18] sm:$0xff]
    %v3119 = vld [vmem:[%s597 + $0x20] sm:$0xff]
    %v3120 = vld [vmem:[%s597 + $0x28] sm:$0xff]
    %v3121 = vld [vmem:[%s597 + $0x30] sm:$0xff]
    %v3122 = vld [vmem:[%s597 + $0x38] sm:$0xff]
    %v3123 = vld [vmem:[%s597 + $0x40] sm:$0xff]
    %v3124 = vld [vmem:[%s597 + $0x48] sm:$0xff]
    %v3125 = vld [vmem:[%s597 + $0x50] sm:$0xff]
    %v3126 = vld [vmem:[%s597 + $0x58] sm:$0xff]
    %v3127 = vld [vmem:[#allocation3 + $0x8] sm:$0xff]
    %v3128 = vld [vmem:[#allocation3 + $0x28] sm:$0xff]
    %v3129 = vld [vmem:[#allocation3 + $0x48] sm:$0xff]
    %v3130 = vld [vmem:[#allocation3 + $0x68] sm:$0xff]
    %v3131 = vld [vmem:[#allocation3 + $0x88] sm:$0xff]
    %v3132 = vld [vmem:[#allocation3 + $0xa8] sm:$0xff]
    %v3133 = vld [vmem:[#allocation3 + $0xc8] sm:$0xff]
    %v3134 = vld [vmem:[#allocation3 + $0xe8] sm:$0xff]
    %v3135 = vld [vmem:[#allocation3 + $0x108] sm:$0xff]
    %v3136 = vld [vmem:[#allocation3 + $0x128] sm:$0xff]
    %v3137 = vld [vmem:[#allocation3 + $0x148] sm:$0xff]
    %v3138 = vld [vmem:[#allocation3 + $0x168] sm:$0xff]
    %v3140 = vsel %vm622, %v3115, 0
    %v3143 = vsel %vm622, %v3116, 0
    %v3146 = vsel %vm622, %v3117, 0
    %v3149 = vsel %vm622, %v3118, 0
    %v3152 = vsel %vm622, %v3119, 0
    %v3155 = vsel %vm622, %v3120, 0
    %v3158 = vsel %vm622, %v3121, 0
    %v3161 = vsel %vm622, %v3122, 0
    %v3164 = vsel %vm622, %v3123, 0
    %v3167 = vsel %vm622, %v3124, 0
    %v3170 = vsel %vm622, %v3125, 0
    %v3173 = vsel %vm622, %v3126, 0
    %3175 = vmatprep.subr.mxu0 0.0
    %3176 = vmatpush1.msra.mxu0 %v3127
    %3177 = vmatprep.subr.mxu0 0.0
    %3178 = vmatpush1.msra.mxu0 %v3128
    %3179 = vmatprep.subr.mxu0 0.0
    %3180 = vmatpush1.msra.mxu0 %v3129
    %3181 = vmatprep.subr.mxu0 0.0
    %3182 = vmatpush1.msra.mxu0 %v3130
    %3183 = vmatprep.subr.mxu0 0.0
    %3184 = vmatpush1.msra.mxu0 %v3131
    %3185 = vmatprep.subr.mxu0 0.0
    %3186 = vmatpush1.msra.mxu0 %v3132
    %3187 = vmatprep.subr.mxu0 0.0
    %3188 = vmatpush1.msra.mxu0 %v3133
    %3189 = vmatprep.subr.mxu0 0.0
    %3190 = vmatpush1.msra.mxu0 %v3134
    %3191 = vmatprep.subr.mxu0 0.0
    %3192 = vmatpush1.msra.mxu0 %v3135
    %3193 = vmatprep.subr.mxu0 0.0
    %3194 = vmatpush1.msra.mxu0 %v3136
    %3195 = vmatprep.subr.mxu0 0.0
    %3196 = vmatpush1.msra.mxu0 %v3137
    %3197 = vmatprep.subr.mxu0 0.0
    %3198 = vmatpush1.msra.mxu0 %v3138
    %3199 = vmatprep.subr.mxu0 0.0
    %3200 = vmatpush1.msra.mxu0 0.0
    %3201 = vmatprep.subr.mxu0 0.0
    %3202 = vmatpush1.msra.mxu0 0.0
    %3203 = vmatprep.subr.mxu0 0.0
    %3204 = vmatpush1.msra.mxu0 0.0
    %3205 = vmatprep.subr.mxu0 0.0
    %3206 = vmatpush1.msra.mxu0 0.0
    %3207 = vmatprep.subr.mxu0 0.0
    %3208 = vmatpush1.msra.mxu0 0.0
    %3209 = vmatprep.subr.mxu0 0.0
    %3210 = vmatpush1.msra.mxu0 0.0
    %3211 = vmatprep.subr.mxu0 0.0
    %3212 = vmatpush1.msra.mxu0 0.0
    %3213 = vmatprep.subr.mxu0 0.0
    %3214 = vmatpush1.msra.mxu0 0.0
    %3215 = vmatprep.subr.mxu0 0.0
    %3216 = vmatpush1.msra.mxu0 0.0
    %3217 = vmatprep.subr.mxu0 0.0
    %3218 = vmatpush1.msra.mxu0 0.0
    %3219 = vmatprep.subr.mxu0 0.0
    %3220 = vmatpush1.msra.mxu0 0.0
    %3221 = vmatprep.subr.mxu0 0.0
    %3222 = vmatpush1.msra.mxu0 0.0
    %3223 = vmatprep.subr.mxu0 0.0
    %3224 = vmatpush1.msra.mxu0 0.0
    %3225 = vmatprep.subr.mxu0 0.0
    %3226 = vmatpush1.msra.mxu0 0.0
    %3227 = vmatprep.subr.mxu0 0.0
    %3228 = vmatpush1.msra.mxu0 0.0
    %3229 = vmatprep.subr.mxu0 0.0
    %3230 = vmatpush1.msra.mxu0 0.0
    %3231 = vmatprep.subr.mxu0 0.0
    %3232 = vmatpush1.msra.mxu0 0.0
    %3233 = vmatprep.subr.mxu0 0.0
    %3234 = vmatpush1.msra.mxu0 0.0
    %3235 = vmatprep.subr.mxu0 0.0
    %3236 = vmatpush1.msra.mxu0 0.0
    %3237 = vmatprep.subr.mxu0 0.0
    %3238 = vmatpush1.msra.mxu0 0.0
    %3239 = vmatprep.mubr.f32.mxu0 0.0
    %3240 = vmatmul.mubr.f32.gmra.mrb[0].mxu0 %v3140
    %v3241 = vpop.f32.mrb[0].mxu0
    %v3242 = vadd.f32 0.0, %v3241
    %v3243 = vpop.f32.mrb[0].mxu0
    %3244 = vmatprep.mubr.f32.mxu0 0.0
    %3245 = vmatmul.mubr.f32.gmra.mrb[0].mxu0 %v3143
    %v3246 = vpop.f32.mrb[0].mxu0
    %v3247 = vadd.f32 0.0, %v3246
    %v3248 = vpop.f32.mrb[0].mxu0
    %3249 = vmatprep.mubr.f32.mxu0 0.0
    %3250 = vmatmul.mubr.f32.gmra.mrb[0].mxu0 %v3146
    %v3251 = vpop.f32.mrb[0].mxu0
    %v3252 = vadd.f32 0.0, %v3251
    %v3253 = vpop.f32.mrb[0].mxu0
    %3254 = vmatprep.mubr.f32.mxu0 0.0
    %3255 = vmatmul.mubr.f32.gmra.mrb[0].mxu0 %v3149
    %v3256 = vpop.f32.mrb[0].mxu0
    %v3257 = vadd.f32 0.0, %v3256
    %v3258 = vpop.f32.mrb[0].mxu0
    %3259 = vmatprep.mubr.f32.mxu0 0.0
    %3260 = vmatmul.mubr.f32.gmra.mrb[0].mxu0 %v3152
    %v3261 = vpop.f32.mrb[0].mxu0
    %v3262 = vadd.f32 0.0, %v3261
    %v3263 = vpop.f32.mrb[0].mxu0
    %3264 = vmatprep.mubr.f32.mxu0 0.0
    %3265 = vmatmul.mubr.f32.gmra.mrb[0].mxu0 %v3155
    %v3266 = vpop.f32.mrb[0].mxu0
    %v3267 = vadd.f32 0.0, %v3266
    %v3268 = vpop.f32.mrb[0].mxu0
    %3269 = vmatprep.mubr.f32.mxu0 0.0
    %3270 = vmatmul.mubr.f32.gmra.mrb[0].mxu0 %v3158
    %v3271 = vpop.f32.mrb[0].mxu0
    %v3272 = vadd.f32 0.0, %v3271
    %v3273 = vpop.f32.mrb[0].mxu0
    %3274 = vmatprep.mubr.f32.mxu0 0.0
    %3275 = vmatmul.mubr.f32.gmra.mrb[0].mxu0 %v3161
    %v3276 = vpop.f32.mrb[0].mxu0
    %v3277 = vadd.f32 0.0, %v3276
    %v3278 = vpop.f32.mrb[0].mxu0
    %3279 = vmatprep.mubr.f32.mxu0 0.0
    %3280 = vmatmul.mubr.f32.gmra.mrb[0].mxu0 %v3164
    %v3281 = vpop.f32.mrb[0].mxu0
    %v3282 = vadd.f32 0.0, %v3281
    %v3283 = vpop.f32.mrb[0].mxu0
    %3284 = vmatprep.mubr.f32.mxu0 0.0
    %3285 = vmatmul.mubr.f32.gmra.mrb[0].mxu0 %v3167
    %v3286 = vpop.f32.mrb[0].mxu0
    %v3287 = vadd.f32 0.0, %v3286
    %v3288 = vpop.f32.mrb[0].mxu0
    %3289 = vmatprep.mubr.f32.mxu0 0.0
    %3290 = vmatmul.mubr.f32.gmra.mrb[0].mxu0 %v3170
    %v3291 = vpop.f32.mrb[0].mxu0
    %v3292 = vadd.f32 0.0, %v3291
    %v3293 = vpop.f32.mrb[0].mxu0
    %3294 = vmatprep.mubr.f32.mxu0 0.0
    %3295 = vmatmul.mubr.f32.gmra.mrb[0].mxu0 %v3173
    %v3296 = vpop.f32.mrb[0].mxu0
    %v3297 = vadd.f32 0.0, %v3296
    %v3298 = vpop.f32.mrb[0].mxu0
    %3299 = vdwg.mxu0
    %v3301 = vsel %vm622, %v3091, 0
    %v3304 = vsel %vm622, %v3092, 0
    %v3307 = vsel %vm622, %v3093, 0
    %v3310 = vsel %vm622, %v3094, 0
    %v3313 = vsel %vm622, %v3095, 0
    %v3316 = vsel %vm622, %v3096, 0
    %v3319 = vsel %vm622, %v3097, 0
    %v3322 = vsel %vm622, %v3098, 0
    %v3325 = vsel %vm622, %v3099, 0
    %v3328 = vsel %vm622, %v3100, 0
    %v3331 = vsel %vm622, %v3101, 0
    %v3334 = vsel %vm622, %v3102, 0
    %3336 = vmatprep.subr.mxu0 0.0
    %3337 = vmatpush1.msra.mxu0 %v3103
    %3338 = vmatprep.subr.mxu0 0.0
    %3339 = vmatpush1.msra.mxu0 %v3104
    %3340 = vmatprep.subr.mxu0 0.0
    %3341 = vmatpush1.msra.mxu0 %v3105
    %3342 = vmatprep.subr.mxu0 0.0
    %3343 = vmatpush1.msra.mxu0 %v3106
    %3344 = vmatprep.subr.mxu0 0.0
    %3345 = vmatpush1.msra.mxu0 %v3107
    %3346 = vmatprep.subr.mxu0 0.0
    %3347 = vmatpush1.msra.mxu0 %v3108
    %3348 = vmatprep.subr.mxu0 0.0
    %3349 = vmatpush1.msra.mxu0 %v3109
    %3350 = vmatprep.subr.mxu0 0.0
    %3351 = vmatpush1.msra.mxu0 %v3110
    %3352 = vmatprep.subr.mxu0 0.0
    %3353 = vmatpush1.msra.mxu0 %v3111
    %3354 = vmatprep.subr.mxu0 0.0
    %3355 = vmatpush1.msra.mxu0 %v3112
    %3356 = vmatprep.subr.mxu0 0.0
    %3357 = vmatpush1.msra.mxu0 %v3113
    %3358 = vmatprep.subr.mxu0 0.0
    %3359 = vmatpush1.msra.mxu0 %v3114
    %3360 = vmatprep.subr.mxu0 0.0
    %3361 = vmatpush1.msra.mxu0 0.0
    %3362 = vmatprep.subr.mxu0 0.0
    %3363 = vmatpush1.msra.mxu0 0.0
    %3364 = vmatprep.subr.mxu0 0.0
    %3365 = vmatpush1.msra.mxu0 0.0
    %3366 = vmatprep.subr.mxu0 0.0
    %3367 = vmatpush1.msra.mxu0 0.0
    %3368 = vmatprep.subr.mxu0 0.0
    %3369 = vmatpush1.msra.mxu0 0.0
    %3370 = vmatprep.subr.mxu0 0.0
    %3371 = vmatpush1.msra.mxu0 0.0
    %3372 = vmatprep.subr.mxu0 0.0
    %3373 = vmatpush1.msra.mxu0 0.0
    %3374 = vmatprep.subr.mxu0 0.0
    %3375 = vmatpush1.msra.mxu0 0.0
    %3376 = vmatprep.subr.mxu0 0.0
    %3377 = vmatpush1.msra.mxu0 0.0
    %3378 = vmatprep.subr.mxu0 0.0
    %3379 = vmatpush1.msra.mxu0 0.0
    %3380 = vmatprep.subr.mxu0 0.0
    %3381 = vmatpush1.msra.mxu0 0.0
    %3382 = vmatprep.subr.mxu0 0.0
    %3383 = vmatpush1.msra.mxu0 0.0
    %3384 = vmatprep.subr.mxu0 0.0
    %3385 = vmatpush1.msra.mxu0 0.0
    %3386 = vmatprep.subr.mxu0 0.0
    %3387 = vmatpush1.msra.mxu0 0.0
    %3388 = vmatprep.subr.mxu0 0.0
    %3389 = vmatpush1.msra.mxu0 0.0
    %3390 = vmatprep.subr.mxu0 0.0
    %3391 = vmatpush1.msra.mxu0 0.0
    %3392 = vmatprep.subr.mxu0 0.0
    %3393 = vmatpush1.msra.mxu0 0.0
    %3394 = vmatprep.subr.mxu0 0.0
    %3395 = vmatpush1.msra.mxu0 0.0
    %3396 = vmatprep.subr.mxu0 0.0
    %3397 = vmatpush1.msra.mxu0 0.0
    %3398 = vmatprep.subr.mxu0 0.0
    %3399 = vmatpush1.msra.mxu0 0.0
    %3400 = vmatprep.mubr.f32.mxu0 0.0
    %3401 = vmatmul.mubr.f32.gmra.mrb[0].mxu0 %v3301
    %v3402 = vpop.f32.mrb[0].mxu0
    %v3403 = vadd.f32 %v3242, %v3402
    %v3404 = vpop.f32.mrb[0].mxu0
    %3405 = vmatprep.mubr.f32.mxu0 0.0
    %3406 = vmatmul.mubr.f32.gmra.mrb[0].mxu0 %v3304
    %v3407 = vpop.f32.mrb[0].mxu0
    %v3408 = vadd.f32 %v3247, %v3407
    %v3409 = vpop.f32.mrb[0].mxu0
    %3410 = vmatprep.mubr.f32.mxu0 0.0
    %3411 = vmatmul.mubr.f32.gmra.mrb[0].mxu0 %v3307
    %v3412 = vpop.f32.mrb[0].mxu0
    %v3413 = vadd.f32 %v3252, %v3412
    %v3414 = vpop.f32.mrb[0].mxu0
    %3415 = vmatprep.mubr.f32.mxu0 0.0
    %3416 = vmatmul.mubr.f32.gmra.mrb[0].mxu0 %v3310
    %v3417 = vpop.f32.mrb[0].mxu0
    %v3418 = vadd.f32 %v3257, %v3417
    %v3419 = vpop.f32.mrb[0].mxu0
    %3420 = vmatprep.mubr.f32.mxu0 0.0
    %3421 = vmatmul.mubr.f32.gmra.mrb[0].mxu0 %v3313
    %v3422 = vpop.f32.mrb[0].mxu0
    %v3423 = vadd.f32 %v3262, %v3422
    %v3424 = vpop.f32.mrb[0].mxu0
    %3425 = vmatprep.mubr.f32.mxu0 0.0
    %3426 = vmatmul.mubr.f32.gmra.mrb[0].mxu0 %v3316
    %v3427 = vpop.f32.mrb[0].mxu0
    %v3428 = vadd.f32 %v3267, %v3427
    %v3429 = vpop.f32.mrb[0].mxu0
    %3430 = vmatprep.mubr.f32.mxu0 0.0
    %3431 = vmatmul.mubr.f32.gmra.mrb[0].mxu0 %v3319
    %v3432 = vpop.f32.mrb[0].mxu0
    %v3433 = vadd.f32 %v3272, %v3432
    %v3434 = vpop.f32.mrb[0].mxu0
    %3435 = vmatprep.mubr.f32.mxu0 0.0
    %3436 = vmatmul.mubr.f32.gmra.mrb[0].mxu0 %v3322
    %v3437 = vpop.f32.mrb[0].mxu0
    %v3438 = vadd.f32 %v3277, %v3437
    %v3439 = vpop.f32.mrb[0].mxu0
    %3440 = vmatprep.mubr.f32.mxu0 0.0
    %3441 = vmatmul.mubr.f32.gmra.mrb[0].mxu0 %v3325
    %v3442 = vpop.f32.mrb[0].mxu0
    %v3443 = vadd.f32 %v3282, %v3442
    %v3444 = vpop.f32.mrb[0].mxu0
    %3445 = vmatprep.mubr.f32.mxu0 0.0
    %3446 = vmatmul.mubr.f32.gmra.mrb[0].mxu0 %v3328
    %v3447 = vpop.f32.mrb[0].mxu0
    %v3448 = vadd.f32 %v3287, %v3447
    %v3449 = vpop.f32.mrb[0].mxu0
    %3450 = vmatprep.mubr.f32.mxu0 0.0
    %3451 = vmatmul.mubr.f32.gmra.mrb[0].mxu0 %v3331
    %v3452 = vpop.f32.mrb[0].mxu0
    %v3453 = vadd.f32 %v3292, %v3452
    %v3454 = vpop.f32.mrb[0].mxu0
    %3455 = vmatprep.mubr.f32.mxu0 0.0
    %3456 = vmatmul.mubr.f32.gmra.mrb[0].mxu0 %v3334
    %v3457 = vpop.f32.mrb[0].mxu0
    %v3458 = vadd.f32 %v3297, %v3457
    %v3459 = vpop.f32.mrb[0].mxu0
    %3460 = vdwg.mxu0
    %v3461 = vld [vmem:[%s945] sm:$0xff]
    %v3462 = vld [vmem:[%s945 + $0x8] sm:$0xff]
    %v3463 = vld [vmem:[%s945 + $0x10] sm:$0xff]
    %v3464 = vld [vmem:[%s945 + $0x18] sm:$0xff]
    %v3465 = vld [vmem:[%s945 + $0x20] sm:$0xff]
    %v3466 = vld [vmem:[%s945 + $0x28] sm:$0xff]
    %v3467 = vld [vmem:[%s945 + $0x30] sm:$0xff]
    %v3468 = vld [vmem:[%s945 + $0x38] sm:$0xff]
    %v3469 = vld [vmem:[%s945 + $0x40] sm:$0xff]
    %v3470 = vld [vmem:[%s945 + $0x48] sm:$0xff]
    %v3471 = vld [vmem:[%s945 + $0x50] sm:$0xff]
    %v3472 = vld [vmem:[%s945 + $0x58] sm:$0xff]
    %v3473 = vld [vmem:[#allocation3 + $0x10] sm:$0xff]
    %v3474 = vld [vmem:[#allocation3 + $0x30] sm:$0xff]
    %v3475 = vld [vmem:[#allocation3 + $0x50] sm:$0xff]
    %v3476 = vld [vmem:[#allocation3 + $0x70] sm:$0xff]
    %v3477 = vld [vmem:[#allocation3 + $0x90] sm:$0xff]
    %v3478 = vld [vmem:[#allocation3 + $0xb0] sm:$0xff]
    %v3479 = vld [vmem:[#allocation3 + $0xd0] sm:$0xff]
    %v3480 = vld [vmem:[#allocation3 + $0xf0] sm:$0xff]
    %v3481 = vld [vmem:[#allocation3 + $0x110] sm:$0xff]
    %v3482 = vld [vmem:[#allocation3 + $0x130] sm:$0xff]
    %v3483 = vld [vmem:[#allocation3 + $0x150] sm:$0xff]
    %v3484 = vld [vmem:[#allocation3 + $0x170] sm:$0xff]
    %v3486 = vsel %vm622, %v3461, 0
    %v3489 = vsel %vm622, %v3462, 0
    %v3492 = vsel %vm622, %v3463, 0
    %v3495 = vsel %vm622, %v3464, 0
    %v3498 = vsel %vm622, %v3465, 0
    %v3501 = vsel %vm622, %v3466, 0
    %v3504 = vsel %vm622, %v3467, 0
    %v3507 = vsel %vm622, %v3468, 0
    %v3510 = vsel %vm622, %v3469, 0
    %v3513 = vsel %vm622, %v3470, 0
    %v3516 = vsel %vm622, %v3471, 0
    %v3519 = vsel %vm622, %v3472, 0
    %3521 = vmatprep.subr.mxu0 0.0
    %3522 = vmatpush1.msra.mxu0 %v3473
    %3523 = vmatprep.subr.mxu0 0.0
    %3524 = vmatpush1.msra.mxu0 %v3474
    %3525 = vmatprep.subr.mxu0 0.0
    %3526 = vmatpush1.msra.mxu0 %v3475
    %3527 = vmatprep.subr.mxu0 0.0
    %3528 = vmatpush1.msra.mxu0 %v3476
    %3529 = vmatprep.subr.mxu0 0.0
    %3530 = vmatpush1.msra.mxu0 %v3477
    %3531 = vmatprep.subr.mxu0 0.0
    %3532 = vmatpush1.msra.mxu0 %v3478
    %3533 = vmatprep.subr.mxu0 0.0
    %3534 = vmatpush1.msra.mxu0 %v3479
    %3535 = vmatprep.subr.mxu0 0.0
    %3536 = vmatpush1.msra.mxu0 %v3480
    %3537 = vmatprep.subr.mxu0 0.0
    %3538 = vmatpush1.msra.mxu0 %v3481
    %3539 = vmatprep.subr.mxu0 0.0
    %3540 = vmatpush1.msra.mxu0 %v3482
    %3541 = vmatprep.subr.mxu0 0.0
    %3542 = vmatpush1.msra.mxu0 %v3483
    %3543 = vmatprep.subr.mxu0 0.0
    %3544 = vmatpush1.msra.mxu0 %v3484
    %3545 = vmatprep.subr.mxu0 0.0
    %3546 = vmatpush1.msra.mxu0 0.0
    %3547 = vmatprep.subr.mxu0 0.0
    %3548 = vmatpush1.msra.mxu0 0.0
    %3549 = vmatprep.subr.mxu0 0.0
    %3550 = vmatpush1.msra.mxu0 0.0
    %3551 = vmatprep.subr.mxu0 0.0
    %3552 = vmatpush1.msra.mxu0 0.0
    %3553 = vmatprep.subr.mxu0 0.0
    %3554 = vmatpush1.msra.mxu0 0.0
    %3555 = vmatprep.subr.mxu0 0.0
    %3556 = vmatpush1.msra.mxu0 0.0
    %3557 = vmatprep.subr.mxu0 0.0
    %3558 = vmatpush1.msra.mxu0 0.0
    %3559 = vmatprep.subr.mxu0 0.0
    %3560 = vmatpush1.msra.mxu0 0.0
    %3561 = vmatprep.subr.mxu0 0.0
    %3562 = vmatpush1.msra.mxu0 0.0
    %3563 = vmatprep.subr.mxu0 0.0
    %3564 = vmatpush1.msra.mxu0 0.0
    %3565 = vmatprep.subr.mxu0 0.0
    %3566 = vmatpush1.msra.mxu0 0.0
    %3567 = vmatprep.subr.mxu0 0.0
    %3568 = vmatpush1.msra.mxu0 0.0
    %3569 = vmatprep.subr.mxu0 0.0
    %3570 = vmatpush1.msra.mxu0 0.0
    %3571 = vmatprep.subr.mxu0 0.0
    %3572 = vmatpush1.msra.mxu0 0.0
    %3573 = vmatprep.subr.mxu0 0.0
    %3574 = vmatpush1.msra.mxu0 0.0
    %3575 = vmatprep.subr.mxu0 0.0
    %3576 = vmatpush1.msra.mxu0 0.0
    %3577 = vmatprep.subr.mxu0 0.0
    %3578 = vmatpush1.msra.mxu0 0.0
    %3579 = vmatprep.subr.mxu0 0.0
    %3580 = vmatpush1.msra.mxu0 0.0
    %3581 = vmatprep.subr.mxu0 0.0
    %3582 = vmatpush1.msra.mxu0 0.0
    %3583 = vmatprep.subr.mxu0 0.0
    %3584 = vmatpush1.msra.mxu0 0.0
    %3585 = vmatprep.mubr.f32.mxu0 0.0
    %3586 = vmatmul.mubr.f32.gmra.mrb[0].mxu0 %v3486
    %v3587 = vpop.f32.mrb[0].mxu0
    %v3588 = vadd.f32 0.0, %v3587
    %v3589 = vpop.f32.mrb[0].mxu0
    %3590 = vmatprep.mubr.f32.mxu0 0.0
    %3591 = vmatmul.mubr.f32.gmra.mrb[0].mxu0 %v3489
    %v3592 = vpop.f32.mrb[0].mxu0
    %v3593 = vadd.f32 0.0, %v3592
    %v3594 = vpop.f32.mrb[0].mxu0
    %3595 = vmatprep.mubr.f32.mxu0 0.0
    %3596 = vmatmul.mubr.f32.gmra.mrb[0].mxu0 %v3492
    %v3597 = vpop.f32.mrb[0].mxu0
    %v3598 = vadd.f32 0.0, %v3597
    %v3599 = vpop.f32.mrb[0].mxu0
    %3600 = vmatprep.mubr.f32.mxu0 0.0
    %3601 = vmatmul.mubr.f32.gmra.mrb[0].mxu0 %v3495
    %v3602 = vpop.f32.mrb[0].mxu0
    %v3603 = vadd.f32 0.0, %v3602
    %v3604 = vpop.f32.mrb[0].mxu0
    %3605 = vmatprep.mubr.f32.mxu0 0.0
    %3606 = vmatmul.mubr.f32.gmra.mrb[0].mxu0 %v3498
    %v3607 = vpop.f32.mrb[0].mxu0
    %v3608 = vadd.f32 0.0, %v3607
    %v3609 = vpop.f32.mrb[0].mxu0
    %3610 = vmatprep.mubr.f32.mxu0 0.0
    %3611 = vmatmul.mubr.f32.gmra.mrb[0].mxu0 %v3501
    %v3612 = vpop.f32.mrb[0].mxu0
    %v3613 = vadd.f32 0.0, %v3612
    %v3614 = vpop.f32.mrb[0].mxu0
    %3615 = vmatprep.mubr.f32.mxu0 0.0
    %3616 = vmatmul.mubr.f32.gmra.mrb[0].mxu0 %v3504
    %v3617 = vpop.f32.mrb[0].mxu0
    %v3618 = vadd.f32 0.0, %v3617
    %v3619 = vpop.f32.mrb[0].mxu0
    %3620 = vmatprep.mubr.f32.mxu0 0.0
    %3621 = vmatmul.mubr.f32.gmra.mrb[0].mxu0 %v3507
    %v3622 = vpop.f32.mrb[0].mxu0
    %v3623 = vadd.f32 0.0, %v3622
    %v3624 = vpop.f32.mrb[0].mxu0
    %3625 = vmatprep.mubr.f32.mxu0 0.0
    %3626 = vmatmul.mubr.f32.gmra.mrb[0].mxu0 %v3510
    %v3627 = vpop.f32.mrb[0].mxu0
    %v3628 = vadd.f32 0.0, %v3627
    %v3629 = vpop.f32.mrb[0].mxu0
    %3630 = vmatprep.mubr.f32.mxu0 0.0
    %3631 = vmatmul.mubr.f32.gmra.mrb[0].mxu0 %v3513
    %v3632 = vpop.f32.mrb[0].mxu0
    %v3633 = vadd.f32 0.0, %v3632
    %v3634 = vpop.f32.mrb[0].mxu0
    %3635 = vmatprep.mubr.f32.mxu0 0.0
    %3636 = vmatmul.mubr.f32.gmra.mrb[0].mxu0 %v3516
    %v3637 = vpop.f32.mrb[0].mxu0
    %v3638 = vadd.f32 0.0, %v3637
    %v3639 = vpop.f32.mrb[0].mxu0
    %3640 = vmatprep.mubr.f32.mxu0 0.0
    %3641 = vmatmul.mubr.f32.gmra.mrb[0].mxu0 %v3519
    %v3642 = vpop.f32.mrb[0].mxu0
    %v3643 = vadd.f32 0.0, %v3642
    %v3644 = vpop.f32.mrb[0].mxu0
    %3645 = vdwg.mxu0
    %v3646 = vadd.f32 %v3403, %v3588
    %v3647 = vadd.f32 %v3408, %v3593
    %v3648 = vadd.f32 %v3413, %v3598
    %v3649 = vadd.f32 %v3418, %v3603
    %v3650 = vadd.f32 %v3423, %v3608
    %v3651 = vadd.f32 %v3428, %v3613
    %v3652 = vadd.f32 %v3433, %v3618
    %v3653 = vadd.f32 %v3438, %v3623
    %v3654 = vadd.f32 %v3443, %v3628
    %v3655 = vadd.f32 %v3448, %v3633
    %v3656 = vadd.f32 %v3453, %v3638
    %v3657 = vadd.f32 %v3458, %v3643
    %v3658 = vld [vmem:[%s1143] sm:$0xff]
    %v3659 = vld [vmem:[%s1143 + $0x8] sm:$0xff]
    %v3660 = vld [vmem:[%s1143 + $0x10] sm:$0xff]
    %v3661 = vld [vmem:[%s1143 + $0x18] sm:$0xff]
    %v3662 = vld [vmem:[%s1143 + $0x20] sm:$0xff]
    %v3663 = vld [vmem:[%s1143 + $0x28] sm:$0xff]
    %v3664 = vld [vmem:[%s1143 + $0x30] sm:$0xff]
    %v3665 = vld [vmem:[%s1143 + $0x38] sm:$0xff]
    %v3666 = vld [vmem:[%s1143 + $0x40] sm:$0xff]
    %v3667 = vld [vmem:[%s1143 + $0x48] sm:$0xff]
    %v3668 = vld [vmem:[%s1143 + $0x50] sm:$0xff]
    %v3669 = vld [vmem:[%s1143 + $0x58] sm:$0xff]
    %v3670 = vld [vmem:[#allocation3 + $0x18] sm:$0xff]
    %v3671 = vld [vmem:[#allocation3 + $0x38] sm:$0xff]
    %v3672 = vld [vmem:[#allocation3 + $0x58] sm:$0xff]
    %v3673 = vld [vmem:[#allocation3 + $0x78] sm:$0xff]
    %v3674 = vld [vmem:[#allocation3 + $0x98] sm:$0xff]
    %v3675 = vld [vmem:[#allocation3 + $0xb8] sm:$0xff]
    %v3676 = vld [vmem:[#allocation3 + $0xd8] sm:$0xff]
    %v3677 = vld [vmem:[#allocation3 + $0xf8] sm:$0xff]
    %v3678 = vld [vmem:[#allocation3 + $0x118] sm:$0xff]
    %v3679 = vld [vmem:[#allocation3 + $0x138] sm:$0xff]
    %v3680 = vld [vmem:[#allocation3 + $0x158] sm:$0xff]
    %v3681 = vld [vmem:[#allocation3 + $0x178] sm:$0xff]
    %v3683 = vsel %vm622, %v3658, 0
    %v3686 = vsel %vm622, %v3659, 0
    %v3689 = vsel %vm622, %v3660, 0
    %v3692 = vsel %vm622, %v3661, 0
    %v3695 = vsel %vm622, %v3662, 0
    %v3698 = vsel %vm622, %v3663, 0
    %v3701 = vsel %vm622, %v3664, 0
    %v3704 = vsel %vm622, %v3665, 0
    %v3707 = vsel %vm622, %v3666, 0
    %v3710 = vsel %vm622, %v3667, 0
    %v3713 = vsel %vm622, %v3668, 0
    %v3716 = vsel %vm622, %v3669, 0
    %3718 = vmatprep.subr.mxu0 0.0
    %3719 = vmatpush1.msra.mxu0 %v3670
    %3720 = vmatprep.subr.mxu0 0.0
    %3721 = vmatpush1.msra.mxu0 %v3671
    %3722 = vmatprep.subr.mxu0 0.0
    %3723 = vmatpush1.msra.mxu0 %v3672
    %3724 = vmatprep.subr.mxu0 0.0
    %3725 = vmatpush1.msra.mxu0 %v3673
    %3726 = vmatprep.subr.mxu0 0.0
    %3727 = vmatpush1.msra.mxu0 %v3674
    %3728 = vmatprep.subr.mxu0 0.0
    %3729 = vmatpush1.msra.mxu0 %v3675
    %3730 = vmatprep.subr.mxu0 0.0
    %3731 = vmatpush1.msra.mxu0 %v3676
    %3732 = vmatprep.subr.mxu0 0.0
    %3733 = vmatpush1.msra.mxu0 %v3677
    %3734 = vmatprep.subr.mxu0 0.0
    %3735 = vmatpush1.msra.mxu0 %v3678
    %3736 = vmatprep.subr.mxu0 0.0
    %3737 = vmatpush1.msra.mxu0 %v3679
    %3738 = vmatprep.subr.mxu0 0.0
    %3739 = vmatpush1.msra.mxu0 %v3680
    %3740 = vmatprep.subr.mxu0 0.0
    %3741 = vmatpush1.msra.mxu0 %v3681
    %3742 = vmatprep.subr.mxu0 0.0
    %3743 = vmatpush1.msra.mxu0 0.0
    %3744 = vmatprep.subr.mxu0 0.0
    %3745 = vmatpush1.msra.mxu0 0.0
    %3746 = vmatprep.subr.mxu0 0.0
    %3747 = vmatpush1.msra.mxu0 0.0
    %3748 = vmatprep.subr.mxu0 0.0
    %3749 = vmatpush1.msra.mxu0 0.0
    %3750 = vmatprep.subr.mxu0 0.0
    %3751 = vmatpush1.msra.mxu0 0.0
    %3752 = vmatprep.subr.mxu0 0.0
    %3753 = vmatpush1.msra.mxu0 0.0
    %3754 = vmatprep.subr.mxu0 0.0
    %3755 = vmatpush1.msra.mxu0 0.0
    %3756 = vmatprep.subr.mxu0 0.0
    %3757 = vmatpush1.msra.mxu0 0.0
    %3758 = vmatprep.subr.mxu0 0.0
    %3759 = vmatpush1.msra.mxu0 0.0
    %3760 = vmatprep.subr.mxu0 0.0
    %3761 = vmatpush1.msra.mxu0 0.0
    %3762 = vmatprep.subr.mxu0 0.0
    %3763 = vmatpush1.msra.mxu0 0.0
    %3764 = vmatprep.subr.mxu0 0.0
    %3765 = vmatpush1.msra.mxu0 0.0
    %3766 = vmatprep.subr.mxu0 0.0
    %3767 = vmatpush1.msra.mxu0 0.0
    %3768 = vmatprep.subr.mxu0 0.0
    %3769 = vmatpush1.msra.mxu0 0.0
    %3770 = vmatprep.subr.mxu0 0.0
    %3771 = vmatpush1.msra.mxu0 0.0
    %3772 = vmatprep.subr.mxu0 0.0
    %3773 = vmatpush1.msra.mxu0 0.0
    %3774 = vmatprep.subr.mxu0 0.0
    %3775 = vmatpush1.msra.mxu0 0.0
    %3776 = vmatprep.subr.mxu0 0.0
    %3777 = vmatpush1.msra.mxu0 0.0
    %3778 = vmatprep.subr.mxu0 0.0
    %3779 = vmatpush1.msra.mxu0 0.0
    %3780 = vmatprep.subr.mxu0 0.0
    %3781 = vmatpush1.msra.mxu0 0.0
    %3782 = vmatprep.mubr.f32.mxu0 0.0
    %3783 = vmatmul.mubr.f32.gmra.mrb[0].mxu0 %v3683
    %v3784 = vpop.f32.mrb[0].mxu0
    %v3785 = vadd.f32 0.0, %v3784
    %v3786 = vpop.f32.mrb[0].mxu0
    %3787 = vmatprep.mubr.f32.mxu0 0.0
    %3788 = vmatmul.mubr.f32.gmra.mrb[0].mxu0 %v3686
    %v3789 = vpop.f32.mrb[0].mxu0
    %v3790 = vadd.f32 0.0, %v3789
    %v3791 = vpop.f32.mrb[0].mxu0
    %3792 = vmatprep.mubr.f32.mxu0 0.0
    %3793 = vmatmul.mubr.f32.gmra.mrb[0].mxu0 %v3689
    %v3794 = vpop.f32.mrb[0].mxu0
    %v3795 = vadd.f32 0.0, %v3794
    %v3796 = vpop.f32.mrb[0].mxu0
    %3797 = vmatprep.mubr.f32.mxu0 0.0
    %3798 = vmatmul.mubr.f32.gmra.mrb[0].mxu0 %v3692
    %v3799 = vpop.f32.mrb[0].mxu0
    %v3800 = vadd.f32 0.0, %v3799
    %v3801 = vpop.f32.mrb[0].mxu0
    %3802 = vmatprep.mubr.f32.mxu0 0.0
    %3803 = vmatmul.mubr.f32.gmra.mrb[0].mxu0 %v3695
    %v3804 = vpop.f32.mrb[0].mxu0
    %v3805 = vadd.f32 0.0, %v3804
    %v3806 = vpop.f32.mrb[0].mxu0
    %3807 = vmatprep.mubr.f32.mxu0 0.0
    %3808 = vmatmul.mubr.f32.gmra.mrb[0].mxu0 %v3698
    %v3809 = vpop.f32.mrb[0].mxu0
    %v3810 = vadd.f32 0.0, %v3809
    %v3811 = vpop.f32.mrb[0].mxu0
    %3812 = vmatprep.mubr.f32.mxu0 0.0
    %3813 = vmatmul.mubr.f32.gmra.mrb[0].mxu0 %v3701
    %v3814 = vpop.f32.mrb[0].mxu0
    %v3815 = vadd.f32 0.0, %v3814
    %v3816 = vpop.f32.mrb[0].mxu0
    %3817 = vmatprep.mubr.f32.mxu0 0.0
    %3818 = vmatmul.mubr.f32.gmra.mrb[0].mxu0 %v3704
    %v3819 = vpop.f32.mrb[0].mxu0
    %v3820 = vadd.f32 0.0, %v3819
    %v3821 = vpop.f32.mrb[0].mxu0
    %3822 = vmatprep.mubr.f32.mxu0 0.0
    %3823 = vmatmul.mubr.f32.gmra.mrb[0].mxu0 %v3707
    %v3824 = vpop.f32.mrb[0].mxu0
    %v3825 = vadd.f32 0.0, %v3824
    %v3826 = vpop.f32.mrb[0].mxu0
    %3827 = vmatprep.mubr.f32.mxu0 0.0
    %3828 = vmatmul.mubr.f32.gmra.mrb[0].mxu0 %v3710
    %v3829 = vpop.f32.mrb[0].mxu0
    %v3830 = vadd.f32 0.0, %v3829
    %v3831 = vpop.f32.mrb[0].mxu0
    %3832 = vmatprep.mubr.f32.mxu0 0.0
    %3833 = vmatmul.mubr.f32.gmra.mrb[0].mxu0 %v3713
    %v3834 = vpop.f32.mrb[0].mxu0
    %v3835 = vadd.f32 0.0, %v3834
    %v3836 = vpop.f32.mrb[0].mxu0
    %3837 = vmatprep.mubr.f32.mxu0 0.0
    %3838 = vmatmul.mubr.f32.gmra.mrb[0].mxu0 %v3716
    %v3839 = vpop.f32.mrb[0].mxu0
    %v3840 = vadd.f32 0.0, %v3839
    %v3841 = vpop.f32.mrb[0].mxu0
    %3842 = vdwg.mxu0
    %v3843 = vadd.f32 %v3646, %v3785
    %v3844 = vadd.f32 %v3647, %v3790
    %v3845 = vadd.f32 %v3648, %v3795
    %v3846 = vadd.f32 %v3649, %v3800
    %v3847 = vadd.f32 %v3650, %v3805
    %v3848 = vadd.f32 %v3651, %v3810
    %v3849 = vadd.f32 %v3652, %v3815
    %v3850 = vadd.f32 %v3653, %v3820
    %v3851 = vadd.f32 %v3654, %v3825
    %v3852 = vadd.f32 %v3655, %v3830
    %v3853 = vadd.f32 %v3656, %v3835
    %v3854 = vadd.f32 %v3657, %v3840
    %vm3855 = vcmp.ge.f32.partialorder %v3843, 0.0
    %vm3856 = vcmp.ge.f32.partialorder %v3844, 0.0
    %vm3857 = vcmp.ge.f32.partialorder %v3845, 0.0
    %vm3858 = vcmp.ge.f32.partialorder %v3846, 0.0
    %vm3859 = vcmp.ge.f32.partialorder %v3847, 0.0
    %vm3860 = vcmp.ge.f32.partialorder %v3848, 0.0
    %vm3861 = vcmp.ge.f32.partialorder %v3849, 0.0
    %vm3862 = vcmp.ge.f32.partialorder %v3850, 0.0
    %vm3863 = vcmp.ge.f32.partialorder %v3851, 0.0
    %vm3864 = vcmp.ge.f32.partialorder %v3852, 0.0
    %vm3865 = vcmp.ge.f32.partialorder %v3853, 0.0
    %vm3866 = vcmp.ge.f32.partialorder %v3854, 0.0
    %v3867 = vmul.f32 %v3843, 0.2
    %v3868 = vmul.f32 %v3844, 0.2
    %v3869 = vmul.f32 %v3845, 0.2
    %v3870 = vmul.f32 %v3846, 0.2
    %v3871 = vmul.f32 %v3847, 0.2
    %v3872 = vmul.f32 %v3848, 0.2
    %v3873 = vmul.f32 %v3849, 0.2
    %v3874 = vmul.f32 %v3850, 0.2
    %v3875 = vmul.f32 %v3851, 0.2
    %v3876 = vmul.f32 %v3852, 0.2
    %v3877 = vmul.f32 %v3853, 0.2
    %v3878 = vmul.f32 %v3854, 0.2
    %v3879 = vsel %vm3855, %v3843, %v3867
    %v3880 = vsel %vm3856, %v3844, %v3868
    %v3881 = vsel %vm3857, %v3845, %v3869
    %v3882 = vsel %vm3858, %v3846, %v3870
    %v3883 = vsel %vm3859, %v3847, %v3871
    %v3884 = vsel %vm3860, %v3848, %v3872
    %v3885 = vsel %vm3861, %v3849, %v3873
    %v3886 = vsel %vm3862, %v3850, %v3874
    %v3887 = vsel %vm3863, %v3851, %v3875
    %v3888 = vsel %vm3864, %v3852, %v3876
    %v3889 = vsel %vm3865, %v3853, %v3877
    %v3890 = vsel %vm3866, %v3854, %v3878
    %3891 = vst [vmem:[#allocation2] sm:$0xff] %v3879
    %3892 = vst [vmem:[#allocation2 + $0x8] sm:$0xff] %v3880
    %3893 = vst [vmem:[#allocation2 + $0x10] sm:$0xff] %v3881
    %3894 = vst [vmem:[#allocation2 + $0x18] sm:$0xff] %v3882
    %3895 = vst [vmem:[#allocation2 + $0x20] sm:$0xff] %v3883
    %3896 = vst [vmem:[#allocation2 + $0x28] sm:$0xff] %v3884
    %3897 = vst [vmem:[#allocation2 + $0x30] sm:$0xff] %v3885
    %3898 = vst [vmem:[#allocation2 + $0x38] sm:$0xff] %v3886
    %3899 = vst [vmem:[#allocation2 + $0x40] sm:$0xff] %v3887
    %3900 = vst [vmem:[#allocation2 + $0x48] sm:$0xff] %v3888
    %3901 = vst [vmem:[#allocation2 + $0x50] sm:$0xff] %v3889
    %3902 = vst [vmem:[#allocation2 + $0x58] sm:$0xff] %v3890
    %v3903 = vld [vmem:[#allocation2] sm:$0xff]
    %v3904 = vld [vmem:[#allocation2 + $0x8] sm:$0xff]
    %v3905 = vld [vmem:[#allocation2 + $0x10] sm:$0xff]
    %v3906 = vld [vmem:[#allocation2 + $0x18] sm:$0xff]
    %v3907 = vld [vmem:[#allocation2 + $0x20] sm:$0xff]
    %v3908 = vld [vmem:[#allocation2 + $0x28] sm:$0xff]
    %v3909 = vld [vmem:[#allocation2 + $0x30] sm:$0xff]
    %v3910 = vld [vmem:[#allocation2 + $0x38] sm:$0xff]
    %v3911 = vld [vmem:[#allocation2 + $0x40] sm:$0xff]
    %v3912 = vld [vmem:[#allocation2 + $0x48] sm:$0xff]
    %v3913 = vld [vmem:[#allocation2 + $0x50] sm:$0xff]
    %v3914 = vld [vmem:[#allocation2 + $0x58] sm:$0xff]
    %v3915 = vpack.c.bf16 %v3904, %v3903
    %v3916 = vpack.c.bf16 %v3906, %v3905
    %v3917 = vpack.c.bf16 %v3908, %v3907
    %v3918 = vpack.c.bf16 %v3910, %v3909
    %v3919 = vpack.c.bf16 %v3912, %v3911
    %v3920 = vpack.c.bf16 %v3914, %v3913
    %s3921 = scalar_lea.vmem [#allocation10], 768
    %v3922 = vld [vmem:[%s3921] sm:$0xff]
    %v3923 = vld [vmem:[%s3921 + $0x8] sm:$0xff]
    %v3924 = vld [vmem:[%s3921 + $0x10] sm:$0xff]
    %v3925 = vld [vmem:[%s3921 + $0x18] sm:$0xff]
    %v3926 = vld [vmem:[%s3921 + $0x20] sm:$0xff]
    %v3927 = vld [vmem:[%s3921 + $0x28] sm:$0xff]
    %v3928 = vld [vmem:[%s3921 + $0x30] sm:$0xff]
    %v3929 = vld [vmem:[%s3921 + $0x38] sm:$0xff]
    %v3930 = vld [vmem:[%s3921 + $0x40] sm:$0xff]
    %v3931 = vld [vmem:[%s3921 + $0x48] sm:$0xff]
    %v3932 = vld [vmem:[%s3921 + $0x50] sm:$0xff]
    %v3933 = vld [vmem:[%s3921 + $0x58] sm:$0xff]
    %v3934 = vld [vmem:[%s3921 + $0x60] sm:$0xff]
    %v3935 = vld [vmem:[%s3921 + $0x68] sm:$0xff]
    %v3936 = vld [vmem:[%s3921 + $0x70] sm:$0xff]
    %v3937 = vld [vmem:[%s3921 + $0x78] sm:$0xff]
    %v3938 = vld [vmem:[%s3921 + $0x80] sm:$0xff]
    %v3939 = vld [vmem:[%s3921 + $0x88] sm:$0xff]
    %v3940 = vld [vmem:[%s3921 + $0x90] sm:$0xff]
    %v3941 = vld [vmem:[%s3921 + $0x98] sm:$0xff]
    %v3942 = vld [vmem:[%s3921 + $0xa0] sm:$0xff]
    %v3943 = vld [vmem:[%s3921 + $0xa8] sm:$0xff]
    %v3944 = vld [vmem:[%s3921 + $0xb0] sm:$0xff]
    %v3945 = vld [vmem:[%s3921 + $0xb8] sm:$0xff]
    %v3946 = vld [vmem:[%s3921 + $0xc0] sm:$0xff]
    %v3947 = vld [vmem:[%s3921 + $0xc8] sm:$0xff]
    %v3948 = vld [vmem:[%s3921 + $0xd0] sm:$0xff]
    %v3949 = vld [vmem:[%s3921 + $0xd8] sm:$0xff]
    %v3950 = vld [vmem:[%s3921 + $0xe0] sm:$0xff]
    %v3951 = vld [vmem:[%s3921 + $0xe8] sm:$0xff]
    %v3952 = vld [vmem:[%s3921 + $0xf0] sm:$0xff]
    %v3953 = vld [vmem:[%s3921 + $0xf8] sm:$0xff]
    %v3986 = vunpack.c.l.b16 %v3922
    %v3987 = vunpack.c.h.b16 %v3922
    %v3988 = vunpack.c.l.b16 %v3923
    %v3989 = vunpack.c.h.b16 %v3923
    %v3990 = vunpack.c.l.b16 %v3924
    %v3991 = vunpack.c.h.b16 %v3924
    %v3992 = vunpack.c.l.b16 %v3925
    %v3993 = vunpack.c.h.b16 %v3925
    %v3994 = vunpack.c.l.b16 %v3926
    %v3995 = vunpack.c.h.b16 %v3926
    %v3996 = vunpack.c.l.b16 %v3927
    %v3997 = vunpack.c.h.b16 %v3927
    %v3998 = vunpack.c.l.b16 %v3928
    %v3999 = vunpack.c.h.b16 %v3928
    %v4000 = vunpack.c.l.b16 %v3929
    %v4001 = vunpack.c.h.b16 %v3929
    %v4002 = vunpack.c.l.b16 %v3930
    %v4003 = vunpack.c.h.b16 %v3930
    %v4004 = vunpack.c.l.b16 %v3931
    %v4005 = vunpack.c.h.b16 %v3931
    %v4006 = vunpack.c.l.b16 %v3932
    %v4007 = vunpack.c.h.b16 %v3932
    %v4008 = vunpack.c.l.b16 %v3933
    %v4009 = vunpack.c.h.b16 %v3933
    %v4010 = vunpack.c.l.b16 %v3934
    %v4011 = vunpack.c.h.b16 %v3934
    %v4012 = vunpack.c.l.b16 %v3935
    %v4013 = vunpack.c.h.b16 %v3935
    %v4014 = vunpack.c.l.b16 %v3936
    %v4015 = vunpack.c.h.b16 %v3936
    %v4016 = vunpack.c.l.b16 %v3937
    %v4017 = vunpack.c.h.b16 %v3937
    %v4018 = vunpack.c.l.b16 %v3938
    %v4019 = vunpack.c.h.b16 %v3938
    %v4020 = vunpack.c.l.b16 %v3939
    %v4021 = vunpack.c.h.b16 %v3939
    %v4022 = vunpack.c.l.b16 %v3940
    %v4023 = vunpack.c.h.b16 %v3940
    %v4024 = vunpack.c.l.b16 %v3941
    %v4025 = vunpack.c.h.b16 %v3941
    %v4026 = vunpack.c.l.b16 %v3942
    %v4027 = vunpack.c.h.b16 %v3942
    %v4028 = vunpack.c.l.b16 %v3943
    %v4029 = vunpack.c.h.b16 %v3943
    %v4030 = vunpack.c.l.b16 %v3944
    %v4031 = vunpack.c.h.b16 %v3944
    %v4032 = vunpack.c.l.b16 %v3945
    %v4033 = vunpack.c.h.b16 %v3945
    %v4034 = vunpack.c.l.b16 %v3946
    %v4035 = vunpack.c.h.b16 %v3946
    %v4036 = vunpack.c.l.b16 %v3947
    %v4037 = vunpack.c.h.b16 %v3947
    %v4038 = vunpack.c.l.b16 %v3948
    %v4039 = vunpack.c.h.b16 %v3948
    %v4040 = vunpack.c.l.b16 %v3949
    %v4041 = vunpack.c.h.b16 %v3949
    %v4042 = vunpack.c.l.b16 %v3950
    %v4043 = vunpack.c.h.b16 %v3950
    %v4044 = vunpack.c.l.b16 %v3951
    %v4045 = vunpack.c.h.b16 %v3951
    %v4046 = vunpack.c.l.b16 %v3952
    %v4047 = vunpack.c.h.b16 %v3952
    %v4048 = vunpack.c.l.b16 %v3953
    %v4049 = vunpack.c.h.b16 %v3953
    %v4050 = vpack.c.b16 %v3990, %v3986
    %v4051 = vpack.c.b16 %v3991, %v3987
    %v4052 = vpack.c.b16 %v3992, %v3988
    %v4053 = vpack.c.b16 %v3993, %v3989
    %v4054 = vpack.c.b16 %v3998, %v3994
    %v4055 = vpack.c.b16 %v3999, %v3995
    %v4056 = vpack.c.b16 %v4000, %v3996
    %v4057 = vpack.c.b16 %v4001, %v3997
    %v4058 = vpack.c.b16 %v4006, %v4002
    %v4059 = vpack.c.b16 %v4007, %v4003
    %v4060 = vpack.c.b16 %v4008, %v4004
    %v4061 = vpack.c.b16 %v4009, %v4005
    %v4062 = vpack.c.b16 %v4014, %v4010
    %v4063 = vpack.c.b16 %v4015, %v4011
    %v4064 = vpack.c.b16 %v4016, %v4012
    %v4065 = vpack.c.b16 %v4017, %v4013
    %v4066 = vpack.c.b16 %v4022, %v4018
    %v4067 = vpack.c.b16 %v4023, %v4019
    %v4068 = vpack.c.b16 %v4024, %v4020
    %v4069 = vpack.c.b16 %v4025, %v4021
    %v4070 = vpack.c.b16 %v4030, %v4026
    %v4071 = vpack.c.b16 %v4031, %v4027
    %v4072 = vpack.c.b16 %v4032, %v4028
    %v4073 = vpack.c.b16 %v4033, %v4029
    %v4074 = vpack.c.b16 %v4038, %v4034
    %v4075 = vpack.c.b16 %v4039, %v4035
    %v4076 = vpack.c.b16 %v4040, %v4036
    %v4077 = vpack.c.b16 %v4041, %v4037
    %v4078 = vpack.c.b16 %v4046, %v4042
    %v4079 = vpack.c.b16 %v4047, %v4043
    %v4080 = vpack.c.b16 %v4048, %v4044
    %v4081 = vpack.c.b16 %v4049, %v4045
    %4114 = vmatprep.subr.bf16.mxu0 %v4051
    %4115 = vmatpush1.bf16.msra.mxu0 %v4050
    %4116 = vmatprep.subr.bf16.mxu0 %v4055
    %4117 = vmatpush1.bf16.msra.mxu0 %v4054
    %4118 = vmatprep.subr.bf16.mxu0 %v4059
    %4119 = vmatpush1.bf16.msra.mxu0 %v4058
    %4120 = vmatprep.subr.bf16.mxu0 %v4063
    %4121 = vmatpush1.bf16.msra.mxu0 %v4062
    %4122 = vmatprep.subr.bf16.mxu0 %v4067
    %4123 = vmatpush1.bf16.msra.mxu0 %v4066
    %4124 = vmatprep.subr.bf16.mxu0 %v4071
    %4125 = vmatpush1.bf16.msra.mxu0 %v4070
    %4126 = vmatprep.subr.bf16.mxu0 %v4075
    %4127 = vmatpush1.bf16.msra.mxu0 %v4074
    %4128 = vmatprep.subr.bf16.mxu0 %v4079
    %4129 = vmatpush1.bf16.msra.mxu0 %v4078
    %4130 = vmatprep.subr.bf16.mxu0 0
    %4131 = vmatpush1.bf16.msra.mxu0 0
    %4132 = vmatprep.subr.bf16.mxu0 0
    %4133 = vmatpush1.bf16.msra.mxu0 0
    %4134 = vmatprep.subr.bf16.mxu0 0
    %4135 = vmatpush1.bf16.msra.mxu0 0
    %4136 = vmatprep.subr.bf16.mxu0 0
    %4137 = vmatpush1.bf16.msra.mxu0 0
    %4138 = vmatprep.subr.bf16.mxu0 0
    %4139 = vmatpush1.bf16.msra.mxu0 0
    %4140 = vmatprep.subr.bf16.mxu0 0
    %4141 = vmatpush1.bf16.msra.mxu0 0
    %4142 = vmatprep.subr.bf16.mxu0 0
    %4143 = vmatpush1.bf16.msra.mxu0 0
    %4144 = vmatprep.subr.bf16.mxu0 0
    %4145 = vmatpush1.bf16.msra.mxu0 0
    %4146 = vmatprep.mubr.bf16.mxu0 0
    %4147 = vmatmul.mubr.bf16.gmra.mrb[0].mxu0 %v3915
    %v4148 = vpop.f32.mrb[0].mxu0
    %v4149 = vadd.f32 0.0, %v4148
    %v4150 = vpop.f32.mrb[0].mxu0
    %v4151 = vadd.f32 0.0, %v4150
    %v4152 = vpop.f32.mrb[0].mxu0
    %v4153 = vadd.f32 0.0, %v4152
    %v4154 = vpop.f32.mrb[0].mxu0
    %v4155 = vadd.f32 0.0, %v4154
    %4156 = vmatprep.mubr.bf16.mxu0 0
    %4157 = vmatmul.mubr.bf16.gmra.mrb[0].mxu0 %v3916
    %v4158 = vpop.f32.mrb[0].mxu0
    %v4159 = vadd.f32 0.0, %v4158
    %v4160 = vpop.f32.mrb[0].mxu0
    %v4161 = vadd.f32 0.0, %v4160
    %v4162 = vpop.f32.mrb[0].mxu0
    %v4163 = vadd.f32 0.0, %v4162
    %v4164 = vpop.f32.mrb[0].mxu0
    %v4165 = vadd.f32 0.0, %v4164
    %4166 = vmatprep.mubr.bf16.mxu0 0
    %4167 = vmatmul.mubr.bf16.gmra.mrb[0].mxu0 %v3917
    %v4168 = vpop.f32.mrb[0].mxu0
    %v4169 = vadd.f32 0.0, %v4168
    %v4170 = vpop.f32.mrb[0].mxu0
    %v4171 = vadd.f32 0.0, %v4170
    %v4172 = vpop.f32.mrb[0].mxu0
    %v4173 = vadd.f32 0.0, %v4172
    %v4174 = vpop.f32.mrb[0].mxu0
    %v4175 = vadd.f32 0.0, %v4174
    %4176 = vmatprep.mubr.bf16.mxu0 0
    %4177 = vmatmul.mubr.bf16.gmra.mrb[0].mxu0 %v3918
    %v4178 = vpop.f32.mrb[0].mxu0
    %v4179 = vadd.f32 0.0, %v4178
    %v4180 = vpop.f32.mrb[0].mxu0
    %v4181 = vadd.f32 0.0, %v4180
    %v4182 = vpop.f32.mrb[0].mxu0
    %v4183 = vadd.f32 0.0, %v4182
    %v4184 = vpop.f32.mrb[0].mxu0
    %v4185 = vadd.f32 0.0, %v4184
    %4186 = vmatprep.mubr.bf16.mxu0 0
    %4187 = vmatmul.mubr.bf16.gmra.mrb[0].mxu0 %v3919
    %v4188 = vpop.f32.mrb[0].mxu0
    %v4189 = vadd.f32 0.0, %v4188
    %v4190 = vpop.f32.mrb[0].mxu0
    %v4191 = vadd.f32 0.0, %v4190
    %v4192 = vpop.f32.mrb[0].mxu0
    %v4193 = vadd.f32 0.0, %v4192
    %v4194 = vpop.f32.mrb[0].mxu0
    %v4195 = vadd.f32 0.0, %v4194
    %4196 = vmatprep.mubr.bf16.mxu0 0
    %4197 = vmatmul.mubr.bf16.gmra.mrb[0].mxu0 %v3920
    %v4198 = vpop.f32.mrb[0].mxu0
    %v4199 = vadd.f32 0.0, %v4198
    %v4200 = vpop.f32.mrb[0].mxu0
    %v4201 = vadd.f32 0.0, %v4200
    %v4202 = vpop.f32.mrb[0].mxu0
    %v4203 = vadd.f32 0.0, %v4202
    %v4204 = vpop.f32.mrb[0].mxu0
    %v4205 = vadd.f32 0.0, %v4204
    %4206 = vdwg.mxu0
    %4207 = vmatprep.subr.bf16.mxu0 %v4053
    %4208 = vmatpush1.bf16.msra.mxu0 %v4052
    %4209 = vmatprep.subr.bf16.mxu0 %v4057
    %4210 = vmatpush1.bf16.msra.mxu0 %v4056
    %4211 = vmatprep.subr.bf16.mxu0 %v4061
    %4212 = vmatpush1.bf16.msra.mxu0 %v4060
    %4213 = vmatprep.subr.bf16.mxu0 %v4065
    %4214 = vmatpush1.bf16.msra.mxu0 %v4064
    %4215 = vmatprep.subr.bf16.mxu0 %v4069
    %4216 = vmatpush1.bf16.msra.mxu0 %v4068
    %4217 = vmatprep.subr.bf16.mxu0 %v4073
    %4218 = vmatpush1.bf16.msra.mxu0 %v4072
    %4219 = vmatprep.subr.bf16.mxu0 %v4077
    %4220 = vmatpush1.bf16.msra.mxu0 %v4076
    %4221 = vmatprep.subr.bf16.mxu0 %v4081
    %4222 = vmatpush1.bf16.msra.mxu0 %v4080
    %4223 = vmatprep.subr.bf16.mxu0 0
    %4224 = vmatpush1.bf16.msra.mxu0 0
    %4225 = vmatprep.subr.bf16.mxu0 0
    %4226 = vmatpush1.bf16.msra.mxu0 0
    %4227 = vmatprep.subr.bf16.mxu0 0
    %4228 = vmatpush1.bf16.msra.mxu0 0
    %4229 = vmatprep.subr.bf16.mxu0 0
    %4230 = vmatpush1.bf16.msra.mxu0 0
    %4231 = vmatprep.subr.bf16.mxu0 0
    %4232 = vmatpush1.bf16.msra.mxu0 0
    %4233 = vmatprep.subr.bf16.mxu0 0
    %4234 = vmatpush1.bf16.msra.mxu0 0
    %4235 = vmatprep.subr.bf16.mxu0 0
    %4236 = vmatpush1.bf16.msra.mxu0 0
    %4237 = vmatprep.subr.bf16.mxu0 0
    %4238 = vmatpush1.bf16.msra.mxu0 0
    %4239 = vmatprep.mubr.bf16.mxu0 0
    %4240 = vmatmul.mubr.bf16.gmra.mrb[0].mxu0 %v3915
    %v4241 = vpop.f32.mrb[0].mxu0
    %v4242 = vadd.f32 0.0, %v4241
    %v4243 = vpop.f32.mrb[0].mxu0
    %v4244 = vadd.f32 0.0, %v4243
    %v4245 = vpop.f32.mrb[0].mxu0
    %v4246 = vadd.f32 0.0, %v4245
    %v4247 = vpop.f32.mrb[0].mxu0
    %v4248 = vadd.f32 0.0, %v4247
    %4249 = vmatprep.mubr.bf16.mxu0 0
    %4250 = vmatmul.mubr.bf16.gmra.mrb[0].mxu0 %v3916
    %v4251 = vpop.f32.mrb[0].mxu0
    %v4252 = vadd.f32 0.0, %v4251
    %v4253 = vpop.f32.mrb[0].mxu0
    %v4254 = vadd.f32 0.0, %v4253
    %v4255 = vpop.f32.mrb[0].mxu0
    %v4256 = vadd.f32 0.0, %v4255
    %v4257 = vpop.f32.mrb[0].mxu0
    %v4258 = vadd.f32 0.0, %v4257
    %4259 = vmatprep.mubr.bf16.mxu0 0
    %4260 = vmatmul.mubr.bf16.gmra.mrb[0].mxu0 %v3917
    %v4261 = vpop.f32.mrb[0].mxu0
    %v4262 = vadd.f32 0.0, %v4261
    %v4263 = vpop.f32.mrb[0].mxu0
    %v4264 = vadd.f32 0.0, %v4263
    %v4265 = vpop.f32.mrb[0].mxu0
    %v4266 = vadd.f32 0.0, %v4265
    %v4267 = vpop.f32.mrb[0].mxu0
    %v4268 = vadd.f32 0.0, %v4267
    %4269 = vmatprep.mubr.bf16.mxu0 0
    %4270 = vmatmul.mubr.bf16.gmra.mrb[0].mxu0 %v3918
    %v4271 = vpop.f32.mrb[0].mxu0
    %v4272 = vadd.f32 0.0, %v4271
    %v4273 = vpop.f32.mrb[0].mxu0
    %v4274 = vadd.f32 0.0, %v4273
    %v4275 = vpop.f32.mrb[0].mxu0
    %v4276 = vadd.f32 0.0, %v4275
    %v4277 = vpop.f32.mrb[0].mxu0
    %v4278 = vadd.f32 0.0, %v4277
    %4279 = vmatprep.mubr.bf16.mxu0 0
    %4280 = vmatmul.mubr.bf16.gmra.mrb[0].mxu0 %v3919
    %v4281 = vpop.f32.mrb[0].mxu0
    %v4282 = vadd.f32 0.0, %v4281
    %v4283 = vpop.f32.mrb[0].mxu0
    %v4284 = vadd.f32 0.0, %v4283
    %v4285 = vpop.f32.mrb[0].mxu0
    %v4286 = vadd.f32 0.0, %v4285
    %v4287 = vpop.f32.mrb[0].mxu0
    %v4288 = vadd.f32 0.0, %v4287
    %4289 = vmatprep.mubr.bf16.mxu0 0
    %4290 = vmatmul.mubr.bf16.gmra.mrb[0].mxu0 %v3920
    %v4291 = vpop.f32.mrb[0].mxu0
    %v4292 = vadd.f32 0.0, %v4291
    %v4293 = vpop.f32.mrb[0].mxu0
    %v4294 = vadd.f32 0.0, %v4293
    %v4295 = vpop.f32.mrb[0].mxu0
    %v4296 = vadd.f32 0.0, %v4295
    %v4297 = vpop.f32.mrb[0].mxu0
    %v4298 = vadd.f32 0.0, %v4297
    %4299 = vdwg.mxu0
    %4300 = vst [vmem:[#allocation3] sm:$0xff] %v4149
    %4301 = vst [vmem:[#allocation3 + $0x8] sm:$0xff] %v4151
    %4302 = vst [vmem:[#allocation3 + $0x10] sm:$0xff] %v4242
    %4303 = vst [vmem:[#allocation3 + $0x18] sm:$0xff] %v4244
    %4304 = vst [vmem:[#allocation3 + $0x20] sm:$0xff] %v4153
    %4305 = vst [vmem:[#allocation3 + $0x28] sm:$0xff] %v4155
    %4306 = vst [vmem:[#allocation3 + $0x30] sm:$0xff] %v4246
    %4307 = vst [vmem:[#allocation3 + $0x38] sm:$0xff] %v4248
    %4308 = vst [vmem:[#allocation3 + $0x40] sm:$0xff] %v4159
    %4309 = vst [vmem:[#allocation3 + $0x48] sm:$0xff] %v4161
    %4310 = vst [vmem:[#allocation3 + $0x50] sm:$0xff] %v4252
    %4311 = vst [vmem:[#allocation3 + $0x58] sm:$0xff] %v4254
    %4312 = vst [vmem:[#allocation3 + $0x60] sm:$0xff] %v4163
    %4313 = vst [vmem:[#allocation3 + $0x68] sm:$0xff] %v4165
    %4314 = vst [vmem:[#allocation3 + $0x70] sm:$0xff] %v4256
    %4315 = vst [vmem:[#allocation3 + $0x78] sm:$0xff] %v4258
    %4316 = vst [vmem:[#allocation3 + $0x80] sm:$0xff] %v4169
    %4317 = vst [vmem:[#allocation3 + $0x88] sm:$0xff] %v4171
    %4318 = vst [vmem:[#allocation3 + $0x90] sm:$0xff] %v4262
    %4319 = vst [vmem:[#allocation3 + $0x98] sm:$0xff] %v4264
    %4320 = vst [vmem:[#allocation3 + $0xa0] sm:$0xff] %v4173
    %4321 = vst [vmem:[#allocation3 + $0xa8] sm:$0xff] %v4175
    %4322 = vst [vmem:[#allocation3 + $0xb0] sm:$0xff] %v4266
    %4323 = vst [vmem:[#allocation3 + $0xb8] sm:$0xff] %v4268
    %4324 = vst [vmem:[#allocation3 + $0xc0] sm:$0xff] %v4179
    %4325 = vst [vmem:[#allocation3 + $0xc8] sm:$0xff] %v4181
    %4326 = vst [vmem:[#allocation3 + $0xd0] sm:$0xff] %v4272
    %4327 = vst [vmem:[#allocation3 + $0xd8] sm:$0xff] %v4274
    %4328 = vst [vmem:[#allocation3 + $0xe0] sm:$0xff] %v4183
    %4329 = vst [vmem:[#allocation3 + $0xe8] sm:$0xff] %v4185
    %4330 = vst [vmem:[#allocation3 + $0xf0] sm:$0xff] %v4276
    %4331 = vst [vmem:[#allocation3 + $0xf8] sm:$0xff] %v4278
    %4332 = vst [vmem:[#allocation3 + $0x100] sm:$0xff] %v4189
    %4333 = vst [vmem:[#allocation3 + $0x108] sm:$0xff] %v4191
    %4334 = vst [vmem:[#allocation3 + $0x110] sm:$0xff] %v4282
    %4335 = vst [vmem:[#allocation3 + $0x118] sm:$0xff] %v4284
    %4336 = vst [vmem:[#allocation3 + $0x120] sm:$0xff] %v4193
    %4337 = vst [vmem:[#allocation3 + $0x128] sm:$0xff] %v4195
    %4338 = vst [vmem:[#allocation3 + $0x130] sm:$0xff] %v4286
    %4339 = vst [vmem:[#allocation3 + $0x138] sm:$0xff] %v4288
    %4340 = vst [vmem:[#allocation3 + $0x140] sm:$0xff] %v4199
    %4341 = vst [vmem:[#allocation3 + $0x148] sm:$0xff] %v4201
    %4342 = vst [vmem:[#allocation3 + $0x150] sm:$0xff] %v4292
    %4343 = vst [vmem:[#allocation3 + $0x158] sm:$0xff] %v4294
    %4344 = vst [vmem:[#allocation3 + $0x160] sm:$0xff] %v4203
    %4345 = vst [vmem:[#allocation3 + $0x168] sm:$0xff] %v4205
    %4346 = vst [vmem:[#allocation3 + $0x170] sm:$0xff] %v4296
    %4347 = vst [vmem:[#allocation3 + $0x178] sm:$0xff] %v4298
    %v4348 = vld [vmem:[#allocation4] sm:$0xff]
    %v4349 = vld [vmem:[#allocation4 + $0x8] sm:$0xff]
    %v4350 = vld [vmem:[#allocation4 + $0x10] sm:$0xff]
    %v4351 = vld [vmem:[#allocation4 + $0x18] sm:$0xff]
    %v4352 = vld [vmem:[#allocation4 + $0x20] sm:$0xff]
    %v4353 = vld [vmem:[#allocation4 + $0x28] sm:$0xff]
    %v4354 = vld [vmem:[#allocation4 + $0x30] sm:$0xff]
    %v4355 = vld [vmem:[#allocation4 + $0x38] sm:$0xff]
    %v4356 = vld [vmem:[#allocation4 + $0x40] sm:$0xff]
    %v4357 = vld [vmem:[#allocation4 + $0x48] sm:$0xff]
    %v4358 = vld [vmem:[#allocation4 + $0x50] sm:$0xff]
    %v4359 = vld [vmem:[#allocation4 + $0x58] sm:$0xff]
    %v4360 = vld [vmem:[#allocation3] sm:$0xff]
    %v4361 = vld [vmem:[#allocation3 + $0x20] sm:$0xff]
    %v4362 = vld [vmem:[#allocation3 + $0x40] sm:$0xff]
    %v4363 = vld [vmem:[#allocation3 + $0x60] sm:$0xff]
    %v4364 = vld [vmem:[#allocation3 + $0x80] sm:$0xff]
    %v4365 = vld [vmem:[#allocation3 + $0xa0] sm:$0xff]
    %v4366 = vld [vmem:[#allocation3 + $0xc0] sm:$0xff]
    %v4367 = vld [vmem:[#allocation3 + $0xe0] sm:$0xff]
    %v4368 = vld [vmem:[#allocation3 + $0x100] sm:$0xff]
    %v4369 = vld [vmem:[#allocation3 + $0x120] sm:$0xff]
    %v4370 = vld [vmem:[#allocation3 + $0x140] sm:$0xff]
    %v4371 = vld [vmem:[#allocation3 + $0x160] sm:$0xff]
    %v4372 = vld [vmem:[%s597] sm:$0xff]
    %v4373 = vld [vmem:[%s597 + $0x8] sm:$0xff]
    %v4374 = vld [vmem:[%s597 + $0x10] sm:$0xff]
    %v4375 = vld [vmem:[%s597 + $0x18] sm:$0xff]
    %v4376 = vld [vmem:[%s597 + $0x20] sm:$0xff]
    %v4377 = vld [vmem:[%s597 + $0x28] sm:$0xff]
    %v4378 = vld [vmem:[%s597 + $0x30] sm:$0xff]
    %v4379 = vld [vmem:[%s597 + $0x38] sm:$0xff]
    %v4380 = vld [vmem:[%s597 + $0x40] sm:$0xff]
    %v4381 = vld [vmem:[%s597 + $0x48] sm:$0xff]
    %v4382 = vld [vmem:[%s597 + $0x50] sm:$0xff]
    %v4383 = vld [vmem:[%s597 + $0x58] sm:$0xff]
    %v4384 = vld [vmem:[#allocation3 + $0x8] sm:$0xff]
    %v4385 = vld [vmem:[#allocation3 + $0x28] sm:$0xff]
    %v4386 = vld [vmem:[#allocation3 + $0x48] sm:$0xff]
    %v4387 = vld [vmem:[#allocation3 + $0x68] sm:$0xff]
    %v4388 = vld [vmem:[#allocation3 + $0x88] sm:$0xff]
    %v4389 = vld [vmem:[#allocation3 + $0xa8] sm:$0xff]
    %v4390 = vld [vmem:[#allocation3 + $0xc8] sm:$0xff]
    %v4391 = vld [vmem:[#allocation3 + $0xe8] sm:$0xff]
    %v4392 = vld [vmem:[#allocation3 + $0x108] sm:$0xff]
    %v4393 = vld [vmem:[#allocation3 + $0x128] sm:$0xff]
    %v4394 = vld [vmem:[#allocation3 + $0x148] sm:$0xff]
    %v4395 = vld [vmem:[#allocation3 + $0x168] sm:$0xff]
    %v4397 = vsel %vm622, %v4372, 0
    %v4400 = vsel %vm622, %v4373, 0
    %v4403 = vsel %vm622, %v4374, 0
    %v4406 = vsel %vm622, %v4375, 0
    %v4409 = vsel %vm622, %v4376, 0
    %v4412 = vsel %vm622, %v4377, 0
    %v4415 = vsel %vm622, %v4378, 0
    %v4418 = vsel %vm622, %v4379, 0
    %v4421 = vsel %vm622, %v4380, 0
    %v4424 = vsel %vm622, %v4381, 0
    %v4427 = vsel %vm622, %v4382, 0
    %v4430 = vsel %vm622, %v4383, 0
    %4432 = vmatprep.subr.mxu0 0.0
    %4433 = vmatpush1.msra.mxu0 %v4384
    %4434 = vmatprep.subr.mxu0 0.0
    %4435 = vmatpush1.msra.mxu0 %v4385
    %4436 = vmatprep.subr.mxu0 0.0
    %4437 = vmatpush1.msra.mxu0 %v4386
    %4438 = vmatprep.subr.mxu0 0.0
    %4439 = vmatpush1.msra.mxu0 %v4387
    %4440 = vmatprep.subr.mxu0 0.0
    %4441 = vmatpush1.msra.mxu0 %v4388
    %4442 = vmatprep.subr.mxu0 0.0
    %4443 = vmatpush1.msra.mxu0 %v4389
    %4444 = vmatprep.subr.mxu0 0.0
    %4445 = vmatpush1.msra.mxu0 %v4390
    %4446 = vmatprep.subr.mxu0 0.0
    %4447 = vmatpush1.msra.mxu0 %v4391
    %4448 = vmatprep.subr.mxu0 0.0
    %4449 = vmatpush1.msra.mxu0 %v4392
    %4450 = vmatprep.subr.mxu0 0.0
    %4451 = vmatpush1.msra.mxu0 %v4393
    %4452 = vmatprep.subr.mxu0 0.0
    %4453 = vmatpush1.msra.mxu0 %v4394
    %4454 = vmatprep.subr.mxu0 0.0
    %4455 = vmatpush1.msra.mxu0 %v4395
    %4456 = vmatprep.subr.mxu0 0.0
    %4457 = vmatpush1.msra.mxu0 0.0
    %4458 = vmatprep.subr.mxu0 0.0
    %4459 = vmatpush1.msra.mxu0 0.0
    %4460 = vmatprep.subr.mxu0 0.0
    %4461 = vmatpush1.msra.mxu0 0.0
    %4462 = vmatprep.subr.mxu0 0.0
    %4463 = vmatpush1.msra.mxu0 0.0
    %4464 = vmatprep.subr.mxu0 0.0
    %4465 = vmatpush1.msra.mxu0 0.0
    %4466 = vmatprep.subr.mxu0 0.0
    %4467 = vmatpush1.msra.mxu0 0.0
    %4468 = vmatprep.subr.mxu0 0.0
    %4469 = vmatpush1.msra.mxu0 0.0
    %4470 = vmatprep.subr.mxu0 0.0
    %4471 = vmatpush1.msra.mxu0 0.0
    %4472 = vmatprep.subr.mxu0 0.0
    %4473 = vmatpush1.msra.mxu0 0.0
    %4474 = vmatprep.subr.mxu0 0.0
    %4475 = vmatpush1.msra.mxu0 0.0
    %4476 = vmatprep.subr.mxu0 0.0
    %4477 = vmatpush1.msra.mxu0 0.0
    %4478 = vmatprep.subr.mxu0 0.0
    %4479 = vmatpush1.msra.mxu0 0.0
    %4480 = vmatprep.subr.mxu0 0.0
    %4481 = vmatpush1.msra.mxu0 0.0
    %4482 = vmatprep.subr.mxu0 0.0
    %4483 = vmatpush1.msra.mxu0 0.0
    %4484 = vmatprep.subr.mxu0 0.0
    %4485 = vmatpush1.msra.mxu0 0.0
    %4486 = vmatprep.subr.mxu0 0.0
    %4487 = vmatpush1.msra.mxu0 0.0
    %4488 = vmatprep.subr.mxu0 0.0
    %4489 = vmatpush1.msra.mxu0 0.0
    %4490 = vmatprep.subr.mxu0 0.0
    %4491 = vmatpush1.msra.mxu0 0.0
    %4492 = vmatprep.subr.mxu0 0.0
    %4493 = vmatpush1.msra.mxu0 0.0
    %4494 = vmatprep.subr.mxu0 0.0
    %4495 = vmatpush1.msra.mxu0 0.0
    %4496 = vmatprep.mubr.f32.mxu0 0.0
    %4497 = vmatmul.mubr.f32.gmra.mrb[0].mxu0 %v4397
    %v4498 = vpop.f32.mrb[0].mxu0
    %v4499 = vadd.f32 0.0, %v4498
    %v4500 = vpop.f32.mrb[0].mxu0
    %4501 = vmatprep.mubr.f32.mxu0 0.0
    %4502 = vmatmul.mubr.f32.gmra.mrb[0].mxu0 %v4400
    %v4503 = vpop.f32.mrb[0].mxu0
    %v4504 = vadd.f32 0.0, %v4503
    %v4505 = vpop.f32.mrb[0].mxu0
    %4506 = vmatprep.mubr.f32.mxu0 0.0
    %4507 = vmatmul.mubr.f32.gmra.mrb[0].mxu0 %v4403
    %v4508 = vpop.f32.mrb[0].mxu0
    %v4509 = vadd.f32 0.0, %v4508
    %v4510 = vpop.f32.mrb[0].mxu0
    %4511 = vmatprep.mubr.f32.mxu0 0.0
    %4512 = vmatmul.mubr.f32.gmra.mrb[0].mxu0 %v4406
    %v4513 = vpop.f32.mrb[0].mxu0
    %v4514 = vadd.f32 0.0, %v4513
    %v4515 = vpop.f32.mrb[0].mxu0
    %4516 = vmatprep.mubr.f32.mxu0 0.0
    %4517 = vmatmul.mubr.f32.gmra.mrb[0].mxu0 %v4409
    %v4518 = vpop.f32.mrb[0].mxu0
    %v4519 = vadd.f32 0.0, %v4518
    %v4520 = vpop.f32.mrb[0].mxu0
    %4521 = vmatprep.mubr.f32.mxu0 0.0
    %4522 = vmatmul.mubr.f32.gmra.mrb[0].mxu0 %v4412
    %v4523 = vpop.f32.mrb[0].mxu0
    %v4524 = vadd.f32 0.0, %v4523
    %v4525 = vpop.f32.mrb[0].mxu0
    %4526 = vmatprep.mubr.f32.mxu0 0.0
    %4527 = vmatmul.mubr.f32.gmra.mrb[0].mxu0 %v4415
    %v4528 = vpop.f32.mrb[0].mxu0
    %v4529 = vadd.f32 0.0, %v4528
    %v4530 = vpop.f32.mrb[0].mxu0
    %4531 = vmatprep.mubr.f32.mxu0 0.0
    %4532 = vmatmul.mubr.f32.gmra.mrb[0].mxu0 %v4418
    %v4533 = vpop.f32.mrb[0].mxu0
    %v4534 = vadd.f32 0.0, %v4533
    %v4535 = vpop.f32.mrb[0].mxu0
    %4536 = vmatprep.mubr.f32.mxu0 0.0
    %4537 = vmatmul.mubr.f32.gmra.mrb[0].mxu0 %v4421
    %v4538 = vpop.f32.mrb[0].mxu0
    %v4539 = vadd.f32 0.0, %v4538
    %v4540 = vpop.f32.mrb[0].mxu0
    %4541 = vmatprep.mubr.f32.mxu0 0.0
    %4542 = vmatmul.mubr.f32.gmra.mrb[0].mxu0 %v4424
    %v4543 = vpop.f32.mrb[0].mxu0
    %v4544 = vadd.f32 0.0, %v4543
    %v4545 = vpop.f32.mrb[0].mxu0
    %4546 = vmatprep.mubr.f32.mxu0 0.0
    %4547 = vmatmul.mubr.f32.gmra.mrb[0].mxu0 %v4427
    %v4548 = vpop.f32.mrb[0].mxu0
    %v4549 = vadd.f32 0.0, %v4548
    %v4550 = vpop.f32.mrb[0].mxu0
    %4551 = vmatprep.mubr.f32.mxu0 0.0
    %4552 = vmatmul.mubr.f32.gmra.mrb[0].mxu0 %v4430
    %v4553 = vpop.f32.mrb[0].mxu0
    %v4554 = vadd.f32 0.0, %v4553
    %v4555 = vpop.f32.mrb[0].mxu0
    %4556 = vdwg.mxu0
    %v4558 = vsel %vm622, %v4348, 0
    %v4561 = vsel %vm622, %v4349, 0
    %v4564 = vsel %vm622, %v4350, 0
    %v4567 = vsel %vm622, %v4351, 0
    %v4570 = vsel %vm622, %v4352, 0
    %v4573 = vsel %vm622, %v4353, 0
    %v4576 = vsel %vm622, %v4354, 0
    %v4579 = vsel %vm622, %v4355, 0
    %v4582 = vsel %vm622, %v4356, 0
    %v4585 = vsel %vm622, %v4357, 0
    %v4588 = vsel %vm622, %v4358, 0
    %v4591 = vsel %vm622, %v4359, 0
    %4593 = vmatprep.subr.mxu0 0.0
    %4594 = vmatpush1.msra.mxu0 %v4360
    %4595 = vmatprep.subr.mxu0 0.0
    %4596 = vmatpush1.msra.mxu0 %v4361
    %4597 = vmatprep.subr.mxu0 0.0
    %4598 = vmatpush1.msra.mxu0 %v4362
    %4599 = vmatprep.subr.mxu0 0.0
    %4600 = vmatpush1.msra.mxu0 %v4363
    %4601 = vmatprep.subr.mxu0 0.0
    %4602 = vmatpush1.msra.mxu0 %v4364
    %4603 = vmatprep.subr.mxu0 0.0
    %4604 = vmatpush1.msra.mxu0 %v4365
    %4605 = vmatprep.subr.mxu0 0.0
    %4606 = vmatpush1.msra.mxu0 %v4366
    %4607 = vmatprep.subr.mxu0 0.0
    %4608 = vmatpush1.msra.mxu0 %v4367
    %4609 = vmatprep.subr.mxu0 0.0
    %4610 = vmatpush1.msra.mxu0 %v4368
    %4611 = vmatprep.subr.mxu0 0.0
    %4612 = vmatpush1.msra.mxu0 %v4369
    %4613 = vmatprep.subr.mxu0 0.0
    %4614 = vmatpush1.msra.mxu0 %v4370
    %4615 = vmatprep.subr.mxu0 0.0
    %4616 = vmatpush1.msra.mxu0 %v4371
    %4617 = vmatprep.subr.mxu0 0.0
    %4618 = vmatpush1.msra.mxu0 0.0
    %4619 = vmatprep.subr.mxu0 0.0
    %4620 = vmatpush1.msra.mxu0 0.0
    %4621 = vmatprep.subr.mxu0 0.0
    %4622 = vmatpush1.msra.mxu0 0.0
    %4623 = vmatprep.subr.mxu0 0.0
    %4624 = vmatpush1.msra.mxu0 0.0
    %4625 = vmatprep.subr.mxu0 0.0
    %4626 = vmatpush1.msra.mxu0 0.0
    %4627 = vmatprep.subr.mxu0 0.0
    %4628 = vmatpush1.msra.mxu0 0.0
    %4629 = vmatprep.subr.mxu0 0.0
    %4630 = vmatpush1.msra.mxu0 0.0
    %4631 = vmatprep.subr.mxu0 0.0
    %4632 = vmatpush1.msra.mxu0 0.0
    %4633 = vmatprep.subr.mxu0 0.0
    %4634 = vmatpush1.msra.mxu0 0.0
    %4635 = vmatprep.subr.mxu0 0.0
    %4636 = vmatpush1.msra.mxu0 0.0
    %4637 = vmatprep.subr.mxu0 0.0
    %4638 = vmatpush1.msra.mxu0 0.0
    %4639 = vmatprep.subr.mxu0 0.0
    %4640 = vmatpush1.msra.mxu0 0.0
    %4641 = vmatprep.subr.mxu0 0.0
    %4642 = vmatpush1.msra.mxu0 0.0
    %4643 = vmatprep.subr.mxu0 0.0
    %4644 = vmatpush1.msra.mxu0 0.0
    %4645 = vmatprep.subr.mxu0 0.0
    %4646 = vmatpush1.msra.mxu0 0.0
    %4647 = vmatprep.subr.mxu0 0.0
    %4648 = vmatpush1.msra.mxu0 0.0
    %4649 = vmatprep.subr.mxu0 0.0
    %4650 = vmatpush1.msra.mxu0 0.0
    %4651 = vmatprep.subr.mxu0 0.0
    %4652 = vmatpush1.msra.mxu0 0.0
    %4653 = vmatprep.subr.mxu0 0.0
    %4654 = vmatpush1.msra.mxu0 0.0
    %4655 = vmatprep.subr.mxu0 0.0
    %4656 = vmatpush1.msra.mxu0 0.0
    %4657 = vmatprep.mubr.f32.mxu0 0.0
    %4658 = vmatmul.mubr.f32.gmra.mrb[0].mxu0 %v4558
    %v4659 = vpop.f32.mrb[0].mxu0
    %v4660 = vadd.f32 %v4499, %v4659
    %v4661 = vpop.f32.mrb[0].mxu0
    %4662 = vmatprep.mubr.f32.mxu0 0.0
    %4663 = vmatmul.mubr.f32.gmra.mrb[0].mxu0 %v4561
    %v4664 = vpop.f32.mrb[0].mxu0
    %v4665 = vadd.f32 %v4504, %v4664
    %v4666 = vpop.f32.mrb[0].mxu0
    %4667 = vmatprep.mubr.f32.mxu0 0.0
    %4668 = vmatmul.mubr.f32.gmra.mrb[0].mxu0 %v4564
    %v4669 = vpop.f32.mrb[0].mxu0
    %v4670 = vadd.f32 %v4509, %v4669
    %v4671 = vpop.f32.mrb[0].mxu0
    %4672 = vmatprep.mubr.f32.mxu0 0.0
    %4673 = vmatmul.mubr.f32.gmra.mrb[0].mxu0 %v4567
    %v4674 = vpop.f32.mrb[0].mxu0
    %v4675 = vadd.f32 %v4514, %v4674
    %v4676 = vpop.f32.mrb[0].mxu0
    %4677 = vmatprep.mubr.f32.mxu0 0.0
    %4678 = vmatmul.mubr.f32.gmra.mrb[0].mxu0 %v4570
    %v4679 = vpop.f32.mrb[0].mxu0
    %v4680 = vadd.f32 %v4519, %v4679
    %v4681 = vpop.f32.mrb[0].mxu0
    %4682 = vmatprep.mubr.f32.mxu0 0.0
    %4683 = vmatmul.mubr.f32.gmra.mrb[0].mxu0 %v4573
    %v4684 = vpop.f32.mrb[0].mxu0
    %v4685 = vadd.f32 %v4524, %v4684
    %v4686 = vpop.f32.mrb[0].mxu0
    %4687 = vmatprep.mubr.f32.mxu0 0.0
    %4688 = vmatmul.mubr.f32.gmra.mrb[0].mxu0 %v4576
    %v4689 = vpop.f32.mrb[0].mxu0
    %v4690 = vadd.f32 %v4529, %v4689
    %v4691 = vpop.f32.mrb[0].mxu0
    %4692 = vmatprep.mubr.f32.mxu0 0.0
    %4693 = vmatmul.mubr.f32.gmra.mrb[0].mxu0 %v4579
    %v4694 = vpop.f32.mrb[0].mxu0
    %v4695 = vadd.f32 %v4534, %v4694
    %v4696 = vpop.f32.mrb[0].mxu0
    %4697 = vmatprep.mubr.f32.mxu0 0.0
    %4698 = vmatmul.mubr.f32.gmra.mrb[0].mxu0 %v4582
    %v4699 = vpop.f32.mrb[0].mxu0
    %v4700 = vadd.f32 %v4539, %v4699
    %v4701 = vpop.f32.mrb[0].mxu0
    %4702 = vmatprep.mubr.f32.mxu0 0.0
    %4703 = vmatmul.mubr.f32.gmra.mrb[0].mxu0 %v4585
    %v4704 = vpop.f32.mrb[0].mxu0
    %v4705 = vadd.f32 %v4544, %v4704
    %v4706 = vpop.f32.mrb[0].mxu0
    %4707 = vmatprep.mubr.f32.mxu0 0.0
    %4708 = vmatmul.mubr.f32.gmra.mrb[0].mxu0 %v4588
    %v4709 = vpop.f32.mrb[0].mxu0
    %v4710 = vadd.f32 %v4549, %v4709
    %v4711 = vpop.f32.mrb[0].mxu0
    %4712 = vmatprep.mubr.f32.mxu0 0.0
    %4713 = vmatmul.mubr.f32.gmra.mrb[0].mxu0 %v4591
    %v4714 = vpop.f32.mrb[0].mxu0
    %v4715 = vadd.f32 %v4554, %v4714
    %v4716 = vpop.f32.mrb[0].mxu0
    %4717 = vdwg.mxu0
    %v4718 = vld [vmem:[%s945] sm:$0xff]
    %v4719 = vld [vmem:[%s945 + $0x8] sm:$0xff]
    %v4720 = vld [vmem:[%s945 + $0x10] sm:$0xff]
    %v4721 = vld [vmem:[%s945 + $0x18] sm:$0xff]
    %v4722 = vld [vmem:[%s945 + $0x20] sm:$0xff]
    %v4723 = vld [vmem:[%s945 + $0x28] sm:$0xff]
    %v4724 = vld [vmem:[%s945 + $0x30] sm:$0xff]
    %v4725 = vld [vmem:[%s945 + $0x38] sm:$0xff]
    %v4726 = vld [vmem:[%s945 + $0x40] sm:$0xff]
    %v4727 = vld [vmem:[%s945 + $0x48] sm:$0xff]
    %v4728 = vld [vmem:[%s945 + $0x50] sm:$0xff]
    %v4729 = vld [vmem:[%s945 + $0x58] sm:$0xff]
    %v4730 = vld [vmem:[#allocation3 + $0x10] sm:$0xff]
    %v4731 = vld [vmem:[#allocation3 + $0x30] sm:$0xff]
    %v4732 = vld [vmem:[#allocation3 + $0x50] sm:$0xff]
    %v4733 = vld [vmem:[#allocation3 + $0x70] sm:$0xff]
    %v4734 = vld [vmem:[#allocation3 + $0x90] sm:$0xff]
    %v4735 = vld [vmem:[#allocation3 + $0xb0] sm:$0xff]
    %v4736 = vld [vmem:[#allocation3 + $0xd0] sm:$0xff]
    %v4737 = vld [vmem:[#allocation3 + $0xf0] sm:$0xff]
    %v4738 = vld [vmem:[#allocation3 + $0x110] sm:$0xff]
    %v4739 = vld [vmem:[#allocation3 + $0x130] sm:$0xff]
    %v4740 = vld [vmem:[#allocation3 + $0x150] sm:$0xff]
    %v4741 = vld [vmem:[#allocation3 + $0x170] sm:$0xff]
    %v4743 = vsel %vm622, %v4718, 0
    %v4746 = vsel %vm622, %v4719, 0
    %v4749 = vsel %vm622, %v4720, 0
    %v4752 = vsel %vm622, %v4721, 0
    %v4755 = vsel %vm622, %v4722, 0
    %v4758 = vsel %vm622, %v4723, 0
    %v4761 = vsel %vm622, %v4724, 0
    %v4764 = vsel %vm622, %v4725, 0
    %v4767 = vsel %vm622, %v4726, 0
    %v4770 = vsel %vm622, %v4727, 0
    %v4773 = vsel %vm622, %v4728, 0
    %v4776 = vsel %vm622, %v4729, 0
    %4778 = vmatprep.subr.mxu0 0.0
    %4779 = vmatpush1.msra.mxu0 %v4730
    %4780 = vmatprep.subr.mxu0 0.0
    %4781 = vmatpush1.msra.mxu0 %v4731
    %4782 = vmatprep.subr.mxu0 0.0
    %4783 = vmatpush1.msra.mxu0 %v4732
    %4784 = vmatprep.subr.mxu0 0.0
    %4785 = vmatpush1.msra.mxu0 %v4733
    %4786 = vmatprep.subr.mxu0 0.0
    %4787 = vmatpush1.msra.mxu0 %v4734
    %4788 = vmatprep.subr.mxu0 0.0
    %4789 = vmatpush1.msra.mxu0 %v4735
    %4790 = vmatprep.subr.mxu0 0.0
    %4791 = vmatpush1.msra.mxu0 %v4736
    %4792 = vmatprep.subr.mxu0 0.0
    %4793 = vmatpush1.msra.mxu0 %v4737
    %4794 = vmatprep.subr.mxu0 0.0
    %4795 = vmatpush1.msra.mxu0 %v4738
    %4796 = vmatprep.subr.mxu0 0.0
    %4797 = vmatpush1.msra.mxu0 %v4739
    %4798 = vmatprep.subr.mxu0 0.0
    %4799 = vmatpush1.msra.mxu0 %v4740
    %4800 = vmatprep.subr.mxu0 0.0
    %4801 = vmatpush1.msra.mxu0 %v4741
    %4802 = vmatprep.subr.mxu0 0.0
    %4803 = vmatpush1.msra.mxu0 0.0
    %4804 = vmatprep.subr.mxu0 0.0
    %4805 = vmatpush1.msra.mxu0 0.0
    %4806 = vmatprep.subr.mxu0 0.0
    %4807 = vmatpush1.msra.mxu0 0.0
    %4808 = vmatprep.subr.mxu0 0.0
    %4809 = vmatpush1.msra.mxu0 0.0
    %4810 = vmatprep.subr.mxu0 0.0
    %4811 = vmatpush1.msra.mxu0 0.0
    %4812 = vmatprep.subr.mxu0 0.0
    %4813 = vmatpush1.msra.mxu0 0.0
    %4814 = vmatprep.subr.mxu0 0.0
    %4815 = vmatpush1.msra.mxu0 0.0
    %4816 = vmatprep.subr.mxu0 0.0
    %4817 = vmatpush1.msra.mxu0 0.0
    %4818 = vmatprep.subr.mxu0 0.0
    %4819 = vmatpush1.msra.mxu0 0.0
    %4820 = vmatprep.subr.mxu0 0.0
    %4821 = vmatpush1.msra.mxu0 0.0
    %4822 = vmatprep.subr.mxu0 0.0
    %4823 = vmatpush1.msra.mxu0 0.0
    %4824 = vmatprep.subr.mxu0 0.0
    %4825 = vmatpush1.msra.mxu0 0.0
    %4826 = vmatprep.subr.mxu0 0.0
    %4827 = vmatpush1.msra.mxu0 0.0
    %4828 = vmatprep.subr.mxu0 0.0
    %4829 = vmatpush1.msra.mxu0 0.0
    %4830 = vmatprep.subr.mxu0 0.0
    %4831 = vmatpush1.msra.mxu0 0.0
    %4832 = vmatprep.subr.mxu0 0.0
    %4833 = vmatpush1.msra.mxu0 0.0
    %4834 = vmatprep.subr.mxu0 0.0
    %4835 = vmatpush1.msra.mxu0 0.0
    %4836 = vmatprep.subr.mxu0 0.0
    %4837 = vmatpush1.msra.mxu0 0.0
    %4838 = vmatprep.subr.mxu0 0.0
    %4839 = vmatpush1.msra.mxu0 0.0
    %4840 = vmatprep.subr.mxu0 0.0
    %4841 = vmatpush1.msra.mxu0 0.0
    %4842 = vmatprep.mubr.f32.mxu0 0.0
    %4843 = vmatmul.mubr.f32.gmra.mrb[0].mxu0 %v4743
    %v4844 = vpop.f32.mrb[0].mxu0
    %v4845 = vadd.f32 0.0, %v4844
    %v4846 = vpop.f32.mrb[0].mxu0
    %4847 = vmatprep.mubr.f32.mxu0 0.0
    %4848 = vmatmul.mubr.f32.gmra.mrb[0].mxu0 %v4746
    %v4849 = vpop.f32.mrb[0].mxu0
    %v4850 = vadd.f32 0.0, %v4849
    %v4851 = vpop.f32.mrb[0].mxu0
    %4852 = vmatprep.mubr.f32.mxu0 0.0
    %4853 = vmatmul.mubr.f32.gmra.mrb[0].mxu0 %v4749
    %v4854 = vpop.f32.mrb[0].mxu0
    %v4855 = vadd.f32 0.0, %v4854
    %v4856 = vpop.f32.mrb[0].mxu0
    %4857 = vmatprep.mubr.f32.mxu0 0.0
    %4858 = vmatmul.mubr.f32.gmra.mrb[0].mxu0 %v4752
    %v4859 = vpop.f32.mrb[0].mxu0
    %v4860 = vadd.f32 0.0, %v4859
    %v4861 = vpop.f32.mrb[0].mxu0
    %4862 = vmatprep.mubr.f32.mxu0 0.0
    %4863 = vmatmul.mubr.f32.gmra.mrb[0].mxu0 %v4755
    %v4864 = vpop.f32.mrb[0].mxu0
    %v4865 = vadd.f32 0.0, %v4864
    %v4866 = vpop.f32.mrb[0].mxu0
    %4867 = vmatprep.mubr.f32.mxu0 0.0
    %4868 = vmatmul.mubr.f32.gmra.mrb[0].mxu0 %v4758
    %v4869 = vpop.f32.mrb[0].mxu0
    %v4870 = vadd.f32 0.0, %v4869
    %v4871 = vpop.f32.mrb[0].mxu0
    %4872 = vmatprep.mubr.f32.mxu0 0.0
    %4873 = vmatmul.mubr.f32.gmra.mrb[0].mxu0 %v4761
    %v4874 = vpop.f32.mrb[0].mxu0
    %v4875 = vadd.f32 0.0, %v4874
    %v4876 = vpop.f32.mrb[0].mxu0
    %4877 = vmatprep.mubr.f32.mxu0 0.0
    %4878 = vmatmul.mubr.f32.gmra.mrb[0].mxu0 %v4764
    %v4879 = vpop.f32.mrb[0].mxu0
    %v4880 = vadd.f32 0.0, %v4879
    %v4881 = vpop.f32.mrb[0].mxu0
    %4882 = vmatprep.mubr.f32.mxu0 0.0
    %4883 = vmatmul.mubr.f32.gmra.mrb[0].mxu0 %v4767
    %v4884 = vpop.f32.mrb[0].mxu0
    %v4885 = vadd.f32 0.0, %v4884
    %v4886 = vpop.f32.mrb[0].mxu0
    %4887 = vmatprep.mubr.f32.mxu0 0.0
    %4888 = vmatmul.mubr.f32.gmra.mrb[0].mxu0 %v4770
    %v4889 = vpop.f32.mrb[0].mxu0
    %v4890 = vadd.f32 0.0, %v4889
    %v4891 = vpop.f32.mrb[0].mxu0
    %4892 = vmatprep.mubr.f32.mxu0 0.0
    %4893 = vmatmul.mubr.f32.gmra.mrb[0].mxu0 %v4773
    %v4894 = vpop.f32.mrb[0].mxu0
    %v4895 = vadd.f32 0.0, %v4894
    %v4896 = vpop.f32.mrb[0].mxu0
    %4897 = vmatprep.mubr.f32.mxu0 0.0
    %4898 = vmatmul.mubr.f32.gmra.mrb[0].mxu0 %v4776
    %v4899 = vpop.f32.mrb[0].mxu0
    %v4900 = vadd.f32 0.0, %v4899
    %v4901 = vpop.f32.mrb[0].mxu0
    %4902 = vdwg.mxu0
    %v4903 = vadd.f32 %v4660, %v4845
    %v4904 = vadd.f32 %v4665, %v4850
    %v4905 = vadd.f32 %v4670, %v4855
    %v4906 = vadd.f32 %v4675, %v4860
    %v4907 = vadd.f32 %v4680, %v4865
    %v4908 = vadd.f32 %v4685, %v4870
    %v4909 = vadd.f32 %v4690, %v4875
    %v4910 = vadd.f32 %v4695, %v4880
    %v4911 = vadd.f32 %v4700, %v4885
    %v4912 = vadd.f32 %v4705, %v4890
    %v4913 = vadd.f32 %v4710, %v4895
    %v4914 = vadd.f32 %v4715, %v4900
    %v4915 = vld [vmem:[%s1143] sm:$0xff]
    %v4916 = vld [vmem:[%s1143 + $0x8] sm:$0xff]
    %v4917 = vld [vmem:[%s1143 + $0x10] sm:$0xff]
    %v4918 = vld [vmem:[%s1143 + $0x18] sm:$0xff]
    %v4919 = vld [vmem:[%s1143 + $0x20] sm:$0xff]
    %v4920 = vld [vmem:[%s1143 + $0x28] sm:$0xff]
    %v4921 = vld [vmem:[%s1143 + $0x30] sm:$0xff]
    %v4922 = vld [vmem:[%s1143 + $0x38] sm:$0xff]
    %v4923 = vld [vmem:[%s1143 + $0x40] sm:$0xff]
    %v4924 = vld [vmem:[%s1143 + $0x48] sm:$0xff]
    %v4925 = vld [vmem:[%s1143 + $0x50] sm:$0xff]
    %v4926 = vld [vmem:[%s1143 + $0x58] sm:$0xff]
    %v4927 = vld [vmem:[#allocation3 + $0x18] sm:$0xff]
    %v4928 = vld [vmem:[#allocation3 + $0x38] sm:$0xff]
    %v4929 = vld [vmem:[#allocation3 + $0x58] sm:$0xff]
    %v4930 = vld [vmem:[#allocation3 + $0x78] sm:$0xff]
    %v4931 = vld [vmem:[#allocation3 + $0x98] sm:$0xff]
    %v4932 = vld [vmem:[#allocation3 + $0xb8] sm:$0xff]
    %v4933 = vld [vmem:[#allocation3 + $0xd8] sm:$0xff]
    %v4934 = vld [vmem:[#allocation3 + $0xf8] sm:$0xff]
    %v4935 = vld [vmem:[#allocation3 + $0x118] sm:$0xff]
    %v4936 = vld [vmem:[#allocation3 + $0x138] sm:$0xff]
    %v4937 = vld [vmem:[#allocation3 + $0x158] sm:$0xff]
    %v4938 = vld [vmem:[#allocation3 + $0x178] sm:$0xff]
    %v4940 = vsel %vm622, %v4915, 0
    %v4943 = vsel %vm622, %v4916, 0
    %v4946 = vsel %vm622, %v4917, 0
    %v4949 = vsel %vm622, %v4918, 0
    %v4952 = vsel %vm622, %v4919, 0
    %v4955 = vsel %vm622, %v4920, 0
    %v4958 = vsel %vm622, %v4921, 0
    %v4961 = vsel %vm622, %v4922, 0
    %v4964 = vsel %vm622, %v4923, 0
    %v4967 = vsel %vm622, %v4924, 0
    %v4970 = vsel %vm622, %v4925, 0
    %v4973 = vsel %vm622, %v4926, 0
    %4975 = vmatprep.subr.mxu0 0.0
    %4976 = vmatpush1.msra.mxu0 %v4927
    %4977 = vmatprep.subr.mxu0 0.0
    %4978 = vmatpush1.msra.mxu0 %v4928
    %4979 = vmatprep.subr.mxu0 0.0
    %4980 = vmatpush1.msra.mxu0 %v4929
    %4981 = vmatprep.subr.mxu0 0.0
    %4982 = vmatpush1.msra.mxu0 %v4930
    %4983 = vmatprep.subr.mxu0 0.0
    %4984 = vmatpush1.msra.mxu0 %v4931
    %4985 = vmatprep.subr.mxu0 0.0
    %4986 = vmatpush1.msra.mxu0 %v4932
    %4987 = vmatprep.subr.mxu0 0.0
    %4988 = vmatpush1.msra.mxu0 %v4933
    %4989 = vmatprep.subr.mxu0 0.0
    %4990 = vmatpush1.msra.mxu0 %v4934
    %4991 = vmatprep.subr.mxu0 0.0
    %4992 = vmatpush1.msra.mxu0 %v4935
    %4993 = vmatprep.subr.mxu0 0.0
    %4994 = vmatpush1.msra.mxu0 %v4936
    %4995 = vmatprep.subr.mxu0 0.0
    %4996 = vmatpush1.msra.mxu0 %v4937
    %4997 = vmatprep.subr.mxu0 0.0
    %4998 = vmatpush1.msra.mxu0 %v4938
    %4999 = vmatprep.subr.mxu0 0.0
    %5000 = vmatpush1.msra.mxu0 0.0
    %5001 = vmatprep.subr.mxu0 0.0
    %5002 = vmatpush1.msra.mxu0 0.0
    %5003 = vmatprep.subr.mxu0 0.0
    %5004 = vmatpush1.msra.mxu0 0.0
    %5005 = vmatprep.subr.mxu0 0.0
    %5006 = vmatpush1.msra.mxu0 0.0
    %5007 = vmatprep.subr.mxu0 0.0
    %5008 = vmatpush1.msra.mxu0 0.0
    %5009 = vmatprep.subr.mxu0 0.0
    %5010 = vmatpush1.msra.mxu0 0.0
    %5011 = vmatprep.subr.mxu0 0.0
    %5012 = vmatpush1.msra.mxu0 0.0
    %5013 = vmatprep.subr.mxu0 0.0
    %5014 = vmatpush1.msra.mxu0 0.0
    %5015 = vmatprep.subr.mxu0 0.0
    %5016 = vmatpush1.msra.mxu0 0.0
    %5017 = vmatprep.subr.mxu0 0.0
    %5018 = vmatpush1.msra.mxu0 0.0
    %5019 = vmatprep.subr.mxu0 0.0
    %5020 = vmatpush1.msra.mxu0 0.0
    %5021 = vmatprep.subr.mxu0 0.0
    %5022 = vmatpush1.msra.mxu0 0.0
    %5023 = vmatprep.subr.mxu0 0.0
    %5024 = vmatpush1.msra.mxu0 0.0
    %5025 = vmatprep.subr.mxu0 0.0
    %5026 = vmatpush1.msra.mxu0 0.0
    %5027 = vmatprep.subr.mxu0 0.0
    %5028 = vmatpush1.msra.mxu0 0.0
    %5029 = vmatprep.subr.mxu0 0.0
    %5030 = vmatpush1.msra.mxu0 0.0
    %5031 = vmatprep.subr.mxu0 0.0
    %5032 = vmatpush1.msra.mxu0 0.0
    %5033 = vmatprep.subr.mxu0 0.0
    %5034 = vmatpush1.msra.mxu0 0.0
    %5035 = vmatprep.subr.mxu0 0.0
    %5036 = vmatpush1.msra.mxu0 0.0
    %5037 = vmatprep.subr.mxu0 0.0
    %5038 = vmatpush1.msra.mxu0 0.0
    %5039 = vmatprep.mubr.f32.mxu0 0.0
    %5040 = vmatmul.mubr.f32.gmra.mrb[0].mxu0 %v4940
    %v5041 = vpop.f32.mrb[0].mxu0
    %v5042 = vadd.f32 0.0, %v5041
    %v5043 = vpop.f32.mrb[0].mxu0
    %5044 = vmatprep.mubr.f32.mxu0 0.0
    %5045 = vmatmul.mubr.f32.gmra.mrb[0].mxu0 %v4943
    %v5046 = vpop.f32.mrb[0].mxu0
    %v5047 = vadd.f32 0.0, %v5046
    %v5048 = vpop.f32.mrb[0].mxu0
    %5049 = vmatprep.mubr.f32.mxu0 0.0
    %5050 = vmatmul.mubr.f32.gmra.mrb[0].mxu0 %v4946
    %v5051 = vpop.f32.mrb[0].mxu0
    %v5052 = vadd.f32 0.0, %v5051
    %v5053 = vpop.f32.mrb[0].mxu0
    %5054 = vmatprep.mubr.f32.mxu0 0.0
    %5055 = vmatmul.mubr.f32.gmra.mrb[0].mxu0 %v4949
    %v5056 = vpop.f32.mrb[0].mxu0
    %v5057 = vadd.f32 0.0, %v5056
    %v5058 = vpop.f32.mrb[0].mxu0
    %5059 = vmatprep.mubr.f32.mxu0 0.0
    %5060 = vmatmul.mubr.f32.gmra.mrb[0].mxu0 %v4952
    %v5061 = vpop.f32.mrb[0].mxu0
    %v5062 = vadd.f32 0.0, %v5061
    %v5063 = vpop.f32.mrb[0].mxu0
    %5064 = vmatprep.mubr.f32.mxu0 0.0
    %5065 = vmatmul.mubr.f32.gmra.mrb[0].mxu0 %v4955
    %v5066 = vpop.f32.mrb[0].mxu0
    %v5067 = vadd.f32 0.0, %v5066
    %v5068 = vpop.f32.mrb[0].mxu0
    %5069 = vmatprep.mubr.f32.mxu0 0.0
    %5070 = vmatmul.mubr.f32.gmra.mrb[0].mxu0 %v4958
    %v5071 = vpop.f32.mrb[0].mxu0
    %v5072 = vadd.f32 0.0, %v5071
    %v5073 = vpop.f32.mrb[0].mxu0
    %5074 = vmatprep.mubr.f32.mxu0 0.0
    %5075 = vmatmul.mubr.f32.gmra.mrb[0].mxu0 %v4961
    %v5076 = vpop.f32.mrb[0].mxu0
    %v5077 = vadd.f32 0.0, %v5076
    %v5078 = vpop.f32.mrb[0].mxu0
    %5079 = vmatprep.mubr.f32.mxu0 0.0
    %5080 = vmatmul.mubr.f32.gmra.mrb[0].mxu0 %v4964
    %v5081 = vpop.f32.mrb[0].mxu0
    %v5082 = vadd.f32 0.0, %v5081
    %v5083 = vpop.f32.mrb[0].mxu0
    %5084 = vmatprep.mubr.f32.mxu0 0.0
    %5085 = vmatmul.mubr.f32.gmra.mrb[0].mxu0 %v4967
    %v5086 = vpop.f32.mrb[0].mxu0
    %v5087 = vadd.f32 0.0, %v5086
    %v5088 = vpop.f32.mrb[0].mxu0
    %5089 = vmatprep.mubr.f32.mxu0 0.0
    %5090 = vmatmul.mubr.f32.gmra.mrb[0].mxu0 %v4970
    %v5091 = vpop.f32.mrb[0].mxu0
    %v5092 = vadd.f32 0.0, %v5091
    %v5093 = vpop.f32.mrb[0].mxu0
    %5094 = vmatprep.mubr.f32.mxu0 0.0
    %5095 = vmatmul.mubr.f32.gmra.mrb[0].mxu0 %v4973
    %v5096 = vpop.f32.mrb[0].mxu0
    %v5097 = vadd.f32 0.0, %v5096
    %v5098 = vpop.f32.mrb[0].mxu0
    %5099 = vdwg.mxu0
    %v5100 = vadd.f32 %v4903, %v5042
    %v5101 = vadd.f32 %v4904, %v5047
    %v5102 = vadd.f32 %v4905, %v5052
    %v5103 = vadd.f32 %v4906, %v5057
    %v5104 = vadd.f32 %v4907, %v5062
    %v5105 = vadd.f32 %v4908, %v5067
    %v5106 = vadd.f32 %v4909, %v5072
    %v5107 = vadd.f32 %v4910, %v5077
    %v5108 = vadd.f32 %v4911, %v5082
    %v5109 = vadd.f32 %v4912, %v5087
    %v5110 = vadd.f32 %v4913, %v5092
    %v5111 = vadd.f32 %v4914, %v5097
    %vm5112 = vcmp.ge.f32.partialorder %v5100, 0.0
    %vm5113 = vcmp.ge.f32.partialorder %v5101, 0.0
    %vm5114 = vcmp.ge.f32.partialorder %v5102, 0.0
    %vm5115 = vcmp.ge.f32.partialorder %v5103, 0.0
    %vm5116 = vcmp.ge.f32.partialorder %v5104, 0.0
    %vm5117 = vcmp.ge.f32.partialorder %v5105, 0.0
    %vm5118 = vcmp.ge.f32.partialorder %v5106, 0.0
    %vm5119 = vcmp.ge.f32.partialorder %v5107, 0.0
    %vm5120 = vcmp.ge.f32.partialorder %v5108, 0.0
    %vm5121 = vcmp.ge.f32.partialorder %v5109, 0.0
    %vm5122 = vcmp.ge.f32.partialorder %v5110, 0.0
    %vm5123 = vcmp.ge.f32.partialorder %v5111, 0.0
    %v5124 = vmul.f32 %v5100, 0.2
    %v5125 = vmul.f32 %v5101, 0.2
    %v5126 = vmul.f32 %v5102, 0.2
    %v5127 = vmul.f32 %v5103, 0.2
    %v5128 = vmul.f32 %v5104, 0.2
    %v5129 = vmul.f32 %v5105, 0.2
    %v5130 = vmul.f32 %v5106, 0.2
    %v5131 = vmul.f32 %v5107, 0.2
    %v5132 = vmul.f32 %v5108, 0.2
    %v5133 = vmul.f32 %v5109, 0.2
    %v5134 = vmul.f32 %v5110, 0.2
    %v5135 = vmul.f32 %v5111, 0.2
    %v5136 = vsel %vm5112, %v5100, %v5124
    %v5137 = vsel %vm5113, %v5101, %v5125
    %v5138 = vsel %vm5114, %v5102, %v5126
    %v5139 = vsel %vm5115, %v5103, %v5127
    %v5140 = vsel %vm5116, %v5104, %v5128
    %v5141 = vsel %vm5117, %v5105, %v5129
    %v5142 = vsel %vm5118, %v5106, %v5130
    %v5143 = vsel %vm5119, %v5107, %v5131
    %v5144 = vsel %vm5120, %v5108, %v5132
    %v5145 = vsel %vm5121, %v5109, %v5133
    %v5146 = vsel %vm5122, %v5110, %v5134
    %v5147 = vsel %vm5123, %v5111, %v5135
    %5148 = vst [vmem:[#allocation2] sm:$0xff] %v5136
    %5149 = vst [vmem:[#allocation2 + $0x8] sm:$0xff] %v5137
    %5150 = vst [vmem:[#allocation2 + $0x10] sm:$0xff] %v5138
    %5151 = vst [vmem:[#allocation2 + $0x18] sm:$0xff] %v5139
    %5152 = vst [vmem:[#allocation2 + $0x20] sm:$0xff] %v5140
    %5153 = vst [vmem:[#allocation2 + $0x28] sm:$0xff] %v5141
    %5154 = vst [vmem:[#allocation2 + $0x30] sm:$0xff] %v5142
    %5155 = vst [vmem:[#allocation2 + $0x38] sm:$0xff] %v5143
    %5156 = vst [vmem:[#allocation2 + $0x40] sm:$0xff] %v5144
    %5157 = vst [vmem:[#allocation2 + $0x48] sm:$0xff] %v5145
    %5158 = vst [vmem:[#allocation2 + $0x50] sm:$0xff] %v5146
    %5159 = vst [vmem:[#allocation2 + $0x58] sm:$0xff] %v5147
    %v5160 = vld [vmem:[%s4] sm:$0x3f]
    %v5161 = vld [vmem:[#allocation2] sm:$0xff]
    %v5162 = vld [vmem:[#allocation2 + $0x8] sm:$0xff]
    %v5163 = vld [vmem:[#allocation2 + $0x10] sm:$0xff]
    %v5164 = vld [vmem:[#allocation2 + $0x18] sm:$0xff]
    %v5165 = vld [vmem:[#allocation2 + $0x20] sm:$0xff]
    %v5166 = vld [vmem:[#allocation2 + $0x28] sm:$0xff]
    %v5167 = vld [vmem:[#allocation2 + $0x30] sm:$0xff]
    %v5168 = vld [vmem:[#allocation2 + $0x38] sm:$0xff]
    %v5169 = vld [vmem:[#allocation2 + $0x40] sm:$0xff]
    %v5170 = vld [vmem:[#allocation2 + $0x48] sm:$0xff]
    %v5171 = vld [vmem:[#allocation2 + $0x50] sm:$0xff]
    %v5172 = vld [vmem:[#allocation2 + $0x58] sm:$0xff]
    %v5173 = vld [vmem:[#allocation8] sm:$0xff]
    %v5174 = vld [vmem:[#allocation8 + $0x8] sm:$0xff]
    %v5175 = vld [vmem:[#allocation8 + $0x10] sm:$0xff]
    %v5176 = vld [vmem:[#allocation8 + $0x18] sm:$0xff]
    %v5177 = vld [vmem:[#allocation8 + $0x20] sm:$0xff]
    %v5178 = vld [vmem:[#allocation8 + $0x28] sm:$0xff]
    %v5179 = vld [vmem:[#allocation8 + $0x30] sm:$0xff]
    %v5180 = vld [vmem:[#allocation8 + $0x38] sm:$0xff]
    %v5181 = vld [vmem:[#allocation8 + $0x40] sm:$0xff]
    %v5182 = vld [vmem:[#allocation8 + $0x48] sm:$0xff]
    %v5183 = vld [vmem:[#allocation8 + $0x50] sm:$0xff]
    %v5184 = vld [vmem:[#allocation8 + $0x58] sm:$0xff]
    %v5186 = vsel %vm622, %v5160, 0
    %5188 = vmatprep.subr.mxu0 0.0
    %5189 = vmatpush1.msra.mxu0 %v5173
    %5190 = vmatprep.subr.mxu0 0.0
    %5191 = vmatpush1.msra.mxu0 %v5174
    %5192 = vmatprep.subr.mxu0 0.0
    %5193 = vmatpush1.msra.mxu0 %v5175
    %5194 = vmatprep.subr.mxu0 0.0
    %5195 = vmatpush1.msra.mxu0 %v5176
    %5196 = vmatprep.subr.mxu0 0.0
    %5197 = vmatpush1.msra.mxu0 %v5177
    %5198 = vmatprep.subr.mxu0 0.0
    %5199 = vmatpush1.msra.mxu0 %v5178
    %5200 = vmatprep.subr.mxu0 0.0
    %5201 = vmatpush1.msra.mxu0 %v5179
    %5202 = vmatprep.subr.mxu0 0.0
    %5203 = vmatpush1.msra.mxu0 %v5180
    %5204 = vmatprep.subr.mxu0 0.0
    %5205 = vmatpush1.msra.mxu0 %v5181
    %5206 = vmatprep.subr.mxu0 0.0
    %5207 = vmatpush1.msra.mxu0 %v5182
    %5208 = vmatprep.subr.mxu0 0.0
    %5209 = vmatpush1.msra.mxu0 %v5183
    %5210 = vmatprep.subr.mxu0 0.0
    %5211 = vmatpush1.msra.mxu0 %v5184
    %5212 = vmatprep.subr.mxu0 0.0
    %5213 = vmatpush1.msra.mxu0 0.0
    %5214 = vmatprep.subr.mxu0 0.0
    %5215 = vmatpush1.msra.mxu0 0.0
    %5216 = vmatprep.subr.mxu0 0.0
    %5217 = vmatpush1.msra.mxu0 0.0
    %5218 = vmatprep.subr.mxu0 0.0
    %5219 = vmatpush1.msra.mxu0 0.0
    %5220 = vmatprep.subr.mxu0 0.0
    %5221 = vmatpush1.msra.mxu0 0.0
    %5222 = vmatprep.subr.mxu0 0.0
    %5223 = vmatpush1.msra.mxu0 0.0
    %5224 = vmatprep.subr.mxu0 0.0
    %5225 = vmatpush1.msra.mxu0 0.0
    %5226 = vmatprep.subr.mxu0 0.0
    %5227 = vmatpush1.msra.mxu0 0.0
    %5228 = vmatprep.subr.mxu0 0.0
    %5229 = vmatpush1.msra.mxu0 0.0
    %5230 = vmatprep.subr.mxu0 0.0
    %5231 = vmatpush1.msra.mxu0 0.0
    %5232 = vmatprep.subr.mxu0 0.0
    %5233 = vmatpush1.msra.mxu0 0.0
    %5234 = vmatprep.subr.mxu0 0.0
    %5235 = vmatpush1.msra.mxu0 0.0
    %5236 = vmatprep.subr.mxu0 0.0
    %5237 = vmatpush1.msra.mxu0 0.0
    %5238 = vmatprep.subr.mxu0 0.0
    %5239 = vmatpush1.msra.mxu0 0.0
    %5240 = vmatprep.subr.mxu0 0.0
    %5241 = vmatpush1.msra.mxu0 0.0
    %5242 = vmatprep.subr.mxu0 0.0
    %5243 = vmatpush1.msra.mxu0 0.0
    %5244 = vmatprep.subr.mxu0 0.0
    %5245 = vmatpush1.msra.mxu0 0.0
    %5246 = vmatprep.subr.mxu0 0.0
    %5247 = vmatpush1.msra.mxu0 0.0
    %5248 = vmatprep.subr.mxu0 0.0
    %5249 = vmatpush1.msra.mxu0 0.0
    %5250 = vmatprep.subr.mxu0 0.0
    %5251 = vmatpush1.msra.mxu0 0.0
    %5252 = vmatprep.mubr.f32.mxu0 0.0
    %5253 = vmatmul.mubr.f32.gmra.mrb[0].mxu0 %v5186
    %v5254 = vpop.f32.mrb[0].mxu0
    %v5255 = vadd.f32 0.0, %v5254
    %v5256 = vpop.f32.mrb[0].mxu0
    %5257 = vdwg.mxu0
    %v5258 = vld [vmem:[#allocation11] sm:$0xff]
    %v5259 = vld [vmem:[#allocation11 + $0x8] sm:$0xff]
    %v5260 = vld [vmem:[#allocation11 + $0x10] sm:$0xff]
    %v5261 = vld [vmem:[#allocation11 + $0x18] sm:$0xff]
    %v5262 = vld [vmem:[#allocation11 + $0x20] sm:$0xff]
    %v5263 = vld [vmem:[#allocation11 + $0x28] sm:$0xff]
    %v5264 = vld [vmem:[#allocation11 + $0x30] sm:$0xff]
    %v5265 = vld [vmem:[#allocation11 + $0x38] sm:$0xff]
    %v5266 = vld [vmem:[#allocation11 + $0x40] sm:$0xff]
    %v5267 = vld [vmem:[#allocation11 + $0x48] sm:$0xff]
    %v5268 = vld [vmem:[#allocation11 + $0x50] sm:$0xff]
    %v5269 = vld [vmem:[#allocation11 + $0x58] sm:$0xff]
    %v5270 = vld [vmem:[#allocation11 + $0x60] sm:$0xff]
    %v5271 = vld [vmem:[#allocation11 + $0x68] sm:$0xff]
    %v5272 = vld [vmem:[#allocation11 + $0x70] sm:$0xff]
    %v5273 = vld [vmem:[#allocation11 + $0x78] sm:$0xff]
    %5274 = vmatprep.subr.mxu0 0.0
    %5275 = vmatpush1.msra.mxu0 %v5258
    %5276 = vmatprep.subr.mxu0 0.0
    %5277 = vmatpush1.msra.mxu0 %v5259
    %5278 = vmatprep.subr.mxu0 0.0
    %5279 = vmatpush1.msra.mxu0 %v5260
    %5280 = vmatprep.subr.mxu0 0.0
    %5281 = vmatpush1.msra.mxu0 %v5261
    %5282 = vmatprep.subr.mxu0 0.0
    %5283 = vmatpush1.msra.mxu0 %v5262
    %5284 = vmatprep.subr.mxu0 0.0
    %5285 = vmatpush1.msra.mxu0 %v5263
    %5286 = vmatprep.subr.mxu0 0.0
    %5287 = vmatpush1.msra.mxu0 %v5264
    %5288 = vmatprep.subr.mxu0 0.0
    %5289 = vmatpush1.msra.mxu0 %v5265
    %5290 = vmatprep.subr.mxu0 0.0
    %5291 = vmatpush1.msra.mxu0 %v5266
    %5292 = vmatprep.subr.mxu0 0.0
    %5293 = vmatpush1.msra.mxu0 %v5267
    %5294 = vmatprep.subr.mxu0 0.0
    %5295 = vmatpush1.msra.mxu0 %v5268
    %5296 = vmatprep.subr.mxu0 0.0
    %5297 = vmatpush1.msra.mxu0 %v5269
    %5298 = vmatprep.subr.mxu0 0.0
    %5299 = vmatpush1.msra.mxu0 %v5270
    %5300 = vmatprep.subr.mxu0 0.0
    %5301 = vmatpush1.msra.mxu0 %v5271
    %5302 = vmatprep.subr.mxu0 0.0
    %5303 = vmatpush1.msra.mxu0 %v5272
    %5304 = vmatprep.subr.mxu0 0.0
    %5305 = vmatpush1.msra.mxu0 %v5273
    %5306 = vmatprep.subr.mxu0 0.0
    %5307 = vmatpush1.msra.mxu0 0.0
    %5308 = vmatprep.subr.mxu0 0.0
    %5309 = vmatpush1.msra.mxu0 0.0
    %5310 = vmatprep.subr.mxu0 0.0
    %5311 = vmatpush1.msra.mxu0 0.0
    %5312 = vmatprep.subr.mxu0 0.0
    %5313 = vmatpush1.msra.mxu0 0.0
    %5314 = vmatprep.subr.mxu0 0.0
    %5315 = vmatpush1.msra.mxu0 0.0
    %5316 = vmatprep.subr.mxu0 0.0
    %5317 = vmatpush1.msra.mxu0 0.0
    %5318 = vmatprep.subr.mxu0 0.0
    %5319 = vmatpush1.msra.mxu0 0.0
    %5320 = vmatprep.subr.mxu0 0.0
    %5321 = vmatpush1.msra.mxu0 0.0
    %5322 = vmatprep.subr.mxu0 0.0
    %5323 = vmatpush1.msra.mxu0 0.0
    %5324 = vmatprep.subr.mxu0 0.0
    %5325 = vmatpush1.msra.mxu0 0.0
    %5326 = vmatprep.subr.mxu0 0.0
    %5327 = vmatpush1.msra.mxu0 0.0
    %5328 = vmatprep.subr.mxu0 0.0
    %5329 = vmatpush1.msra.mxu0 0.0
    %5330 = vmatprep.subr.mxu0 0.0
    %5331 = vmatpush1.msra.mxu0 0.0
    %5332 = vmatprep.subr.mxu0 0.0
    %5333 = vmatpush1.msra.mxu0 0.0
    %5334 = vmatprep.subr.mxu0 0.0
    %5335 = vmatpush1.msra.mxu0 0.0
    %5336 = vmatprep.subr.mxu0 0.0
    %5337 = vmatpush1.msra.mxu0 0.0
    %5338 = vmatprep.mubr.f32.mxu0 0.0
    %5339 = vmatmul.mubr.f32.gmra.mrb[0].mxu0 %v5255
    %v5340 = vpop.f32.mrb[0].mxu0
    %v5341 = vadd.f32 0.0, %v5340
    %v5342 = vpop.f32.mrb[0].mxu0
    %5343 = vdwg.mxu0
    %5344 = vmatprep.subr.mxu0 0.0
    %5345 = vmatpush1.msra.mxu0 %v5161
    %5346 = vmatprep.subr.mxu0 0.0
    %5347 = vmatpush1.msra.mxu0 %v5162
    %5348 = vmatprep.subr.mxu0 0.0
    %5349 = vmatpush1.msra.mxu0 %v5163
    %5350 = vmatprep.subr.mxu0 0.0
    %5351 = vmatpush1.msra.mxu0 %v5164
    %5352 = vmatprep.subr.mxu0 0.0
    %5353 = vmatpush1.msra.mxu0 %v5165
    %5354 = vmatprep.subr.mxu0 0.0
    %5355 = vmatpush1.msra.mxu0 %v5166
    %5356 = vmatprep.subr.mxu0 0.0
    %5357 = vmatpush1.msra.mxu0 %v5167
    %5358 = vmatprep.subr.mxu0 0.0
    %5359 = vmatpush1.msra.mxu0 %v5168
    %5360 = vmatprep.subr.mxu0 0.0
    %5361 = vmatpush1.msra.mxu0 %v5169
    %5362 = vmatprep.subr.mxu0 0.0
    %5363 = vmatpush1.msra.mxu0 %v5170
    %5364 = vmatprep.subr.mxu0 0.0
    %5365 = vmatpush1.msra.mxu0 %v5171
    %5366 = vmatprep.subr.mxu0 0.0
    %5367 = vmatpush1.msra.mxu0 %v5172
    %5368 = vmatprep.subr.mxu0 0.0
    %5369 = vmatpush1.msra.mxu0 0.0
    %5370 = vmatprep.subr.mxu0 0.0
    %5371 = vmatpush1.msra.mxu0 0.0
    %5372 = vmatprep.subr.mxu0 0.0
    %5373 = vmatpush1.msra.mxu0 0.0
    %5374 = vmatprep.subr.mxu0 0.0
    %5375 = vmatpush1.msra.mxu0 0.0
    %5376 = vmatprep.subr.mxu0 0.0
    %5377 = vmatpush1.msra.mxu0 0.0
    %5378 = vmatprep.subr.mxu0 0.0
    %5379 = vmatpush1.msra.mxu0 0.0
    %5380 = vmatprep.subr.mxu0 0.0
    %5381 = vmatpush1.msra.mxu0 0.0
    %5382 = vmatprep.subr.mxu0 0.0
    %5383 = vmatpush1.msra.mxu0 0.0
    %5384 = vmatprep.subr.mxu0 0.0
    %5385 = vmatpush1.msra.mxu0 0.0
    %5386 = vmatprep.subr.mxu0 0.0
    %5387 = vmatpush1.msra.mxu0 0.0
    %5388 = vmatprep.subr.mxu0 0.0
    %5389 = vmatpush1.msra.mxu0 0.0
    %5390 = vmatprep.subr.mxu0 0.0
    %5391 = vmatpush1.msra.mxu0 0.0
    %5392 = vmatprep.subr.mxu0 0.0
    %5393 = vmatpush1.msra.mxu0 0.0
    %5394 = vmatprep.subr.mxu0 0.0
    %5395 = vmatpush1.msra.mxu0 0.0
    %5396 = vmatprep.subr.mxu0 0.0
    %5397 = vmatpush1.msra.mxu0 0.0
    %5398 = vmatprep.subr.mxu0 0.0
    %5399 = vmatpush1.msra.mxu0 0.0
    %5400 = vmatprep.subr.mxu0 0.0
    %5401 = vmatpush1.msra.mxu0 0.0
    %5402 = vmatprep.subr.mxu0 0.0
    %5403 = vmatpush1.msra.mxu0 0.0
    %5404 = vmatprep.subr.mxu0 0.0
    %5405 = vmatpush1.msra.mxu0 0.0
    %5406 = vmatprep.subr.mxu0 0.0
    %5407 = vmatpush1.msra.mxu0 0.0
    %5408 = vmatprep.mubr.f32.mxu0 0.0
    %5409 = vmatmul.mubr.f32.gmra.mrb[0].mxu0 %v5186
    %v5410 = vpop.f32.mrb[0].mxu0
    %v5411 = vadd.f32 %v5341, %v5410
    %v5412 = vpop.f32.mrb[0].mxu0
    %5413 = vdwg.mxu0
    %v5415 = vrot.slane %v5411, 2
    %v5417 = vmul.f32 %v5411, %v5415
    %vm5418 = vcmask 1041408
    %v5419 = vsel %vm5418, %v5417, 0.0
    %5420 = vadd.xlane.f32.xlu0 %v5419
    %v5421 = vpop.xlane.xlu0 %5420
    %v5422 = vmul.f32 %v5411, %v5411
    %v5423 = vsel %vm5418, %v5422, 0.0
    %5424 = vadd.xlane.f32.xlu0 %v5423
    %v5425 = vpop.xlane.xlu0 %5424
    %vm5426 = vcmask 1043458
    %v5427 = vsel %vm5426, %v5422, 0.0
    %5428 = vadd.xlane.f32.xlu0 %v5427
    %v5429 = vpop.xlane.xlu0 %5428
    %v5431 = vrot.slane %v5429, 2
    %v5433 = vmul.f32 %v5425, %v5431
    %v5434 = vmax.f32 %v5433, 1e-20
    %v5435 = vrsqrt.pop %v5434
    %v5436 = vmul.f32 %v5421, %v5435
    %v5437 = vrot.slane %v5411, 4
    %v5439 = vmul.f32 %v5411, %v5437
    %v5440 = vsel %vm5418, %v5439, 0.0
    %5441 = vadd.xlane.f32.xlu0 %v5440
    %v5442 = vpop.xlane.xlu0 %5441
    %vm5443 = vcmask 1045508
    %v5444 = vsel %vm5443, %v5422, 0.0
    %5445 = vadd.xlane.f32.xlu0 %v5444
    %v5446 = vpop.xlane.xlu0 %5445
    %v5448 = vrot.slane %v5446, 4
    %v5450 = vmul.f32 %v5425, %v5448
    %v5451 = vmax.f32 %v5450, 1e-20
    %v5452 = vrsqrt.pop %v5451
    %v5453 = vmul.f32 %v5442, %v5452
    %s5454 = sld [smem:[#allocation13]]
    %s5455 = sld [smem:[#allocation13 + $0x1]]
    %v5456 = vld [vmem:[%s5] sm:$0x3]
    %v5457 = vld [vmem:[%s7] sm:$0x1]
    %v5459 = vlaneseq
    %v5460 = vshrl.u32 %v5459, 7
    %v5461 = vsub.s32 0, %v5460
    %v5462 = vrot.slane %v5457, %v5461
    %v5464 = vmul.f32 %v5456, %v5462
    %v5465 = vsel %vm5418, %v5464, 0.0
    %5466 = vadd.xlane.f32.xlu0 %v5465
    %v5467 = vpop.xlane.xlu0 %5466
    %v5468 = vld [vmem:[%s6] sm:$0x3]
    %v5469 = vmul.f32 %v5468, %v5462
    %v5470 = vsel %vm5418, %v5469, 0.0
    %5471 = vadd.xlane.f32.xlu0 %v5470
    %v5472 = vpop.xlane.xlu0 %5471
    %v5473 = vstv %s5454
    %v5474 = vmul.f32 %v5436, %v5473
    %v5475 = vadd.f32 %v5474, %v5467
    %v5476 = vstv %s5455
    %v5477 = vadd.f32 %v5475, %v5476
    %v5478 = vtanh.pop %v5477
    %v5479 = vmul.f32 %v5453, %v5473
    %v5480 = vadd.f32 %v5479, %v5472
    %v5481 = vadd.f32 %v5480, %v5476
    %v5482 = vtanh.pop %v5481
    %vm5483 = vcmask 1024
    %5484 = vst.msk [vmem:[%s9] sm:$0x3] %vm5483, %v5478
    %5485 = vst.msk [vmem:[%s10] sm:$0x3] %vm5483, %v5482
    %v5486 = vsub.f32 1.0, %v5478
    %v5487 = vmul.f32 %v5486, %v5486
    %v5488 = vsel %vm5483, %v5487, 0.0
    %5489 = vadd.xlane.f32.xlu0 %v5488
    %v5490 = vpop.xlane.xlu0 %5489
    %v5491 = vrot.slane %v5490, 4
    %v5492 = vadd.f32 %v5490, %v5491
    %v5493 = vrot.slane %v5492, 2
    %v5494 = vadd.f32 %v5492, %v5493
    %v5495 = vrot.slane %v5494, 1
    %v5496 = vadd.f32 %v5494, %v5495
    %s5497 = vtos %v5496
    %v5498 = vstv %s5497
    %v5499 = vrcp.pop 2.0
    %v5500 = vmul.f32 %v5498, %v5499
    %v5501 = vadd.f32 %v5482, 1.0
    %v5502 = vmul.f32 %v5501, %v5501
    %v5503 = vsel %vm5483, %v5502, 0.0
    %5504 = vadd.xlane.f32.xlu0 %v5503
    %v5505 = vpop.xlane.xlu0 %5504
    %v5506 = vrot.slane %v5505, 4
    %v5507 = vadd.f32 %v5505, %v5506
    %v5508 = vrot.slane %v5507, 2
    %v5509 = vadd.f32 %v5507, %v5508
    %v5510 = vrot.slane %v5509, 1
    %v5511 = vadd.f32 %v5509, %v5510
    %s5512 = vtos %v5511
    %v5513 = vstv %s5512
    %v5514 = vmul.f32 %v5513, %v5499
    %v5515 = vadd.f32 %v5500, %v5514
    %v5516 = vmul.f32 %v5515, 0.5
    %vm5517 = vcmask 0
    %5518 = vst.msk [vmem:[#allocation14] sm:$0x1] %vm5517, %v5516
    // Predicated region
    $region58: #{tpu_custom_call.1} parent=1 // pred_check
      _
    $region59: #{tpu_custom_call.1} parent=1 // pred_check_branch
      %5520 = sbr.rel (0) target = $region61
    $region60: #{tpu_custom_call.1} parent=1 // pred_region
      _
    $region61: #{tpu_custom_call.1} parent=1 // pred_fallthru
      _
    // Predicated region
    $region62: #{tpu_custom_call.1} parent=1 // pred_check
      _
    $region63: #{tpu_custom_call.1} parent=1 // pred_check_branch
      %5522 = sbr.rel (0) target = $region65
    $region64: #{tpu_custom_call.1} parent=1 // pred_region
      _
    $region65: #{tpu_custom_call.1} parent=1 // pred_fallthru
      _
    // Predicated region
    $region66: #{tpu_custom_call.1} parent=1 // pred_check
      _
    $region67: #{tpu_custom_call.1} parent=1 // pred_check_branch
      %5524 = sbr.rel (0) target = $region69
    $region68: #{tpu_custom_call.1} parent=1 // pred_region
      %s5526 = ssub.s32 16, 16
      %5527 = vsyncadd [#allocation6], %s5526
      %s5529 = sshll.u32 [#allocation14], 4
      %s5530 = int_to_ptr.vmem [resolvable:$true] %s5529
      %5532 = dma.vmem_to_hbm [thread:$0]  %s5530, 16, %s11, [#allocation6]
    $region69: #{tpu_custom_call.1} parent=1 // pred_fallthru
      _
    // Predicated region
    $region70: #{tpu_custom_call.1} parent=1 // pred_check
      _
    $region71: #{tpu_custom_call.1} parent=1 // pred_check_branch
      %5534 = sbr.rel (0) target = $region73
    $region72: #{tpu_custom_call.1} parent=1 // pred_region
      _
    $region73: #{tpu_custom_call.1} parent=1 // pred_fallthru
      _
    // Predicated region
    $region74: #{tpu_custom_call.1} parent=1 // pred_check
      _
    $region75: #{tpu_custom_call.1} parent=1 // pred_check_branch
      %5536 = sbr.rel (0) target = $region77
    $region76: #{tpu_custom_call.1} parent=1 // pred_region
      _
    $region77: #{tpu_custom_call.1} parent=1 // pred_fallthru
      _
    // Predicated region
    $region78: #{tpu_custom_call.1} parent=1 // pred_check
      _
    $region79: #{tpu_custom_call.1} parent=1 // pred_check_branch
      %5538 = sbr.rel (0) target = $region81
    $region80: #{tpu_custom_call.1} parent=1 // pred_region
      %5539 = dma.done [#allocation6], 16
    $region81: #{tpu_custom_call.1} parent=1 // pred_fallthru
      _
    %5540 = vsyncpa [#allocation5], 1
    %5541 = vsyncpa [#allocation9], 1
    %5542 = vsyncpa [#allocation12], 1
    %5543 = vsyncpa [#allocation6], 1
    %5544 = vsyncpa [#allocation7], 1

</llo_original>
